<compile_context>
chip_gen: v7x
topology: tpu7x:2x2x1
jax: 0.10.0
libtpu: 0.0.40
codegen_flags: <defaults>
</compile_context>

<pallas_src>
import jax
import jax.numpy as jnp
from jax.experimental import pallas as pl
from jax.experimental.pallas import tpu as pltpu

EPS = 1e-5  # torch.nn.InstanceNorm2d default eps


def _reflect_pad_into(pad_ref, x, H, W):
    """ReflectionPad2d(1) of x (H, W, C) built directly in VMEM scratch.

    NOTE: the write ordering is load-bearing -- the left/right column copies
    read rows 0 and H+1, which must already hold the reflected top/bottom
    rows so the four corners come out right.  pad_ref is fully overwritten
    (all H+2 rows, all W+2 columns) before any read, in both stages.
    """
    pad_ref[1:H + 1, 1:W + 1, :] = x                       # interior
    pad_ref[0:1, 1:W + 1, :] = x[1:2]                      # top    = row 1
    pad_ref[H + 1:H + 2, 1:W + 1, :] = x[H - 2:H - 1]      # bottom = row H-2
    pad_ref[:, 0:1, :] = pad_ref[:, 2:3, :]                # left   = col 1
    pad_ref[:, W + 1:W + 2, :] = pad_ref[:, W - 1:W, :]    # right  = col W-2


def _conv3x3_instnorm(pad_ref, w_ref, H, W, C):
    """3x3 conv (as 9 accumulated tap matmuls) + InstanceNorm2d(affine=False).

    pad_ref: (H+2, W+2, C) f32 reflection-padded activation (VMEM scratch).
    w_ref:   (9, C, C) bf16 taps, t = 3*dh + dw (from HWIO weights).
    Returns the normalized (H*W, C) float32 activation.

    No im2col buffer: for each dw we load one W-shifted band of the padded
    activation (cast to bf16 for the MXU); the dh slice and the
    (H, W, C) -> (H*W, C) reshape are tile-preserving when W % 8 == 0, so
    each tap goes straight from the band to the MXU, accumulating in f32.
    """
    acc = jnp.zeros((H * W, C), jnp.float32)
    for dw in range(3):
        band = pad_ref[:, dw:dw + W, :].astype(jnp.bfloat16)   # (H+2, W, C)
        for dh in range(3):
            tap = band[dh:dh + H].reshape(H * W, C)             # bf16 operand
            acc = acc + jnp.dot(tap, w_ref[3 * dh + dw],
                                preferred_element_type=jnp.float32)

    # InstanceNorm2d(affine=False): per-channel stats over H*W, biased var.
    mean = jnp.mean(acc, axis=0, keepdims=True)
    ctr = acc - mean
    var = jnp.mean(ctr * ctr, axis=0, keepdims=True)
    return ctr * jax.lax.rsqrt(var + EPS)


def _residual_block_kernel(x_ref, w1_ref, w2_ref, o_ref, pad_ref):
    # x_ref/o_ref: (1, H, W, C); w*_ref: (9, C, C) bf16; pad_ref: scratch.
    _, H, W, C = x_ref.shape
    x = x_ref[0].astype(jnp.float32)                        # (H, W, C)

    # Stage 1: pad -> conv -> instnorm -> relu (stays in VMEM)
    _reflect_pad_into(pad_ref, x, H, W)
    h = jnp.maximum(_conv3x3_instnorm(pad_ref, w1_ref, H, W, C), 0.0)

    # Stage 2: pad -> conv -> instnorm (pad scratch reused)
    _reflect_pad_into(pad_ref, h.reshape(H, W, C), H, W)
    y = _conv3x3_instnorm(pad_ref, w2_ref, H, W, C)

    # Residual add
    out = x.reshape(H * W, C) + y
    o_ref[0] = out.reshape(H, W, C).astype(o_ref.dtype)


def _vmem_capacity_bytes():
    try:
        return int(pltpu.get_tpu_info().vmem_capacity_bytes)
    except Exception:                                       # pragma: no cover
        return 128 * 1024 * 1024                            # conservative default


def residual_block_pallas(x, w1, b1, w2, b2):
    """x: (B, H, W, C) NHWC.  Weights HWIO (3,3,C,C); biases (1,C) (unused:
    a conv bias is exactly cancelled by the following InstanceNorm)."""
    del b1, b2
    B, H, W, C = x.shape

    # Weight prep hoisted out of the kernel: HWIO -> (9, C, C) taps, bf16
    # MXU operands (f32 accumulation happens in-kernel).
    w1t = jnp.asarray(w1, jnp.bfloat16).reshape(9, C, C)
    w2t = jnp.asarray(w2, jnp.bfloat16).reshape(9, C, C)

    # VMEM budget from the actual live buffers, clamped to the chip's
    # physical VMEM (v7x has 64 MiB vs 128 MiB on v5e/v6e).
    itemsize = jnp.dtype(x.dtype).itemsize
    act_f32 = H * W * C * 4                                  # one f32 activation
    pad_b = (H + 2) * (W + 2) * C * 4                        # f32 padded scratch
    io_b = 2 * 2 * H * W * C * itemsize                      # x/out blocks, 2x buffered
    wts_b = 2 * 2 * 9 * C * C * 2                            # both weights, 2x buffered
    tmp_b = 6 * act_f32                                      # acc / h / bands / temporaries
    need = pad_b + io_b + wts_b + tmp_b + (2 << 20)
    cap = _vmem_capacity_bytes()
    vmem_limit = int(min(max(need, 16 << 20), cap - (4 << 20)))

    return pl.pallas_call(
        _residual_block_kernel,
        out_shape=jax.ShapeDtypeStruct((B, H, W, C), x.dtype),
        grid=(B,),
        in_specs=[
            pl.BlockSpec((1, H, W, C), lambda b: (b, 0, 0, 0)),
            # Constant index_map: weights are DMA'd once and stay resident.
            # (Single-buffering them would save another 9*C*C*2 B each on
            # v7x; negligible for these shapes.)
            pl.BlockSpec((9, C, C), lambda b: (0, 0, 0)),
            pl.BlockSpec((9, C, C), lambda b: (0, 0, 0)),
        ],
        out_specs=pl.BlockSpec((1, H, W, C), lambda b: (b, 0, 0, 0)),
        scratch_shapes=[
            pltpu.VMEM((H + 2, W + 2, C), jnp.float32),      # padded activation
        ],
        compiler_params=pltpu.CompilerParams(
            dimension_semantics=("parallel",),
            vmem_limit_bytes=vmem_limit,
        ),
    )(x, w1t, w2t)


# ----------------------------- pure-JAX references --------------------------
def _reflect_pad1(x):
    return jnp.pad(x, ((0, 0), (1, 1), (1, 1), (0, 0)), mode="reflect")


def residual_block_ref(x, w1, b1, w2, b2, op_dtype=jnp.float32):
    """Reference with identical semantics (NHWC / HWIO).  Keeps the conv
    biases to demonstrate they cancel under InstanceNorm(affine=False).
    With op_dtype=bf16 it mirrors the kernel's MXU precision (bf16 operands,
    f32 accumulation) for a tight numerical comparison."""
    def conv(xp, w, b):
        y = jax.lax.conv_general_dilated(
            xp.astype(op_dtype), w.astype(op_dtype), (1, 1), "VALID",
            dimension_numbers=("NHWC", "HWIO", "NHWC"),
            preferred_element_type=jnp.float32)
        return y + b.reshape(1, 1, 1, -1).astype(jnp.float32)

    def inorm(y):
        m = jnp.mean(y, axis=(1, 2), keepdims=True)
        v = jnp.mean((y - m) ** 2, axis=(1, 2), keepdims=True)
        return (y - m) * jax.lax.rsqrt(v + EPS)

    h = jnp.maximum(inorm(conv(_reflect_pad1(x), w1, b1)), 0.0)
    return x + inorm(conv(_reflect_pad1(h), w2, b2))


if __name__ == "__main__":
    B, C, H, W = 2, 4, 16, 16  # PyTorch would see x as NCHW = (2, 4, 16, 16)

    key = jax.random.PRNGKey(0)
    kx, kw1, kb1, kw2, kb2 = jax.random.split(key, 5)

    # NCHW input (as the torch module would receive), permuted to NHWC.
    x_nchw = jax.random.normal(kx, (B, C, H, W), dtype=jnp.float32)
    x = jnp.transpose(x_nchw, (0, 2, 3, 1))  # -> NHWC

    # Deterministic Conv2d(C, C, 3) params (with bias), HWIO layout.
    fan_in = C * 3 * 3
    bound = 1.0 / jnp.sqrt(float(fan_in))
    w1 = jax.random.uniform(kw1, (3, 3, C, C), jnp.float32, -bound, bound)
    b1 = jax.random.uniform(kb1, (1, C), jnp.float32, -bound, bound)
    w2 = jax.random.uniform(kw2, (3, 3, C, C), jnp.float32, -bound, bound)
    b2 = jax.random.uniform(kb2, (1, C), jnp.float32, -bound, bound)

    out = residual_block_pallas(x, w1, b1, w2, b2)
    out = jax.block_until_ready(out)
    assert out.shape == (B, H, W, C)

    # Tight check vs. a reference using the same matmul precision as the
    # kernel (bf16 operands, f32 accumulation) -- validates padding, taps,
    # instance-norm, relu and the residual add.
    ref_bf16 = residual_block_ref(x, w1, b1, w2, b2, op_dtype=jnp.bfloat16)
    assert jnp.allclose(out, ref_bf16, atol=1e-3, rtol=1e-3), \
        "mismatch vs bf16-matched reference"

    # Loose sanity check vs. the exact-f32 reference (slack accounts for the
    # bf16 rounding of the matmul operands inside the kernel).
    ref_f32 = residual_block_ref(x, w1, b1, w2, b2, op_dtype=jnp.float32)
    assert jnp.allclose(out, ref_f32, atol=5e-2, rtol=5e-2), \
        "mismatch vs f32 reference"

    print("KERNEL_OK")
</pallas_src>

<mosaic_0001>
module attributes {stable_mosaic.version = 11 : i64} {
  func.func @_residual_block_kernel(%arg0: i32, %arg1: memref<1x16x16x4xf32, #tpu.memory_space<vmem>>, %arg2: memref<9x4x4xbf16, #tpu.memory_space<vmem>>, %arg3: memref<9x4x4xbf16, #tpu.memory_space<vmem>>, %arg4: memref<1x16x16x4xf32, #tpu.memory_space<vmem>>, %arg5: memref<18x18x4xf32, #tpu.memory_space<vmem>>) attributes {dimension_semantics = [#tpu.dimension_semantics<parallel>], iteration_bounds = array<i64: 2>, scalar_prefetch = 0 : i64, scratch_operands = 1 : i64, tpu.core_type = #tpu.core_type<tc>, window_params = [{transform_indices = @transform_0, window_bounds = array<i64: 1, 16, 16, 4>}, {pipeline_mode = #tpu.pipeline_mode<synchronous>, transform_indices = @transform_1, window_bounds = array<i64: 9, 4, 4>}, {pipeline_mode = #tpu.pipeline_mode<synchronous>, transform_indices = @transform_2, window_bounds = array<i64: 9, 4, 4>}, {transform_indices = @transform_3, window_bounds = array<i64: 1, 16, 16, 4>}]} {
    %c0 = arith.constant 0 : index
    %c0_0 = arith.constant 0 : index
    %c0_1 = arith.constant 0 : index
    %c0_2 = arith.constant 0 : index
    %0 = vector.load %arg1[%c0, %c0_0, %c0_1, %c0_2] : memref<1x16x16x4xf32, #tpu.memory_space<vmem>>, vector<1x16x16x4xf32>
    %1 = vector.shape_cast %0 : vector<1x16x16x4xf32> to vector<16x16x4xf32>
    %c1 = arith.constant 1 : index
    %c1_3 = arith.constant 1 : index
    %c0_4 = arith.constant 0 : index
    %2 = vector.load %arg5[%c1, %c1_3, %c0_4] : memref<18x18x4xf32, #tpu.memory_space<vmem>>, vector<16x16x4xf32>
    tpu.vector_store %arg5[%c1, %c1_3, %c0_4], %1 {strides = array<i32>} : memref<18x18x4xf32, #tpu.memory_space<vmem>>, vector<16x16x4xf32>,
    %3 = vector.extract_strided_slice %1 {offsets = [1, 0, 0], sizes = [1, 16, 4], strides = [1, 1, 1]} : vector<16x16x4xf32> to vector<1x16x4xf32>
    %c0_5 = arith.constant 0 : index
    %c1_6 = arith.constant 1 : index
    %c0_7 = arith.constant 0 : index
    %4 = vector.load %arg5[%c0_5, %c1_6, %c0_7] : memref<18x18x4xf32, #tpu.memory_space<vmem>>, vector<1x16x4xf32>
    tpu.vector_store %arg5[%c0_5, %c1_6, %c0_7], %3 {strides = array<i32>} : memref<18x18x4xf32, #tpu.memory_space<vmem>>, vector<1x16x4xf32>,
    %5 = vector.extract_strided_slice %1 {offsets = [14, 0, 0], sizes = [1, 16, 4], strides = [1, 1, 1]} : vector<16x16x4xf32> to vector<1x16x4xf32>
    %c17 = arith.constant 17 : index
    %c1_8 = arith.constant 1 : index
    %c0_9 = arith.constant 0 : index
    %6 = vector.load %arg5[%c17, %c1_8, %c0_9] : memref<18x18x4xf32, #tpu.memory_space<vmem>>, vector<1x16x4xf32>
    tpu.vector_store %arg5[%c17, %c1_8, %c0_9], %5 {strides = array<i32>} : memref<18x18x4xf32, #tpu.memory_space<vmem>>, vector<1x16x4xf32>,
    %c0_10 = arith.constant 0 : index
    %c2 = arith.constant 2 : index
    %c0_11 = arith.constant 0 : index
    %7 = vector.load %arg5[%c0_10, %c2, %c0_11] : memref<18x18x4xf32, #tpu.memory_space<vmem>>, vector<18x1x4xf32>
    %c0_12 = arith.constant 0 : index
    %c0_13 = arith.constant 0 : index
    %c0_14 = arith.constant 0 : index
    %8 = vector.load %arg5[%c0_12, %c0_13, %c0_14] : memref<18x18x4xf32, #tpu.memory_space<vmem>>, vector<18x1x4xf32>
    tpu.vector_store %arg5[%c0_12, %c0_13, %c0_14], %7 {strides = array<i32>} : memref<18x18x4xf32, #tpu.memory_space<vmem>>, vector<18x1x4xf32>,
    %c0_15 = arith.constant 0 : index
    %c15 = arith.constant 15 : index
    %c0_16 = arith.constant 0 : index
    %9 = vector.load %arg5[%c0_15, %c15, %c0_16] : memref<18x18x4xf32, #tpu.memory_space<vmem>>, vector<18x1x4xf32>
    %c0_17 = arith.constant 0 : index
    %c17_18 = arith.constant 17 : index
    %c0_19 = arith.constant 0 : index
    %10 = vector.load %arg5[%c0_17, %c17_18, %c0_19] : memref<18x18x4xf32, #tpu.memory_space<vmem>>, vector<18x1x4xf32>
    tpu.vector_store %arg5[%c0_17, %c17_18, %c0_19], %9 {strides = array<i32>} : memref<18x18x4xf32, #tpu.memory_space<vmem>>, vector<18x1x4xf32>,
    %cst = arith.constant 0.000000e+00 : f32
    %11 = vector.broadcast %cst : f32 to vector<256x4xf32>
    %c0_20 = arith.constant 0 : index
    %c0_21 = arith.constant 0 : index
    %c0_22 = arith.constant 0 : index
    %12 = vector.load %arg5[%c0_20, %c0_21, %c0_22] : memref<18x18x4xf32, #tpu.memory_space<vmem>>, vector<18x16x4xf32>
    %13 = arith.truncf %12 : vector<18x16x4xf32> to vector<18x16x4xbf16>
    %14 = vector.extract_strided_slice %13 {offsets = [0, 0, 0], sizes = [16, 16, 4], strides = [1, 1, 1]} : vector<18x16x4xbf16> to vector<16x16x4xbf16>
    %15 = vector.shape_cast %14 : vector<16x16x4xbf16> to vector<256x4xbf16>
    %c0_23 = arith.constant 0 : index
    %c0_24 = arith.constant 0 : index
    %c0_25 = arith.constant 0 : index
    %16 = vector.load %arg2[%c0_23, %c0_24, %c0_25] : memref<9x4x4xbf16, #tpu.memory_space<vmem>>, vector<1x4x4xbf16>
    %17 = vector.shape_cast %16 : vector<1x4x4xbf16> to vector<4x4xbf16>
    %cst_26 = arith.constant dense<0.000000e+00> : vector<256x4xf32>
    %18 = tpu.matmul %15, %17, %cst_26 {dimension_numbers = #tpu.dot_dimension_numbers<[1], [0], [0], [1], [0, 0, 1, 1], [], []>} : vector<256x4xbf16>, vector<4x4xbf16>, vector<256x4xf32> -> vector<256x4xf32>
    %19 = arith.addf %11, %18 : vector<256x4xf32>
    %20 = vector.extract_strided_slice %13 {offsets = [1, 0, 0], sizes = [16, 16, 4], strides = [1, 1, 1]} : vector<18x16x4xbf16> to vector<16x16x4xbf16>
    %21 = vector.shape_cast %20 : vector<16x16x4xbf16> to vector<256x4xbf16>
    %c3 = arith.constant 3 : index
    %c0_27 = arith.constant 0 : index
    %c0_28 = arith.constant 0 : index
    %22 = vector.load %arg2[%c3, %c0_27, %c0_28] : memref<9x4x4xbf16, #tpu.memory_space<vmem>>, vector<1x4x4xbf16>
    %23 = vector.shape_cast %22 : vector<1x4x4xbf16> to vector<4x4xbf16>
    %cst_29 = arith.constant dense<0.000000e+00> : vector<256x4xf32>
    %24 = tpu.matmul %21, %23, %cst_29 {dimension_numbers = #tpu.dot_dimension_numbers<[1], [0], [0], [1], [0, 0, 1, 1], [], []>} : vector<256x4xbf16>, vector<4x4xbf16>, vector<256x4xf32> -> vector<256x4xf32>
    %25 = arith.addf %19, %24 : vector<256x4xf32>
    %26 = vector.extract_strided_slice %13 {offsets = [2, 0, 0], sizes = [16, 16, 4], strides = [1, 1, 1]} : vector<18x16x4xbf16> to vector<16x16x4xbf16>
    %27 = vector.shape_cast %26 : vector<16x16x4xbf16> to vector<256x4xbf16>
    %c6 = arith.constant 6 : index
    %c0_30 = arith.constant 0 : index
    %c0_31 = arith.constant 0 : index
    %28 = vector.load %arg2[%c6, %c0_30, %c0_31] : memref<9x4x4xbf16, #tpu.memory_space<vmem>>, vector<1x4x4xbf16>
    %29 = vector.shape_cast %28 : vector<1x4x4xbf16> to vector<4x4xbf16>
    %cst_32 = arith.constant dense<0.000000e+00> : vector<256x4xf32>
    %30 = tpu.matmul %27, %29, %cst_32 {dimension_numbers = #tpu.dot_dimension_numbers<[1], [0], [0], [1], [0, 0, 1, 1], [], []>} : vector<256x4xbf16>, vector<4x4xbf16>, vector<256x4xf32> -> vector<256x4xf32>
    %31 = arith.addf %25, %30 : vector<256x4xf32>
    %c0_33 = arith.constant 0 : index
    %c1_34 = arith.constant 1 : index
    %c0_35 = arith.constant 0 : index
    %32 = vector.load %arg5[%c0_33, %c1_34, %c0_35] : memref<18x18x4xf32, #tpu.memory_space<vmem>>, vector<18x16x4xf32>
    %33 = arith.truncf %32 : vector<18x16x4xf32> to vector<18x16x4xbf16>
    %34 = vector.extract_strided_slice %33 {offsets = [0, 0, 0], sizes = [16, 16, 4], strides = [1, 1, 1]} : vector<18x16x4xbf16> to vector<16x16x4xbf16>
    %35 = vector.shape_cast %34 : vector<16x16x4xbf16> to vector<256x4xbf16>
    %c1_36 = arith.constant 1 : index
    %c0_37 = arith.constant 0 : index
    %c0_38 = arith.constant 0 : index
    %36 = vector.load %arg2[%c1_36, %c0_37, %c0_38] : memref<9x4x4xbf16, #tpu.memory_space<vmem>>, vector<1x4x4xbf16>
    %37 = vector.shape_cast %36 : vector<1x4x4xbf16> to vector<4x4xbf16>
    %cst_39 = arith.constant dense<0.000000e+00> : vector<256x4xf32>
    %38 = tpu.matmul %35, %37, %cst_39 {dimension_numbers = #tpu.dot_dimension_numbers<[1], [0], [0], [1], [0, 0, 1, 1], [], []>} : vector<256x4xbf16>, vector<4x4xbf16>, vector<256x4xf32> -> vector<256x4xf32>
    %39 = arith.addf %31, %38 : vector<256x4xf32>
    %40 = vector.extract_strided_slice %33 {offsets = [1, 0, 0], sizes = [16, 16, 4], strides = [1, 1, 1]} : vector<18x16x4xbf16> to vector<16x16x4xbf16>
    %41 = vector.shape_cast %40 : vector<16x16x4xbf16> to vector<256x4xbf16>
    %c4 = arith.constant 4 : index
    %c0_40 = arith.constant 0 : index
    %c0_41 = arith.constant 0 : index
    %42 = vector.load %arg2[%c4, %c0_40, %c0_41] : memref<9x4x4xbf16, #tpu.memory_space<vmem>>, vector<1x4x4xbf16>
    %43 = vector.shape_cast %42 : vector<1x4x4xbf16> to vector<4x4xbf16>
    %cst_42 = arith.constant dense<0.000000e+00> : vector<256x4xf32>
    %44 = tpu.matmul %41, %43, %cst_42 {dimension_numbers = #tpu.dot_dimension_numbers<[1], [0], [0], [1], [0, 0, 1, 1], [], []>} : vector<256x4xbf16>, vector<4x4xbf16>, vector<256x4xf32> -> vector<256x4xf32>
    %45 = arith.addf %39, %44 : vector<256x4xf32>
    %46 = vector.extract_strided_slice %33 {offsets = [2, 0, 0], sizes = [16, 16, 4], strides = [1, 1, 1]} : vector<18x16x4xbf16> to vector<16x16x4xbf16>
    %47 = vector.shape_cast %46 : vector<16x16x4xbf16> to vector<256x4xbf16>
    %c7 = arith.constant 7 : index
    %c0_43 = arith.constant 0 : index
    %c0_44 = arith.constant 0 : index
    %48 = vector.load %arg2[%c7, %c0_43, %c0_44] : memref<9x4x4xbf16, #tpu.memory_space<vmem>>, vector<1x4x4xbf16>
    %49 = vector.shape_cast %48 : vector<1x4x4xbf16> to vector<4x4xbf16>
    %cst_45 = arith.constant dense<0.000000e+00> : vector<256x4xf32>
    %50 = tpu.matmul %47, %49, %cst_45 {dimension_numbers = #tpu.dot_dimension_numbers<[1], [0], [0], [1], [0, 0, 1, 1], [], []>} : vector<256x4xbf16>, vector<4x4xbf16>, vector<256x4xf32> -> vector<256x4xf32>
    %51 = arith.addf %45, %50 : vector<256x4xf32>
    %c0_46 = arith.constant 0 : index
    %c2_47 = arith.constant 2 : index
    %c0_48 = arith.constant 0 : index
    %52 = vector.load %arg5[%c0_46, %c2_47, %c0_48] : memref<18x18x4xf32, #tpu.memory_space<vmem>>, vector<18x16x4xf32>
    %53 = arith.truncf %52 : vector<18x16x4xf32> to vector<18x16x4xbf16>
    %54 = vector.extract_strided_slice %53 {offsets = [0, 0, 0], sizes = [16, 16, 4], strides = [1, 1, 1]} : vector<18x16x4xbf16> to vector<16x16x4xbf16>
    %55 = vector.shape_cast %54 : vector<16x16x4xbf16> to vector<256x4xbf16>
    %c2_49 = arith.constant 2 : index
    %c0_50 = arith.constant 0 : index
    %c0_51 = arith.constant 0 : index
    %56 = vector.load %arg2[%c2_49, %c0_50, %c0_51] : memref<9x4x4xbf16, #tpu.memory_space<vmem>>, vector<1x4x4xbf16>
    %57 = vector.shape_cast %56 : vector<1x4x4xbf16> to vector<4x4xbf16>
    %cst_52 = arith.constant dense<0.000000e+00> : vector<256x4xf32>
    %58 = tpu.matmul %55, %57, %cst_52 {dimension_numbers = #tpu.dot_dimension_numbers<[1], [0], [0], [1], [0, 0, 1, 1], [], []>} : vector<256x4xbf16>, vector<4x4xbf16>, vector<256x4xf32> -> vector<256x4xf32>
    %59 = arith.addf %51, %58 : vector<256x4xf32>
    %60 = vector.extract_strided_slice %53 {offsets = [1, 0, 0], sizes = [16, 16, 4], strides = [1, 1, 1]} : vector<18x16x4xbf16> to vector<16x16x4xbf16>
    %61 = vector.shape_cast %60 : vector<16x16x4xbf16> to vector<256x4xbf16>
    %c5 = arith.constant 5 : index
    %c0_53 = arith.constant 0 : index
    %c0_54 = arith.constant 0 : index
    %62 = vector.load %arg2[%c5, %c0_53, %c0_54] : memref<9x4x4xbf16, #tpu.memory_space<vmem>>, vector<1x4x4xbf16>
    %63 = vector.shape_cast %62 : vector<1x4x4xbf16> to vector<4x4xbf16>
    %cst_55 = arith.constant dense<0.000000e+00> : vector<256x4xf32>
    %64 = tpu.matmul %61, %63, %cst_55 {dimension_numbers = #tpu.dot_dimension_numbers<[1], [0], [0], [1], [0, 0, 1, 1], [], []>} : vector<256x4xbf16>, vector<4x4xbf16>, vector<256x4xf32> -> vector<256x4xf32>
    %65 = arith.addf %59, %64 : vector<256x4xf32>
    %66 = vector.extract_strided_slice %53 {offsets = [2, 0, 0], sizes = [16, 16, 4], strides = [1, 1, 1]} : vector<18x16x4xbf16> to vector<16x16x4xbf16>
    %67 = vector.shape_cast %66 : vector<16x16x4xbf16> to vector<256x4xbf16>
    %c8 = arith.constant 8 : index
    %c0_56 = arith.constant 0 : index
    %c0_57 = arith.constant 0 : index
    %68 = vector.load %arg2[%c8, %c0_56, %c0_57] : memref<9x4x4xbf16, #tpu.memory_space<vmem>>, vector<1x4x4xbf16>
    %69 = vector.shape_cast %68 : vector<1x4x4xbf16> to vector<4x4xbf16>
    %cst_58 = arith.constant dense<0.000000e+00> : vector<256x4xf32>
    %70 = tpu.matmul %67, %69, %cst_58 {dimension_numbers = #tpu.dot_dimension_numbers<[1], [0], [0], [1], [0, 0, 1, 1], [], []>} : vector<256x4xbf16>, vector<4x4xbf16>, vector<256x4xf32> -> vector<256x4xf32>
    %71 = arith.addf %65, %70 : vector<256x4xf32>
    %cst_59 = arith.constant dense<0.000000e+00> : vector<4xf32>
    %72 = vector.multi_reduction <add>, %71, %cst_59 [0] : vector<256x4xf32> to vector<4xf32>
    %73 = vector.shape_cast %72 : vector<4xf32> to vector<1x4xf32>
    %cst_60 = arith.constant 2.560000e+02 : f32
    %74 = vector.broadcast %cst_60 : f32 to vector<1x4xf32>
    %75 = arith.divf %73, %74 : vector<1x4xf32>
    %76 = vector.broadcast %75 : vector<1x4xf32> to vector<256x4xf32>
    %77 = arith.subf %71, %76 : vector<256x4xf32>
    %78 = arith.mulf %77, %77 : vector<256x4xf32>
    %cst_61 = arith.constant dense<0.000000e+00> : vector<4xf32>
    %79 = vector.multi_reduction <add>, %78, %cst_61 [0] : vector<256x4xf32> to vector<4xf32>
    %80 = vector.shape_cast %79 : vector<4xf32> to vector<1x4xf32>
    %cst_62 = arith.constant 2.560000e+02 : f32
    %81 = vector.broadcast %cst_62 : f32 to vector<1x4xf32>
    %82 = arith.divf %80, %81 : vector<1x4xf32>
    %cst_63 = arith.constant 9.99999974E-6 : f32
    %83 = vector.broadcast %cst_63 : f32 to vector<1x4xf32>
    %84 = arith.addf %82, %83 : vector<1x4xf32>
    %85 = math.rsqrt %84 : vector<1x4xf32>
    %86 = vector.broadcast %85 : vector<1x4xf32> to vector<256x4xf32>
    %87 = arith.mulf %77, %86 : vector<256x4xf32>
    %cst_64 = arith.constant 0.000000e+00 : f32
    %88 = vector.broadcast %cst_64 : f32 to vector<256x4xf32>
    %89 = arith.maximumf %87, %88 : vector<256x4xf32>
    %90 = vector.shape_cast %89 : vector<256x4xf32> to vector<16x16x4xf32>
    %c1_65 = arith.constant 1 : index
    %c1_66 = arith.constant 1 : index
    %c0_67 = arith.constant 0 : index
    %91 = vector.load %arg5[%c1_65, %c1_66, %c0_67] : memref<18x18x4xf32, #tpu.memory_space<vmem>>, vector<16x16x4xf32>
    tpu.vector_store %arg5[%c1_65, %c1_66, %c0_67], %90 {strides = array<i32>} : memref<18x18x4xf32, #tpu.memory_space<vmem>>, vector<16x16x4xf32>,
    %92 = vector.extract_strided_slice %90 {offsets = [1, 0, 0], sizes = [1, 16, 4], strides = [1, 1, 1]} : vector<16x16x4xf32> to vector<1x16x4xf32>
    %c0_68 = arith.constant 0 : index
    %c1_69 = arith.constant 1 : index
    %c0_70 = arith.constant 0 : index
    %93 = vector.load %arg5[%c0_68, %c1_69, %c0_70] : memref<18x18x4xf32, #tpu.memory_space<vmem>>, vector<1x16x4xf32>
    tpu.vector_store %arg5[%c0_68, %c1_69, %c0_70], %92 {strides = array<i32>} : memref<18x18x4xf32, #tpu.memory_space<vmem>>, vector<1x16x4xf32>,
    %94 = vector.extract_strided_slice %90 {offsets = [14, 0, 0], sizes = [1, 16, 4], strides = [1, 1, 1]} : vector<16x16x4xf32> to vector<1x16x4xf32>
    %c17_71 = arith.constant 17 : index
    %c1_72 = arith.constant 1 : index
    %c0_73 = arith.constant 0 : index
    %95 = vector.load %arg5[%c17_71, %c1_72, %c0_73] : memref<18x18x4xf32, #tpu.memory_space<vmem>>, vector<1x16x4xf32>
    tpu.vector_store %arg5[%c17_71, %c1_72, %c0_73], %94 {strides = array<i32>} : memref<18x18x4xf32, #tpu.memory_space<vmem>>, vector<1x16x4xf32>,
    %c0_74 = arith.constant 0 : index
    %c2_75 = arith.constant 2 : index
    %c0_76 = arith.constant 0 : index
    %96 = vector.load %arg5[%c0_74, %c2_75, %c0_76] : memref<18x18x4xf32, #tpu.memory_space<vmem>>, vector<18x1x4xf32>
    %c0_77 = arith.constant 0 : index
    %c0_78 = arith.constant 0 : index
    %c0_79 = arith.constant 0 : index
    %97 = vector.load %arg5[%c0_77, %c0_78, %c0_79] : memref<18x18x4xf32, #tpu.memory_space<vmem>>, vector<18x1x4xf32>
    tpu.vector_store %arg5[%c0_77, %c0_78, %c0_79], %96 {strides = array<i32>} : memref<18x18x4xf32, #tpu.memory_space<vmem>>, vector<18x1x4xf32>,
    %c0_80 = arith.constant 0 : index
    %c15_81 = arith.constant 15 : index
    %c0_82 = arith.constant 0 : index
    %98 = vector.load %arg5[%c0_80, %c15_81, %c0_82] : memref<18x18x4xf32, #tpu.memory_space<vmem>>, vector<18x1x4xf32>
    %c0_83 = arith.constant 0 : index
    %c17_84 = arith.constant 17 : index
    %c0_85 = arith.constant 0 : index
    %99 = vector.load %arg5[%c0_83, %c17_84, %c0_85] : memref<18x18x4xf32, #tpu.memory_space<vmem>>, vector<18x1x4xf32>
    tpu.vector_store %arg5[%c0_83, %c17_84, %c0_85], %98 {strides = array<i32>} : memref<18x18x4xf32, #tpu.memory_space<vmem>>, vector<18x1x4xf32>,
    %cst_86 = arith.constant 0.000000e+00 : f32
    %100 = vector.broadcast %cst_86 : f32 to vector<256x4xf32>
    %c0_87 = arith.constant 0 : index
    %c0_88 = arith.constant 0 : index
    %c0_89 = arith.constant 0 : index
    %101 = vector.load %arg5[%c0_87, %c0_88, %c0_89] : memref<18x18x4xf32, #tpu.memory_space<vmem>>, vector<18x16x4xf32>
    %102 = arith.truncf %101 : vector<18x16x4xf32> to vector<18x16x4xbf16>
    %103 = vector.extract_strided_slice %102 {offsets = [0, 0, 0], sizes = [16, 16, 4], strides = [1, 1, 1]} : vector<18x16x4xbf16> to vector<16x16x4xbf16>
    %104 = vector.shape_cast %103 : vector<16x16x4xbf16> to vector<256x4xbf16>
    %c0_90 = arith.constant 0 : index
    %c0_91 = arith.constant 0 : index
    %c0_92 = arith.constant 0 : index
    %105 = vector.load %arg3[%c0_90, %c0_91, %c0_92] : memref<9x4x4xbf16, #tpu.memory_space<vmem>>, vector<1x4x4xbf16>
    %106 = vector.shape_cast %105 : vector<1x4x4xbf16> to vector<4x4xbf16>
    %cst_93 = arith.constant dense<0.000000e+00> : vector<256x4xf32>
    %107 = tpu.matmul %104, %106, %cst_93 {dimension_numbers = #tpu.dot_dimension_numbers<[1], [0], [0], [1], [0, 0, 1, 1], [], []>} : vector<256x4xbf16>, vector<4x4xbf16>, vector<256x4xf32> -> vector<256x4xf32>
    %108 = arith.addf %100, %107 : vector<256x4xf32>
    %109 = vector.extract_strided_slice %102 {offsets = [1, 0, 0], sizes = [16, 16, 4], strides = [1, 1, 1]} : vector<18x16x4xbf16> to vector<16x16x4xbf16>
    %110 = vector.shape_cast %109 : vector<16x16x4xbf16> to vector<256x4xbf16>
    %c3_94 = arith.constant 3 : index
    %c0_95 = arith.constant 0 : index
    %c0_96 = arith.constant 0 : index
    %111 = vector.load %arg3[%c3_94, %c0_95, %c0_96] : memref<9x4x4xbf16, #tpu.memory_space<vmem>>, vector<1x4x4xbf16>
    %112 = vector.shape_cast %111 : vector<1x4x4xbf16> to vector<4x4xbf16>
    %cst_97 = arith.constant dense<0.000000e+00> : vector<256x4xf32>
    %113 = tpu.matmul %110, %112, %cst_97 {dimension_numbers = #tpu.dot_dimension_numbers<[1], [0], [0], [1], [0, 0, 1, 1], [], []>} : vector<256x4xbf16>, vector<4x4xbf16>, vector<256x4xf32> -> vector<256x4xf32>
    %114 = arith.addf %108, %113 : vector<256x4xf32>
    %115 = vector.extract_strided_slice %102 {offsets = [2, 0, 0], sizes = [16, 16, 4], strides = [1, 1, 1]} : vector<18x16x4xbf16> to vector<16x16x4xbf16>
    %116 = vector.shape_cast %115 : vector<16x16x4xbf16> to vector<256x4xbf16>
    %c6_98 = arith.constant 6 : index
    %c0_99 = arith.constant 0 : index
    %c0_100 = arith.constant 0 : index
    %117 = vector.load %arg3[%c6_98, %c0_99, %c0_100] : memref<9x4x4xbf16, #tpu.memory_space<vmem>>, vector<1x4x4xbf16>
    %118 = vector.shape_cast %117 : vector<1x4x4xbf16> to vector<4x4xbf16>
    %cst_101 = arith.constant dense<0.000000e+00> : vector<256x4xf32>
    %119 = tpu.matmul %116, %118, %cst_101 {dimension_numbers = #tpu.dot_dimension_numbers<[1], [0], [0], [1], [0, 0, 1, 1], [], []>} : vector<256x4xbf16>, vector<4x4xbf16>, vector<256x4xf32> -> vector<256x4xf32>
    %120 = arith.addf %114, %119 : vector<256x4xf32>
    %c0_102 = arith.constant 0 : index
    %c1_103 = arith.constant 1 : index
    %c0_104 = arith.constant 0 : index
    %121 = vector.load %arg5[%c0_102, %c1_103, %c0_104] : memref<18x18x4xf32, #tpu.memory_space<vmem>>, vector<18x16x4xf32>
    %122 = arith.truncf %121 : vector<18x16x4xf32> to vector<18x16x4xbf16>
    %123 = vector.extract_strided_slice %122 {offsets = [0, 0, 0], sizes = [16, 16, 4], strides = [1, 1, 1]} : vector<18x16x4xbf16> to vector<16x16x4xbf16>
    %124 = vector.shape_cast %123 : vector<16x16x4xbf16> to vector<256x4xbf16>
    %c1_105 = arith.constant 1 : index
    %c0_106 = arith.constant 0 : index
    %c0_107 = arith.constant 0 : index
    %125 = vector.load %arg3[%c1_105, %c0_106, %c0_107] : memref<9x4x4xbf16, #tpu.memory_space<vmem>>, vector<1x4x4xbf16>
    %126 = vector.shape_cast %125 : vector<1x4x4xbf16> to vector<4x4xbf16>
    %cst_108 = arith.constant dense<0.000000e+00> : vector<256x4xf32>
    %127 = tpu.matmul %124, %126, %cst_108 {dimension_numbers = #tpu.dot_dimension_numbers<[1], [0], [0], [1], [0, 0, 1, 1], [], []>} : vector<256x4xbf16>, vector<4x4xbf16>, vector<256x4xf32> -> vector<256x4xf32>
    %128 = arith.addf %120, %127 : vector<256x4xf32>
    %129 = vector.extract_strided_slice %122 {offsets = [1, 0, 0], sizes = [16, 16, 4], strides = [1, 1, 1]} : vector<18x16x4xbf16> to vector<16x16x4xbf16>
    %130 = vector.shape_cast %129 : vector<16x16x4xbf16> to vector<256x4xbf16>
    %c4_109 = arith.constant 4 : index
    %c0_110 = arith.constant 0 : index
    %c0_111 = arith.constant 0 : index
    %131 = vector.load %arg3[%c4_109, %c0_110, %c0_111] : memref<9x4x4xbf16, #tpu.memory_space<vmem>>, vector<1x4x4xbf16>
    %132 = vector.shape_cast %131 : vector<1x4x4xbf16> to vector<4x4xbf16>
    %cst_112 = arith.constant dense<0.000000e+00> : vector<256x4xf32>
    %133 = tpu.matmul %130, %132, %cst_112 {dimension_numbers = #tpu.dot_dimension_numbers<[1], [0], [0], [1], [0, 0, 1, 1], [], []>} : vector<256x4xbf16>, vector<4x4xbf16>, vector<256x4xf32> -> vector<256x4xf32>
    %134 = arith.addf %128, %133 : vector<256x4xf32>
    %135 = vector.extract_strided_slice %122 {offsets = [2, 0, 0], sizes = [16, 16, 4], strides = [1, 1, 1]} : vector<18x16x4xbf16> to vector<16x16x4xbf16>
    %136 = vector.shape_cast %135 : vector<16x16x4xbf16> to vector<256x4xbf16>
    %c7_113 = arith.constant 7 : index
    %c0_114 = arith.constant 0 : index
    %c0_115 = arith.constant 0 : index
    %137 = vector.load %arg3[%c7_113, %c0_114, %c0_115] : memref<9x4x4xbf16, #tpu.memory_space<vmem>>, vector<1x4x4xbf16>
    %138 = vector.shape_cast %137 : vector<1x4x4xbf16> to vector<4x4xbf16>
    %cst_116 = arith.constant dense<0.000000e+00> : vector<256x4xf32>
    %139 = tpu.matmul %136, %138, %cst_116 {dimension_numbers = #tpu.dot_dimension_numbers<[1], [0], [0], [1], [0, 0, 1, 1], [], []>} : vector<256x4xbf16>, vector<4x4xbf16>, vector<256x4xf32> -> vector<256x4xf32>
    %140 = arith.addf %134, %139 : vector<256x4xf32>
    %c0_117 = arith.constant 0 : index
    %c2_118 = arith.constant 2 : index
    %c0_119 = arith.constant 0 : index
    %141 = vector.load %arg5[%c0_117, %c2_118, %c0_119] : memref<18x18x4xf32, #tpu.memory_space<vmem>>, vector<18x16x4xf32>
    %142 = arith.truncf %141 : vector<18x16x4xf32> to vector<18x16x4xbf16>
    %143 = vector.extract_strided_slice %142 {offsets = [0, 0, 0], sizes = [16, 16, 4], strides = [1, 1, 1]} : vector<18x16x4xbf16> to vector<16x16x4xbf16>
    %144 = vector.shape_cast %143 : vector<16x16x4xbf16> to vector<256x4xbf16>
    %c2_120 = arith.constant 2 : index
    %c0_121 = arith.constant 0 : index
    %c0_122 = arith.constant 0 : index
    %145 = vector.load %arg3[%c2_120, %c0_121, %c0_122] : memref<9x4x4xbf16, #tpu.memory_space<vmem>>, vector<1x4x4xbf16>
    %146 = vector.shape_cast %145 : vector<1x4x4xbf16> to vector<4x4xbf16>
    %cst_123 = arith.constant dense<0.000000e+00> : vector<256x4xf32>
    %147 = tpu.matmul %144, %146, %cst_123 {dimension_numbers = #tpu.dot_dimension_numbers<[1], [0], [0], [1], [0, 0, 1, 1], [], []>} : vector<256x4xbf16>, vector<4x4xbf16>, vector<256x4xf32> -> vector<256x4xf32>
    %148 = arith.addf %140, %147 : vector<256x4xf32>
    %149 = vector.extract_strided_slice %142 {offsets = [1, 0, 0], sizes = [16, 16, 4], strides = [1, 1, 1]} : vector<18x16x4xbf16> to vector<16x16x4xbf16>
    %150 = vector.shape_cast %149 : vector<16x16x4xbf16> to vector<256x4xbf16>
    %c5_124 = arith.constant 5 : index
    %c0_125 = arith.constant 0 : index
    %c0_126 = arith.constant 0 : index
    %151 = vector.load %arg3[%c5_124, %c0_125, %c0_126] : memref<9x4x4xbf16, #tpu.memory_space<vmem>>, vector<1x4x4xbf16>
    %152 = vector.shape_cast %151 : vector<1x4x4xbf16> to vector<4x4xbf16>
    %cst_127 = arith.constant dense<0.000000e+00> : vector<256x4xf32>
    %153 = tpu.matmul %150, %152, %cst_127 {dimension_numbers = #tpu.dot_dimension_numbers<[1], [0], [0], [1], [0, 0, 1, 1], [], []>} : vector<256x4xbf16>, vector<4x4xbf16>, vector<256x4xf32> -> vector<256x4xf32>
    %154 = arith.addf %148, %153 : vector<256x4xf32>
    %155 = vector.extract_strided_slice %142 {offsets = [2, 0, 0], sizes = [16, 16, 4], strides = [1, 1, 1]} : vector<18x16x4xbf16> to vector<16x16x4xbf16>
    %156 = vector.shape_cast %155 : vector<16x16x4xbf16> to vector<256x4xbf16>
    %c8_128 = arith.constant 8 : index
    %c0_129 = arith.constant 0 : index
    %c0_130 = arith.constant 0 : index
    %157 = vector.load %arg3[%c8_128, %c0_129, %c0_130] : memref<9x4x4xbf16, #tpu.memory_space<vmem>>, vector<1x4x4xbf16>
    %158 = vector.shape_cast %157 : vector<1x4x4xbf16> to vector<4x4xbf16>
    %cst_131 = arith.constant dense<0.000000e+00> : vector<256x4xf32>
    %159 = tpu.matmul %156, %158, %cst_131 {dimension_numbers = #tpu.dot_dimension_numbers<[1], [0], [0], [1], [0, 0, 1, 1], [], []>} : vector<256x4xbf16>, vector<4x4xbf16>, vector<256x4xf32> -> vector<256x4xf32>
    %160 = arith.addf %154, %159 : vector<256x4xf32>
    %cst_132 = arith.constant dense<0.000000e+00> : vector<4xf32>
    %161 = vector.multi_reduction <add>, %160, %cst_132 [0] : vector<256x4xf32> to vector<4xf32>
    %162 = vector.shape_cast %161 : vector<4xf32> to vector<1x4xf32>
    %cst_133 = arith.constant 2.560000e+02 : f32
    %163 = vector.broadcast %cst_133 : f32 to vector<1x4xf32>
    %164 = arith.divf %162, %163 : vector<1x4xf32>
    %165 = vector.broadcast %164 : vector<1x4xf32> to vector<256x4xf32>
    %166 = arith.subf %160, %165 : vector<256x4xf32>
    %167 = arith.mulf %166, %166 : vector<256x4xf32>
    %cst_134 = arith.constant dense<0.000000e+00> : vector<4xf32>
    %168 = vector.multi_reduction <add>, %167, %cst_134 [0] : vector<256x4xf32> to vector<4xf32>
    %169 = vector.shape_cast %168 : vector<4xf32> to vector<1x4xf32>
    %cst_135 = arith.constant 2.560000e+02 : f32
    %170 = vector.broadcast %cst_135 : f32 to vector<1x4xf32>
    %171 = arith.divf %169, %170 : vector<1x4xf32>
    %cst_136 = arith.constant 9.99999974E-6 : f32
    %172 = vector.broadcast %cst_136 : f32 to vector<1x4xf32>
    %173 = arith.addf %171, %172 : vector<1x4xf32>
    %174 = math.rsqrt %173 : vector<1x4xf32>
    %175 = vector.broadcast %174 : vector<1x4xf32> to vector<256x4xf32>
    %176 = arith.mulf %166, %175 : vector<256x4xf32>
    %177 = vector.shape_cast %1 : vector<16x16x4xf32> to vector<256x4xf32>
    %178 = arith.addf %177, %176 : vector<256x4xf32>
    %179 = vector.shape_cast %178 : vector<256x4xf32> to vector<16x16x4xf32>
    %c0_137 = arith.constant 0 : index
    %c0_138 = arith.constant 0 : index
    %c0_139 = arith.constant 0 : index
    %c0_140 = arith.constant 0 : index
    %180 = vector.load %arg4[%c0_137, %c0_138, %c0_139, %c0_140] : memref<1x16x16x4xf32, #tpu.memory_space<vmem>>, vector<1x16x16x4xf32>
    %181 = vector.shape_cast %180 : vector<1x16x16x4xf32> to vector<16x16x4xf32>
    %182 = vector.shape_cast %179 : vector<16x16x4xf32> to vector<1x16x16x4xf32>
    tpu.vector_store %arg4[%c0_137, %c0_138, %c0_139, %c0_140], %182 {strides = array<i32>} : memref<1x16x16x4xf32, #tpu.memory_space<vmem>>, vector<1x16x16x4xf32>,
    return
  }
  func.func @transform_0(%arg0: i32) -> (i32, i32, i32, i32) {
    %c0_i32 = arith.constant 0 : i32
    %c0_i32_0 = arith.constant 0 : i32
    %c0_i32_1 = arith.constant 0 : i32
    %c0_i32_2 = arith.constant 0 : i32
    return %arg0, %c0_i32, %c0_i32_0, %c0_i32_1 : i32, i32, i32, i32
  }
  func.func @transform_1(%arg0: i32) -> (i32, i32, i32) {
    %c0_i32 = arith.constant 0 : i32
    %c0_i32_0 = arith.constant 0 : i32
    %c0_i32_1 = arith.constant 0 : i32
    %c0_i32_2 = arith.constant 0 : i32
    return %c0_i32, %c0_i32_0, %c0_i32_1 : i32, i32, i32
  }
  func.func @transform_2(%arg0: i32) -> (i32, i32, i32) {
    %c0_i32 = arith.constant 0 : i32
    %c0_i32_0 = arith.constant 0 : i32
    %c0_i32_1 = arith.constant 0 : i32
    %c0_i32_2 = arith.constant 0 : i32
    return %c0_i32, %c0_i32_0, %c0_i32_1 : i32, i32, i32
  }
  func.func @transform_3(%arg0: i32) -> (i32, i32, i32, i32) {
    %c0_i32 = arith.constant 0 : i32
    %c0_i32_0 = arith.constant 0 : i32
    %c0_i32_1 = arith.constant 0 : i32
    %c0_i32_2 = arith.constant 0 : i32
    return %arg0, %c0_i32, %c0_i32_0, %c0_i32_1 : i32, i32, i32, i32
  }
}

</mosaic_0001>

<llo_original>
// kernel: tpu_custom_call.1
$region0: #{tpu_custom_call.1}
  #allocation0 [shape = 'u32[]', space=smem, size = 0x4, offset = 0x4, fixed_abs, tag = 'smem constant byte address 0x4 - core index']
  #allocation1 [shape = 'u32[144,128]{1,0:T(1,128)}', space=vmem, size = 0x12000, scoped, tag = 'internal scratch']
  #allocation2 [shape = 'f32[18,18,4]{2,1,0:T(8,128)}', space=vmem, size = 0x36000, scoped, tag = 'scratch operand']
  %s0 = inlined_call_operand.vmem [shape: f32[2,16,16,4], index: 0, kind: input, shape index: {}]
  %s1 = inlined_call_operand.vmem [shape: bf16[9,4,4], index: 1, kind: input, shape index: {}]
  %s2 = inlined_call_operand.vmem [shape: bf16[9,4,4], index: 2, kind: input, shape index: {}]
  %s3 = inlined_call_operand.vmem [shape: f32[2,16,16,4], index: 3, kind: output, shape index: {}]
  %s4 = sld [smem:[#allocation0]]
  $region45: #{tpu_custom_call.1} parent=0
    _
  %s6 = ssub.s32 1, %s4
  %s7 = scalar_select 0, %s6, %s4
  loop: start=0, step=1, limit=4
  $region2: #{tpu_custom_call.1} parent=0 // loop_pre_header
    _
  $region3: #{tpu_custom_call.1} parent=0 // loop_header
    %s9 = sphi 0, %s13
    %p10 = scmp.ge.s32.totalorder %s9, 4
    %s19 = sphi 0, %s21
    %s22 = sphi 0, %s19
    %s23 = sphi 0, %s22
    %s39 = sphi 0, %s23
    %s43 = sphi 0, %s43
    %s45 = sphi 0, %s43
    %s46 = sphi 0, %s45
    %s60 = sphi 0, %s46
    %s64 = sphi 0, %s64
    %s66 = sphi 0, %s64
    %s67 = sphi 0, %s66
    %s81 = sphi 0, %s67
    %s87 = sphi 0, %s89
    %s90 = sphi 0, %s87
    %s91 = sphi 0, %s90
    %s107 = sphi 0, %s91
  $region4: #{tpu_custom_call.1} parent=0 // loop_header_branch
    %12 = sbr.rel (%p10) target = $region8
  $region5: #{tpu_custom_call.1} parent=0 // loop_body
    %s14 = ssub.s32 %s9, 1
    %s15 = ssub.s32 %s9, 2
    %s16 = sadd.s32 %s9, 1
    %s17 = ssub.s32 %s9, %s16
    %p18 = scmp.eq.s32.totalorder %s17, 0
    %s20 = sadd.s32 %s19, 1
    %s21 = scalar_select %p18, %s19, %s20
    %p24 = pneg %p18
    %p25 = scmp.eq.s32.totalorder %s9, 1
    %p26 = por %p24, %p25
    %p27 = scmp.ne.s32.totalorder %s19, %s22
    %p28 = scmp.eq.s32.totalorder %s9, 0
    %p29 = por %p27, %p28
    %p30 = scmp.ne.s32.totalorder %s19, %s22
    %p31 = scmp.eq.s32.totalorder %s14, 1
    %p32 = por %p30, %p31
    %p33 = scmp.ne.s32.totalorder %s22, %s23
    %p34 = scmp.eq.s32.totalorder %s14, 0
    %p35 = por %p33, %p34
    %p36 = scmp.ne.s32.totalorder %s22, %s23
    %p37 = scmp.eq.s32.totalorder %s15, 1
    %p38 = por %p36, %p37
    %p40 = scmp.ne.s32.totalorder %s23, %s39
    %p41 = scmp.eq.s32.totalorder %s15, 0
    %p42 = por %p40, %p41
    %s44 = sadd.s32 %s43, 1
    %p47 = scmp.eq.s32.totalorder %s9, 1
    %p48 = scmp.ne.s32.totalorder %s43, %s45
    %p49 = scmp.eq.s32.totalorder %s9, 0
    %p50 = por %p48, %p49
    %p51 = scmp.ne.s32.totalorder %s43, %s45
    %p52 = scmp.eq.s32.totalorder %s14, 1
    %p53 = por %p51, %p52
    %p54 = scmp.ne.s32.totalorder %s45, %s46
    %p55 = scmp.eq.s32.totalorder %s14, 0
    %p56 = por %p54, %p55
    %p57 = scmp.ne.s32.totalorder %s45, %s46
    %p58 = scmp.eq.s32.totalorder %s15, 1
    %p59 = por %p57, %p58
    %p61 = scmp.ne.s32.totalorder %s46, %s60
    %p62 = scmp.eq.s32.totalorder %s15, 0
    %p63 = por %p61, %p62
    %s65 = sadd.s32 %s64, 1
    %p68 = scmp.eq.s32.totalorder %s9, 1
    %p69 = scmp.ne.s32.totalorder %s64, %s66
    %p70 = scmp.eq.s32.totalorder %s9, 0
    %p71 = por %p69, %p70
    %p72 = scmp.ne.s32.totalorder %s64, %s66
    %p73 = scmp.eq.s32.totalorder %s14, 1
    %p74 = por %p72, %p73
    %p75 = scmp.ne.s32.totalorder %s66, %s67
    %p76 = scmp.eq.s32.totalorder %s14, 0
    %p77 = por %p75, %p76
    %p78 = scmp.ne.s32.totalorder %s66, %s67
    %p79 = scmp.eq.s32.totalorder %s15, 1
    %p80 = por %p78, %p79
    %p82 = scmp.ne.s32.totalorder %s67, %s81
    %p83 = scmp.eq.s32.totalorder %s15, 0
    %p84 = por %p82, %p83
    %s85 = ssub.s32 %s9, %s16
    %p86 = scmp.eq.s32.totalorder %s85, 0
    %s88 = sadd.s32 %s87, 1
    %s89 = scalar_select %p86, %s87, %s88
    %p92 = pneg %p86
    %p93 = scmp.eq.s32.totalorder %s9, 1
    %p94 = por %p92, %p93
    %p95 = scmp.ne.s32.totalorder %s87, %s90
    %p96 = scmp.eq.s32.totalorder %s9, 0
    %p97 = por %p95, %p96
    %p98 = scmp.ne.s32.totalorder %s87, %s90
    %p99 = scmp.eq.s32.totalorder %s14, 1
    %p100 = por %p98, %p99
    %p101 = scmp.ne.s32.totalorder %s90, %s91
    %p102 = scmp.eq.s32.totalorder %s14, 0
    %p103 = por %p101, %p102
    %p104 = scmp.ne.s32.totalorder %s90, %s91
    %p105 = scmp.eq.s32.totalorder %s15, 1
    %p106 = por %p104, %p105
    %p108 = scmp.ne.s32.totalorder %s91, %s107
    %p109 = scmp.eq.s32.totalorder %s15, 0
    %p110 = por %p108, %p109
    %p111 = scmp.le.s32.totalorder 1, %s9
    %p112 = scmp.lt.s32.totalorder %s9, 3
    %p113 = pnand %p111, %p112
    %p114 = pneg %p113
    // Predicated region
    $region9: #{tpu_custom_call.1} parent=5 // pred_check
      _
    $region10: #{tpu_custom_call.1} parent=5 // pred_check_branch
      %116 = sbr.rel (%p113) target = $region12
    $region11: #{tpu_custom_call.1} parent=5 // pred_region
      %s117 = ssub.s32 %s9, 1
      // Predicated region
      $region13: #{tpu_custom_call.1} parent=11 // pred_check
        %p118 = pneg %p56
      $region14: #{tpu_custom_call.1} parent=11 // pred_check_branch
        %120 = sbr.rel (%p118) target = $region16
      $region15: #{tpu_custom_call.1} parent=11 // pred_region
        _
      $region16: #{tpu_custom_call.1} parent=11 // pred_fallthru
        _
      // Predicated region
      $region17: #{tpu_custom_call.1} parent=11 // pred_check
        %p121 = pneg %p77
      $region18: #{tpu_custom_call.1} parent=11 // pred_check_branch
        %123 = sbr.rel (%p121) target = $region20
      $region19: #{tpu_custom_call.1} parent=11 // pred_region
        _
      $region20: #{tpu_custom_call.1} parent=11 // pred_fallthru
        _
    $region12: #{tpu_custom_call.1} parent=5 // pred_fallthru
      _
    %p124 = scmp.lt.s32.totalorder %s9, 2
    // Predicated region
    $region21: #{tpu_custom_call.1} parent=5 // pred_check
      %p125 = pneg %p124
    $region22: #{tpu_custom_call.1} parent=5 // pred_check_branch
      %127 = sbr.rel (%p125) target = $region24
    $region23: #{tpu_custom_call.1} parent=5 // pred_region
      // Predicated region
      $region25: #{tpu_custom_call.1} parent=23 // pred_check
        %p128 = pneg %p29
      $region26: #{tpu_custom_call.1} parent=23 // pred_check_branch
        %130 = sbr.rel (%p128) target = $region28
      $region27: #{tpu_custom_call.1} parent=23 // pred_region
        %p131 = scmp.lt.s32.totalorder %s9, 1
        %s132 = scalar_select %p131, %s9, 1
        %s133 = smul.addr %s132, 32
        %s134 = smul.addr %s133, 8
        %s135 = scalar_lea.vmem %s0, %s134
      $region28: #{tpu_custom_call.1} parent=23 // pred_fallthru
        _
    $region24: #{tpu_custom_call.1} parent=5 // pred_fallthru
      _
    %p136 = scmp.le.s32.totalorder 1, %s9
    %p137 = scmp.lt.s32.totalorder %s9, 3
    %p138 = pnand %p136, %p137
    %p139 = pneg %p138
    // Predicated region
    $region29: #{tpu_custom_call.1} parent=5 // pred_check
      _
    $region30: #{tpu_custom_call.1} parent=5 // pred_check_branch
      %141 = sbr.rel (%p138) target = $region32
    $region31: #{tpu_custom_call.1} parent=5 // pred_region
      %s142 = ssub.s32 %s9, 1
      %p143 = scmp.lt.s32.totalorder %s14, 1
      %s144 = scalar_select %p143, %s14, 1
      %s145 = smul.addr %s144, 32
      %s146 = smul.addr %s145, 8
      %s147 = scalar_lea.vmem %s0, %s146
      %p148 = pneg %p35
      %p149 = pneg %p32
      %p150 = pneg %p56
      %p151 = pneg %p53
      %p152 = pneg %p77
      %p153 = pneg %p74
      %p154 = pneg %p103
      %p155 = pneg %p100
      %p156 = scmp.lt.s32.totalorder %s14, 1
      %s157 = scalar_select %p156, %s14, 1
      %s158 = smul.addr %s157, 32
      %s159 = smul.addr %s158, 8
      %s160 = scalar_lea.vmem %s3, %s159
      %p161 = scmp.lt.s32.totalorder %s14, 1
      %s162 = scalar_select %p161, %s14, 1
      %s163 = smul.addr %s162, 32
      %s164 = smul.addr %s163, 8
      %s165 = scalar_lea.vmem %s0, %s164
      %p166 = scmp.lt.s32.totalorder %s14, 1
      %s167 = scalar_select %p166, %s14, 1
      %s168 = smul.addr %s167, 32
      %s169 = smul.addr %s168, 8
      %s170 = scalar_lea.vmem %s3, %s169
      %v172 = vld [vmem:[%s165] sm:$0xff]
      %v173 = vld [vmem:[%s165 + $0x8] sm:$0xff]
      %v174 = vld [vmem:[%s165 + $0x10] sm:$0xff]
      %v175 = vld [vmem:[%s165 + $0x18] sm:$0xff]
      %v176 = vld [vmem:[%s165 + $0x20] sm:$0xff]
      %v177 = vld [vmem:[%s165 + $0x28] sm:$0xff]
      %v178 = vld [vmem:[%s165 + $0x30] sm:$0xff]
      %v179 = vld [vmem:[%s165 + $0x38] sm:$0xff]
      %v180 = vld [vmem:[%s165 + $0x40] sm:$0xff]
      %v181 = vld [vmem:[%s165 + $0x48] sm:$0xff]
      %v182 = vld [vmem:[%s165 + $0x50] sm:$0xff]
      %v183 = vld [vmem:[%s165 + $0x58] sm:$0xff]
      %v184 = vld [vmem:[%s165 + $0x60] sm:$0xff]
      %v185 = vld [vmem:[%s165 + $0x68] sm:$0xff]
      %v186 = vld [vmem:[%s165 + $0x70] sm:$0xff]
      %v187 = vld [vmem:[%s165 + $0x78] sm:$0xff]
      %v188 = vld [vmem:[%s165 + $0x80] sm:$0xff]
      %v189 = vld [vmem:[%s165 + $0x88] sm:$0xff]
      %v190 = vld [vmem:[%s165 + $0x90] sm:$0xff]
      %v191 = vld [vmem:[%s165 + $0x98] sm:$0xff]
      %v192 = vld [vmem:[%s165 + $0xa0] sm:$0xff]
      %v193 = vld [vmem:[%s165 + $0xa8] sm:$0xff]
      %v194 = vld [vmem:[%s165 + $0xb0] sm:$0xff]
      %v195 = vld [vmem:[%s165 + $0xb8] sm:$0xff]
      %v196 = vld [vmem:[%s165 + $0xc0] sm:$0xff]
      %v197 = vld [vmem:[%s165 + $0xc8] sm:$0xff]
      %v198 = vld [vmem:[%s165 + $0xd0] sm:$0xff]
      %v199 = vld [vmem:[%s165 + $0xd8] sm:$0xff]
      %v200 = vld [vmem:[%s165 + $0xe0] sm:$0xff]
      %v201 = vld [vmem:[%s165 + $0xe8] sm:$0xff]
      %v202 = vld [vmem:[%s165 + $0xf0] sm:$0xff]
      %v203 = vld [vmem:[%s165 + $0xf8] sm:$0xff]
      %s204 = scalar_lea.vmem [#allocation2], 24
      %vm205 = vcmask 31744
      %206 = vst.msk [vmem:[%s204 + $0x1] sm:$0xff] %vm205, %v172
      %207 = vst.msk [vmem:[%s204 + $0x9] sm:$0xff] %vm205, %v173
      %208 = vst.msk [vmem:[%s204 + $0x19] sm:$0xff] %vm205, %v174
      %209 = vst.msk [vmem:[%s204 + $0x21] sm:$0xff] %vm205, %v175
      %210 = vst.msk [vmem:[%s204 + $0x31] sm:$0xff] %vm205, %v176
      %211 = vst.msk [vmem:[%s204 + $0x39] sm:$0xff] %vm205, %v177
      %212 = vst.msk [vmem:[%s204 + $0x49] sm:$0xff] %vm205, %v178
      %213 = vst.msk [vmem:[%s204 + $0x51] sm:$0xff] %vm205, %v179
      %214 = vst.msk [vmem:[%s204 + $0x61] sm:$0xff] %vm205, %v180
      %215 = vst.msk [vmem:[%s204 + $0x69] sm:$0xff] %vm205, %v181
      %216 = vst.msk [vmem:[%s204 + $0x79] sm:$0xff] %vm205, %v182
      %217 = vst.msk [vmem:[%s204 + $0x81] sm:$0xff] %vm205, %v183
      %218 = vst.msk [vmem:[%s204 + $0x91] sm:$0xff] %vm205, %v184
      %219 = vst.msk [vmem:[%s204 + $0x99] sm:$0xff] %vm205, %v185
      %220 = vst.msk [vmem:[%s204 + $0xa9] sm:$0xff] %vm205, %v186
      %221 = vst.msk [vmem:[%s204 + $0xb1] sm:$0xff] %vm205, %v187
      %222 = vst.msk [vmem:[%s204 + $0xc1] sm:$0xff] %vm205, %v188
      %223 = vst.msk [vmem:[%s204 + $0xc9] sm:$0xff] %vm205, %v189
      %224 = vst.msk [vmem:[%s204 + $0xd9] sm:$0xff] %vm205, %v190
      %225 = vst.msk [vmem:[%s204 + $0xe1] sm:$0xff] %vm205, %v191
      %226 = vst.msk [vmem:[%s204 + $0xf1] sm:$0xff] %vm205, %v192
      %227 = vst.msk [vmem:[%s204 + $0xf9] sm:$0xff] %vm205, %v193
      %228 = vst.msk [vmem:[%s204 + $0x109] sm:$0xff] %vm205, %v194
      %229 = vst.msk [vmem:[%s204 + $0x111] sm:$0xff] %vm205, %v195
      %230 = vst.msk [vmem:[%s204 + $0x121] sm:$0xff] %vm205, %v196
      %231 = vst.msk [vmem:[%s204 + $0x129] sm:$0xff] %vm205, %v197
      %232 = vst.msk [vmem:[%s204 + $0x139] sm:$0xff] %vm205, %v198
      %233 = vst.msk [vmem:[%s204 + $0x141] sm:$0xff] %vm205, %v199
      %234 = vst.msk [vmem:[%s204 + $0x151] sm:$0xff] %vm205, %v200
      %235 = vst.msk [vmem:[%s204 + $0x159] sm:$0xff] %vm205, %v201
      %236 = vst.msk [vmem:[%s204 + $0x169] sm:$0xff] %vm205, %v202
      %237 = vst.msk [vmem:[%s204 + $0x171] sm:$0xff] %vm205, %v203
      %238 = vst.msk [vmem:[#allocation2 + $0x1] sm:$0xff] %vm205, %v174
      %239 = vst.msk [vmem:[#allocation2 + $0x9] sm:$0xff] %vm205, %v175
      %s240 = scalar_lea.vmem [#allocation2], 408
      %241 = vst.msk [vmem:[%s240 + $0x1] sm:$0xff] %vm205, %v200
      %242 = vst.msk [vmem:[%s240 + $0x9] sm:$0xff] %vm205, %v201
      %v243 = vld [vmem:[#allocation2 + $0x2] sm:$0x1]
      %v244 = vld [vmem:[#allocation2 + $0x1a] sm:$0x1]
      %v245 = vld [vmem:[#allocation2 + $0x32] sm:$0x1]
      %v246 = vld [vmem:[#allocation2 + $0x4a] sm:$0x1]
      %v247 = vld [vmem:[#allocation2 + $0x62] sm:$0x1]
      %v248 = vld [vmem:[#allocation2 + $0x7a] sm:$0x1]
      %v249 = vld [vmem:[#allocation2 + $0x92] sm:$0x1]
      %v250 = vld [vmem:[#allocation2 + $0xaa] sm:$0x1]
      %v251 = vld [vmem:[#allocation2 + $0xc2] sm:$0x1]
      %v252 = vld [vmem:[#allocation2 + $0xda] sm:$0x1]
      %v253 = vld [vmem:[#allocation2 + $0xf2] sm:$0x1]
      %v254 = vld [vmem:[#allocation2 + $0x10a] sm:$0x1]
      %v255 = vld [vmem:[#allocation2 + $0x122] sm:$0x1]
      %v256 = vld [vmem:[#allocation2 + $0x13a] sm:$0x1]
      %v257 = vld [vmem:[#allocation2 + $0x152] sm:$0x1]
      %v258 = vld [vmem:[#allocation2 + $0x16a] sm:$0x1]
      %v259 = vld [vmem:[#allocation2 + $0x182] sm:$0x1]
      %v260 = vld [vmem:[#allocation2 + $0x19a] sm:$0x1]
      %vm261 = vcmask 24576
      %262 = vst.msk [vmem:[#allocation2] sm:$0x1] %vm261, %v243
      %263 = vst.msk [vmem:[#allocation2 + $0x18] sm:$0x1] %vm261, %v244
      %264 = vst.msk [vmem:[#allocation2 + $0x30] sm:$0x1] %vm261, %v245
      %265 = vst.msk [vmem:[#allocation2 + $0x48] sm:$0x1] %vm261, %v246
      %266 = vst.msk [vmem:[#allocation2 + $0x60] sm:$0x1] %vm261, %v247
      %267 = vst.msk [vmem:[#allocation2 + $0x78] sm:$0x1] %vm261, %v248
      %268 = vst.msk [vmem:[#allocation2 + $0x90] sm:$0x1] %vm261, %v249
      %269 = vst.msk [vmem:[#allocation2 + $0xa8] sm:$0x1] %vm261, %v250
      %270 = vst.msk [vmem:[#allocation2 + $0xc0] sm:$0x1] %vm261, %v251
      %271 = vst.msk [vmem:[#allocation2 + $0xd8] sm:$0x1] %vm261, %v252
      %272 = vst.msk [vmem:[#allocation2 + $0xf0] sm:$0x1] %vm261, %v253
      %273 = vst.msk [vmem:[#allocation2 + $0x108] sm:$0x1] %vm261, %v254
      %274 = vst.msk [vmem:[#allocation2 + $0x120] sm:$0x1] %vm261, %v255
      %275 = vst.msk [vmem:[#allocation2 + $0x138] sm:$0x1] %vm261, %v256
      %276 = vst.msk [vmem:[#allocation2 + $0x150] sm:$0x1] %vm261, %v257
      %277 = vst.msk [vmem:[#allocation2 + $0x168] sm:$0x1] %vm261, %v258
      %278 = vst.msk [vmem:[#allocation2 + $0x180] sm:$0x1] %vm261, %v259
      %279 = vst.msk [vmem:[#allocation2 + $0x198] sm:$0x1] %vm261, %v260
      %v280 = vld [vmem:[#allocation2 + $0xf] sm:$0x1]
      %v281 = vld [vmem:[#allocation2 + $0x27] sm:$0x1]
      %v282 = vld [vmem:[#allocation2 + $0x3f] sm:$0x1]
      %v283 = vld [vmem:[#allocation2 + $0x57] sm:$0x1]
      %v284 = vld [vmem:[#allocation2 + $0x6f] sm:$0x1]
      %v285 = vld [vmem:[#allocation2 + $0x87] sm:$0x1]
      %v286 = vld [vmem:[#allocation2 + $0x9f] sm:$0x1]
      %v287 = vld [vmem:[#allocation2 + $0xb7] sm:$0x1]
      %v288 = vld [vmem:[#allocation2 + $0xcf] sm:$0x1]
      %v289 = vld [vmem:[#allocation2 + $0xe7] sm:$0x1]
      %v290 = vld [vmem:[#allocation2 + $0xff] sm:$0x1]
      %v291 = vld [vmem:[#allocation2 + $0x117] sm:$0x1]
      %v292 = vld [vmem:[#allocation2 + $0x12f] sm:$0x1]
      %v293 = vld [vmem:[#allocation2 + $0x147] sm:$0x1]
      %v294 = vld [vmem:[#allocation2 + $0x15f] sm:$0x1]
      %v295 = vld [vmem:[#allocation2 + $0x177] sm:$0x1]
      %v296 = vld [vmem:[#allocation2 + $0x18f] sm:$0x1]
      %v297 = vld [vmem:[#allocation2 + $0x1a7] sm:$0x1]
      %298 = vst.msk [vmem:[#allocation2 + $0x11] sm:$0x1] %vm261, %v280
      %299 = vst.msk [vmem:[#allocation2 + $0x29] sm:$0x1] %vm261, %v281
      %300 = vst.msk [vmem:[#allocation2 + $0x41] sm:$0x1] %vm261, %v282
      %301 = vst.msk [vmem:[#allocation2 + $0x59] sm:$0x1] %vm261, %v283
      %302 = vst.msk [vmem:[#allocation2 + $0x71] sm:$0x1] %vm261, %v284
      %303 = vst.msk [vmem:[#allocation2 + $0x89] sm:$0x1] %vm261, %v285
      %304 = vst.msk [vmem:[#allocation2 + $0xa1] sm:$0x1] %vm261, %v286
      %305 = vst.msk [vmem:[#allocation2 + $0xb9] sm:$0x1] %vm261, %v287
      %306 = vst.msk [vmem:[#allocation2 + $0xd1] sm:$0x1] %vm261, %v288
      %307 = vst.msk [vmem:[#allocation2 + $0xe9] sm:$0x1] %vm261, %v289
      %308 = vst.msk [vmem:[#allocation2 + $0x101] sm:$0x1] %vm261, %v290
      %309 = vst.msk [vmem:[#allocation2 + $0x119] sm:$0x1] %vm261, %v291
      %310 = vst.msk [vmem:[#allocation2 + $0x131] sm:$0x1] %vm261, %v292
      %311 = vst.msk [vmem:[#allocation2 + $0x149] sm:$0x1] %vm261, %v293
      %312 = vst.msk [vmem:[#allocation2 + $0x161] sm:$0x1] %vm261, %v294
      %313 = vst.msk [vmem:[#allocation2 + $0x179] sm:$0x1] %vm261, %v295
      %314 = vst.msk [vmem:[#allocation2 + $0x191] sm:$0x1] %vm261, %v296
      %315 = vst.msk [vmem:[#allocation2 + $0x1a9] sm:$0x1] %vm261, %v297
      %v316 = vld [vmem:[#allocation2] sm:$0xff]
      %v317 = vld [vmem:[#allocation2 + $0x8] sm:$0xff]
      %v318 = vld [vmem:[#allocation2 + $0x18] sm:$0xff]
      %v319 = vld [vmem:[#allocation2 + $0x20] sm:$0xff]
      %v320 = vld [vmem:[#allocation2 + $0x30] sm:$0xff]
      %v321 = vld [vmem:[#allocation2 + $0x38] sm:$0xff]
      %v322 = vld [vmem:[#allocation2 + $0x48] sm:$0xff]
      %v323 = vld [vmem:[#allocation2 + $0x50] sm:$0xff]
      %v324 = vld [vmem:[#allocation2 + $0x60] sm:$0xff]
      %v325 = vld [vmem:[#allocation2 + $0x68] sm:$0xff]
      %v326 = vld [vmem:[#allocation2 + $0x78] sm:$0xff]
      %v327 = vld [vmem:[#allocation2 + $0x80] sm:$0xff]
      %v328 = vld [vmem:[#allocation2 + $0x90] sm:$0xff]
      %v329 = vld [vmem:[#allocation2 + $0x98] sm:$0xff]
      %v330 = vld [vmem:[#allocation2 + $0xa8] sm:$0xff]
      %v331 = vld [vmem:[#allocation2 + $0xb0] sm:$0xff]
      %v332 = vld [vmem:[#allocation2 + $0xc0] sm:$0xff]
      %v333 = vld [vmem:[#allocation2 + $0xc8] sm:$0xff]
      %v334 = vld [vmem:[#allocation2 + $0xd8] sm:$0xff]
      %v335 = vld [vmem:[#allocation2 + $0xe0] sm:$0xff]
      %v336 = vld [vmem:[#allocation2 + $0xf0] sm:$0xff]
      %v337 = vld [vmem:[#allocation2 + $0xf8] sm:$0xff]
      %v338 = vld [vmem:[#allocation2 + $0x108] sm:$0xff]
      %v339 = vld [vmem:[#allocation2 + $0x110] sm:$0xff]
      %v340 = vld [vmem:[#allocation2 + $0x120] sm:$0xff]
      %v341 = vld [vmem:[#allocation2 + $0x128] sm:$0xff]
      %v342 = vld [vmem:[#allocation2 + $0x138] sm:$0xff]
      %v343 = vld [vmem:[#allocation2 + $0x140] sm:$0xff]
      %v344 = vld [vmem:[#allocation2 + $0x150] sm:$0xff]
      %v345 = vld [vmem:[#allocation2 + $0x158] sm:$0xff]
      %v346 = vld [vmem:[#allocation2 + $0x168] sm:$0xff]
      %v347 = vld [vmem:[#allocation2 + $0x170] sm:$0xff]
      %v348 = vld [vmem:[#allocation2 + $0x180] sm:$0xff]
      %v349 = vld [vmem:[#allocation2 + $0x188] sm:$0xff]
      %v350 = vld [vmem:[#allocation2 + $0x198] sm:$0xff]
      %v351 = vld [vmem:[#allocation2 + $0x1a0] sm:$0xff]
      %v352 = vpack.c.bf16 %v317, %v316
      %v353 = vpack.c.bf16 %v319, %v318
      %v354 = vpack.c.bf16 %v321, %v320
      %v355 = vpack.c.bf16 %v323, %v322
      %v356 = vpack.c.bf16 %v325, %v324
      %v357 = vpack.c.bf16 %v327, %v326
      %v358 = vpack.c.bf16 %v329, %v328
      %v359 = vpack.c.bf16 %v331, %v330
      %v360 = vpack.c.bf16 %v333, %v332
      %v361 = vpack.c.bf16 %v335, %v334
      %v362 = vpack.c.bf16 %v337, %v336
      %v363 = vpack.c.bf16 %v339, %v338
      %v364 = vpack.c.bf16 %v341, %v340
      %v365 = vpack.c.bf16 %v343, %v342
      %v366 = vpack.c.bf16 %v345, %v344
      %v367 = vpack.c.bf16 %v347, %v346
      %v368 = vpack.c.bf16 %v349, %v348
      %v369 = vpack.c.bf16 %v351, %v350
      %v370 = vld [vmem:[%s1] sm:$0x3]
      %s371 = scalar_lea.vmem %s1, 6
      %v372 = vld [vmem:[%s371] sm:$0x3]
      %v374 = vsel %vm205, %v353, 0
      %v377 = vsel %vm205, %v354, 0
      %v380 = vsel %vm205, %v355, 0
      %v383 = vsel %vm205, %v356, 0
      %v386 = vsel %vm205, %v357, 0
      %v389 = vsel %vm205, %v358, 0
      %v392 = vsel %vm205, %v359, 0
      %v395 = vsel %vm205, %v360, 0
      %v398 = vsel %vm205, %v361, 0
      %v401 = vsel %vm205, %v362, 0
      %v404 = vsel %vm205, %v363, 0
      %v407 = vsel %vm205, %v364, 0
      %v410 = vsel %vm205, %v365, 0
      %v413 = vsel %vm205, %v366, 0
      %v416 = vsel %vm205, %v367, 0
      %v419 = vsel %vm205, %v368, 0
      %vm421 = vcmask 1041408
      %v423 = vsel %vm421, %v372, 0
      %425 = vmatprep.subr.bf16.mxu0 0
      %426 = vmatpush1.bf16.msra.mxu0 %v423
      %427 = vmatprep.subr.bf16.mxu0 0
      %428 = vmatpush1.bf16.msra.mxu0 0
      %429 = vmatprep.subr.bf16.mxu0 0
      %430 = vmatpush1.bf16.msra.mxu0 0
      %431 = vmatprep.subr.bf16.mxu0 0
      %432 = vmatpush1.bf16.msra.mxu0 0
      %433 = vmatprep.subr.bf16.mxu0 0
      %434 = vmatpush1.bf16.msra.mxu0 0
      %435 = vmatprep.subr.bf16.mxu0 0
      %436 = vmatpush1.bf16.msra.mxu0 0
      %437 = vmatprep.subr.bf16.mxu0 0
      %438 = vmatpush1.bf16.msra.mxu0 0
      %439 = vmatprep.subr.bf16.mxu0 0
      %440 = vmatpush1.bf16.msra.mxu0 0
      %441 = vmatprep.subr.bf16.mxu0 0
      %442 = vmatpush1.bf16.msra.mxu0 0
      %443 = vmatprep.subr.bf16.mxu0 0
      %444 = vmatpush1.bf16.msra.mxu0 0
      %445 = vmatprep.subr.bf16.mxu0 0
      %446 = vmatpush1.bf16.msra.mxu0 0
      %447 = vmatprep.subr.bf16.mxu0 0
      %448 = vmatpush1.bf16.msra.mxu0 0
      %449 = vmatprep.subr.bf16.mxu0 0
      %450 = vmatpush1.bf16.msra.mxu0 0
      %451 = vmatprep.subr.bf16.mxu0 0
      %452 = vmatpush1.bf16.msra.mxu0 0
      %453 = vmatprep.subr.bf16.mxu0 0
      %454 = vmatpush1.bf16.msra.mxu0 0
      %455 = vmatprep.subr.bf16.mxu0 0
      %456 = vmatpush1.bf16.msra.mxu0 0
      %457 = vmatprep.mubr.bf16.mxu0 0
      %458 = vmatmul.mubr.bf16.gmra.mrb[0].mxu0 %v374
      %v459 = vpop.f32.mrb[0].mxu0
      %v460 = vadd.f32 0.0, %v459
      %v461 = vpop.f32.mrb[0].mxu0
      %v462 = vpop.f32.mrb[0].mxu0
      %v463 = vadd.f32 0.0, %v462
      %v464 = vpop.f32.mrb[0].mxu0
      %465 = vmatprep.mubr.bf16.mxu0 0
      %466 = vmatmul.mubr.bf16.gmra.mrb[0].mxu0 %v377
      %v467 = vpop.f32.mrb[0].mxu0
      %v468 = vadd.f32 0.0, %v467
      %v469 = vpop.f32.mrb[0].mxu0
      %v470 = vpop.f32.mrb[0].mxu0
      %v471 = vadd.f32 0.0, %v470
      %v472 = vpop.f32.mrb[0].mxu0
      %473 = vmatprep.mubr.bf16.mxu0 0
      %474 = vmatmul.mubr.bf16.gmra.mrb[0].mxu0 %v380
      %v475 = vpop.f32.mrb[0].mxu0
      %v476 = vadd.f32 0.0, %v475
      %v477 = vpop.f32.mrb[0].mxu0
      %v478 = vpop.f32.mrb[0].mxu0
      %v479 = vadd.f32 0.0, %v478
      %v480 = vpop.f32.mrb[0].mxu0
      %481 = vmatprep.mubr.bf16.mxu0 0
      %482 = vmatmul.mubr.bf16.gmra.mrb[0].mxu0 %v383
      %v483 = vpop.f32.mrb[0].mxu0
      %v484 = vadd.f32 0.0, %v483
      %v485 = vpop.f32.mrb[0].mxu0
      %v486 = vpop.f32.mrb[0].mxu0
      %v487 = vadd.f32 0.0, %v486
      %v488 = vpop.f32.mrb[0].mxu0
      %489 = vmatprep.mubr.bf16.mxu0 0
      %490 = vmatmul.mubr.bf16.gmra.mrb[0].mxu0 %v386
      %v491 = vpop.f32.mrb[0].mxu0
      %v492 = vadd.f32 0.0, %v491
      %v493 = vpop.f32.mrb[0].mxu0
      %v494 = vpop.f32.mrb[0].mxu0
      %v495 = vadd.f32 0.0, %v494
      %v496 = vpop.f32.mrb[0].mxu0
      %497 = vmatprep.mubr.bf16.mxu0 0
      %498 = vmatmul.mubr.bf16.gmra.mrb[0].mxu0 %v389
      %v499 = vpop.f32.mrb[0].mxu0
      %v500 = vadd.f32 0.0, %v499
      %v501 = vpop.f32.mrb[0].mxu0
      %v502 = vpop.f32.mrb[0].mxu0
      %v503 = vadd.f32 0.0, %v502
      %v504 = vpop.f32.mrb[0].mxu0
      %505 = vmatprep.mubr.bf16.mxu0 0
      %506 = vmatmul.mubr.bf16.gmra.mrb[0].mxu0 %v392
      %v507 = vpop.f32.mrb[0].mxu0
      %v508 = vadd.f32 0.0, %v507
      %v509 = vpop.f32.mrb[0].mxu0
      %v510 = vpop.f32.mrb[0].mxu0
      %v511 = vadd.f32 0.0, %v510
      %v512 = vpop.f32.mrb[0].mxu0
      %513 = vmatprep.mubr.bf16.mxu0 0
      %514 = vmatmul.mubr.bf16.gmra.mrb[0].mxu0 %v395
      %v515 = vpop.f32.mrb[0].mxu0
      %v516 = vadd.f32 0.0, %v515
      %v517 = vpop.f32.mrb[0].mxu0
      %v518 = vpop.f32.mrb[0].mxu0
      %v519 = vadd.f32 0.0, %v518
      %v520 = vpop.f32.mrb[0].mxu0
      %521 = vmatprep.mubr.bf16.mxu0 0
      %522 = vmatmul.mubr.bf16.gmra.mrb[0].mxu0 %v398
      %v523 = vpop.f32.mrb[0].mxu0
      %v524 = vadd.f32 0.0, %v523
      %v525 = vpop.f32.mrb[0].mxu0
      %v526 = vpop.f32.mrb[0].mxu0
      %v527 = vadd.f32 0.0, %v526
      %v528 = vpop.f32.mrb[0].mxu0
      %529 = vmatprep.mubr.bf16.mxu0 0
      %530 = vmatmul.mubr.bf16.gmra.mrb[0].mxu0 %v401
      %v531 = vpop.f32.mrb[0].mxu0
      %v532 = vadd.f32 0.0, %v531
      %v533 = vpop.f32.mrb[0].mxu0
      %v534 = vpop.f32.mrb[0].mxu0
      %v535 = vadd.f32 0.0, %v534
      %v536 = vpop.f32.mrb[0].mxu0
      %537 = vmatprep.mubr.bf16.mxu0 0
      %538 = vmatmul.mubr.bf16.gmra.mrb[0].mxu0 %v404
      %v539 = vpop.f32.mrb[0].mxu0
      %v540 = vadd.f32 0.0, %v539
      %v541 = vpop.f32.mrb[0].mxu0
      %v542 = vpop.f32.mrb[0].mxu0
      %v543 = vadd.f32 0.0, %v542
      %v544 = vpop.f32.mrb[0].mxu0
      %545 = vmatprep.mubr.bf16.mxu0 0
      %546 = vmatmul.mubr.bf16.gmra.mrb[0].mxu0 %v407
      %v547 = vpop.f32.mrb[0].mxu0
      %v548 = vadd.f32 0.0, %v547
      %v549 = vpop.f32.mrb[0].mxu0
      %v550 = vpop.f32.mrb[0].mxu0
      %v551 = vadd.f32 0.0, %v550
      %v552 = vpop.f32.mrb[0].mxu0
      %553 = vmatprep.mubr.bf16.mxu0 0
      %554 = vmatmul.mubr.bf16.gmra.mrb[0].mxu0 %v410
      %v555 = vpop.f32.mrb[0].mxu0
      %v556 = vadd.f32 0.0, %v555
      %v557 = vpop.f32.mrb[0].mxu0
      %v558 = vpop.f32.mrb[0].mxu0
      %v559 = vadd.f32 0.0, %v558
      %v560 = vpop.f32.mrb[0].mxu0
      %561 = vmatprep.mubr.bf16.mxu0 0
      %562 = vmatmul.mubr.bf16.gmra.mrb[0].mxu0 %v413
      %v563 = vpop.f32.mrb[0].mxu0
      %v564 = vadd.f32 0.0, %v563
      %v565 = vpop.f32.mrb[0].mxu0
      %v566 = vpop.f32.mrb[0].mxu0
      %v567 = vadd.f32 0.0, %v566
      %v568 = vpop.f32.mrb[0].mxu0
      %569 = vmatprep.mubr.bf16.mxu0 0
      %570 = vmatmul.mubr.bf16.gmra.mrb[0].mxu0 %v416
      %v571 = vpop.f32.mrb[0].mxu0
      %v572 = vadd.f32 0.0, %v571
      %v573 = vpop.f32.mrb[0].mxu0
      %v574 = vpop.f32.mrb[0].mxu0
      %v575 = vadd.f32 0.0, %v574
      %v576 = vpop.f32.mrb[0].mxu0
      %577 = vmatprep.mubr.bf16.mxu0 0
      %578 = vmatmul.mubr.bf16.gmra.mrb[0].mxu0 %v419
      %v579 = vpop.f32.mrb[0].mxu0
      %v580 = vadd.f32 0.0, %v579
      %v581 = vpop.f32.mrb[0].mxu0
      %v582 = vpop.f32.mrb[0].mxu0
      %v583 = vadd.f32 0.0, %v582
      %v584 = vpop.f32.mrb[0].mxu0
      %585 = vdwg.mxu0
      %v587 = vsel %vm205, %v352, 0
      %v590 = vsel %vm421, %v370, 0
      %592 = vmatprep.subr.bf16.mxu0 0
      %593 = vmatpush1.bf16.msra.mxu0 %v590
      %594 = vmatprep.subr.bf16.mxu0 0
      %595 = vmatpush1.bf16.msra.mxu0 0
      %596 = vmatprep.subr.bf16.mxu0 0
      %597 = vmatpush1.bf16.msra.mxu0 0
      %598 = vmatprep.subr.bf16.mxu0 0
      %599 = vmatpush1.bf16.msra.mxu0 0
      %600 = vmatprep.subr.bf16.mxu0 0
      %601 = vmatpush1.bf16.msra.mxu0 0
      %602 = vmatprep.subr.bf16.mxu0 0
      %603 = vmatpush1.bf16.msra.mxu0 0
      %604 = vmatprep.subr.bf16.mxu0 0
      %605 = vmatpush1.bf16.msra.mxu0 0
      %606 = vmatprep.subr.bf16.mxu0 0
      %607 = vmatpush1.bf16.msra.mxu0 0
      %608 = vmatprep.subr.bf16.mxu0 0
      %609 = vmatpush1.bf16.msra.mxu0 0
      %610 = vmatprep.subr.bf16.mxu0 0
      %611 = vmatpush1.bf16.msra.mxu0 0
      %612 = vmatprep.subr.bf16.mxu0 0
      %613 = vmatpush1.bf16.msra.mxu0 0
      %614 = vmatprep.subr.bf16.mxu0 0
      %615 = vmatpush1.bf16.msra.mxu0 0
      %616 = vmatprep.subr.bf16.mxu0 0
      %617 = vmatpush1.bf16.msra.mxu0 0
      %618 = vmatprep.subr.bf16.mxu0 0
      %619 = vmatpush1.bf16.msra.mxu0 0
      %620 = vmatprep.subr.bf16.mxu0 0
      %621 = vmatpush1.bf16.msra.mxu0 0
      %622 = vmatprep.subr.bf16.mxu0 0
      %623 = vmatpush1.bf16.msra.mxu0 0
      %624 = vmatprep.mubr.bf16.mxu0 0
      %625 = vmatmul.mubr.bf16.gmra.mrb[0].mxu0 %v587
      %v626 = vpop.f32.mrb[0].mxu0
      %v627 = vadd.f32 %v460, %v626
      %v628 = vpop.f32.mrb[0].mxu0
      %v629 = vpop.f32.mrb[0].mxu0
      %v630 = vadd.f32 %v463, %v629
      %v631 = vpop.f32.mrb[0].mxu0
      %632 = vmatprep.mubr.bf16.mxu0 0
      %633 = vmatmul.mubr.bf16.gmra.mrb[0].mxu0 %v374
      %v634 = vpop.f32.mrb[0].mxu0
      %v635 = vadd.f32 %v468, %v634
      %v636 = vpop.f32.mrb[0].mxu0
      %v637 = vpop.f32.mrb[0].mxu0
      %v638 = vadd.f32 %v471, %v637
      %v639 = vpop.f32.mrb[0].mxu0
      %640 = vmatprep.mubr.bf16.mxu0 0
      %641 = vmatmul.mubr.bf16.gmra.mrb[0].mxu0 %v377
      %v642 = vpop.f32.mrb[0].mxu0
      %v643 = vadd.f32 %v476, %v642
      %v644 = vpop.f32.mrb[0].mxu0
      %v645 = vpop.f32.mrb[0].mxu0
      %v646 = vadd.f32 %v479, %v645
      %v647 = vpop.f32.mrb[0].mxu0
      %648 = vmatprep.mubr.bf16.mxu0 0
      %649 = vmatmul.mubr.bf16.gmra.mrb[0].mxu0 %v380
      %v650 = vpop.f32.mrb[0].mxu0
      %v651 = vadd.f32 %v484, %v650
      %v652 = vpop.f32.mrb[0].mxu0
      %v653 = vpop.f32.mrb[0].mxu0
      %v654 = vadd.f32 %v487, %v653
      %v655 = vpop.f32.mrb[0].mxu0
      %656 = vmatprep.mubr.bf16.mxu0 0
      %657 = vmatmul.mubr.bf16.gmra.mrb[0].mxu0 %v383
      %v658 = vpop.f32.mrb[0].mxu0
      %v659 = vadd.f32 %v492, %v658
      %v660 = vpop.f32.mrb[0].mxu0
      %v661 = vpop.f32.mrb[0].mxu0
      %v662 = vadd.f32 %v495, %v661
      %v663 = vpop.f32.mrb[0].mxu0
      %664 = vmatprep.mubr.bf16.mxu0 0
      %665 = vmatmul.mubr.bf16.gmra.mrb[0].mxu0 %v386
      %v666 = vpop.f32.mrb[0].mxu0
      %v667 = vadd.f32 %v500, %v666
      %v668 = vpop.f32.mrb[0].mxu0
      %v669 = vpop.f32.mrb[0].mxu0
      %v670 = vadd.f32 %v503, %v669
      %v671 = vpop.f32.mrb[0].mxu0
      %672 = vmatprep.mubr.bf16.mxu0 0
      %673 = vmatmul.mubr.bf16.gmra.mrb[0].mxu0 %v389
      %v674 = vpop.f32.mrb[0].mxu0
      %v675 = vadd.f32 %v508, %v674
      %v676 = vpop.f32.mrb[0].mxu0
      %v677 = vpop.f32.mrb[0].mxu0
      %v678 = vadd.f32 %v511, %v677
      %v679 = vpop.f32.mrb[0].mxu0
      %680 = vmatprep.mubr.bf16.mxu0 0
      %681 = vmatmul.mubr.bf16.gmra.mrb[0].mxu0 %v392
      %v682 = vpop.f32.mrb[0].mxu0
      %v683 = vadd.f32 %v516, %v682
      %v684 = vpop.f32.mrb[0].mxu0
      %v685 = vpop.f32.mrb[0].mxu0
      %v686 = vadd.f32 %v519, %v685
      %v687 = vpop.f32.mrb[0].mxu0
      %688 = vmatprep.mubr.bf16.mxu0 0
      %689 = vmatmul.mubr.bf16.gmra.mrb[0].mxu0 %v395
      %v690 = vpop.f32.mrb[0].mxu0
      %v691 = vadd.f32 %v524, %v690
      %v692 = vpop.f32.mrb[0].mxu0
      %v693 = vpop.f32.mrb[0].mxu0
      %v694 = vadd.f32 %v527, %v693
      %v695 = vpop.f32.mrb[0].mxu0
      %696 = vmatprep.mubr.bf16.mxu0 0
      %697 = vmatmul.mubr.bf16.gmra.mrb[0].mxu0 %v398
      %v698 = vpop.f32.mrb[0].mxu0
      %v699 = vadd.f32 %v532, %v698
      %v700 = vpop.f32.mrb[0].mxu0
      %v701 = vpop.f32.mrb[0].mxu0
      %v702 = vadd.f32 %v535, %v701
      %v703 = vpop.f32.mrb[0].mxu0
      %704 = vmatprep.mubr.bf16.mxu0 0
      %705 = vmatmul.mubr.bf16.gmra.mrb[0].mxu0 %v401
      %v706 = vpop.f32.mrb[0].mxu0
      %v707 = vadd.f32 %v540, %v706
      %v708 = vpop.f32.mrb[0].mxu0
      %v709 = vpop.f32.mrb[0].mxu0
      %v710 = vadd.f32 %v543, %v709
      %v711 = vpop.f32.mrb[0].mxu0
      %712 = vmatprep.mubr.bf16.mxu0 0
      %713 = vmatmul.mubr.bf16.gmra.mrb[0].mxu0 %v404
      %v714 = vpop.f32.mrb[0].mxu0
      %v715 = vadd.f32 %v548, %v714
      %v716 = vpop.f32.mrb[0].mxu0
      %v717 = vpop.f32.mrb[0].mxu0
      %v718 = vadd.f32 %v551, %v717
      %v719 = vpop.f32.mrb[0].mxu0
      %720 = vmatprep.mubr.bf16.mxu0 0
      %721 = vmatmul.mubr.bf16.gmra.mrb[0].mxu0 %v407
      %v722 = vpop.f32.mrb[0].mxu0
      %v723 = vadd.f32 %v556, %v722
      %v724 = vpop.f32.mrb[0].mxu0
      %v725 = vpop.f32.mrb[0].mxu0
      %v726 = vadd.f32 %v559, %v725
      %v727 = vpop.f32.mrb[0].mxu0
      %728 = vmatprep.mubr.bf16.mxu0 0
      %729 = vmatmul.mubr.bf16.gmra.mrb[0].mxu0 %v410
      %v730 = vpop.f32.mrb[0].mxu0
      %v731 = vadd.f32 %v564, %v730
      %v732 = vpop.f32.mrb[0].mxu0
      %v733 = vpop.f32.mrb[0].mxu0
      %v734 = vadd.f32 %v567, %v733
      %v735 = vpop.f32.mrb[0].mxu0
      %736 = vmatprep.mubr.bf16.mxu0 0
      %737 = vmatmul.mubr.bf16.gmra.mrb[0].mxu0 %v413
      %v738 = vpop.f32.mrb[0].mxu0
      %v739 = vadd.f32 %v572, %v738
      %v740 = vpop.f32.mrb[0].mxu0
      %v741 = vpop.f32.mrb[0].mxu0
      %v742 = vadd.f32 %v575, %v741
      %v743 = vpop.f32.mrb[0].mxu0
      %744 = vmatprep.mubr.bf16.mxu0 0
      %745 = vmatmul.mubr.bf16.gmra.mrb[0].mxu0 %v416
      %v746 = vpop.f32.mrb[0].mxu0
      %v747 = vadd.f32 %v580, %v746
      %v748 = vpop.f32.mrb[0].mxu0
      %v749 = vpop.f32.mrb[0].mxu0
      %v750 = vadd.f32 %v583, %v749
      %v751 = vpop.f32.mrb[0].mxu0
      %752 = vdwg.mxu0
      %s753 = scalar_lea.vmem %s1, 12
      %v754 = vld [vmem:[%s753] sm:$0x3]
      %v756 = vsel %vm205, %v369, 0
      %v759 = vsel %vm421, %v754, 0
      %761 = vmatprep.subr.bf16.mxu0 0
      %762 = vmatpush1.bf16.msra.mxu0 %v759
      %763 = vmatprep.subr.bf16.mxu0 0
      %764 = vmatpush1.bf16.msra.mxu0 0
      %765 = vmatprep.subr.bf16.mxu0 0
      %766 = vmatpush1.bf16.msra.mxu0 0
      %767 = vmatprep.subr.bf16.mxu0 0
      %768 = vmatpush1.bf16.msra.mxu0 0
      %769 = vmatprep.subr.bf16.mxu0 0
      %770 = vmatpush1.bf16.msra.mxu0 0
      %771 = vmatprep.subr.bf16.mxu0 0
      %772 = vmatpush1.bf16.msra.mxu0 0
      %773 = vmatprep.subr.bf16.mxu0 0
      %774 = vmatpush1.bf16.msra.mxu0 0
      %775 = vmatprep.subr.bf16.mxu0 0
      %776 = vmatpush1.bf16.msra.mxu0 0
      %777 = vmatprep.subr.bf16.mxu0 0
      %778 = vmatpush1.bf16.msra.mxu0 0
      %779 = vmatprep.subr.bf16.mxu0 0
      %780 = vmatpush1.bf16.msra.mxu0 0
      %781 = vmatprep.subr.bf16.mxu0 0
      %782 = vmatpush1.bf16.msra.mxu0 0
      %783 = vmatprep.subr.bf16.mxu0 0
      %784 = vmatpush1.bf16.msra.mxu0 0
      %785 = vmatprep.subr.bf16.mxu0 0
      %786 = vmatpush1.bf16.msra.mxu0 0
      %787 = vmatprep.subr.bf16.mxu0 0
      %788 = vmatpush1.bf16.msra.mxu0 0
      %789 = vmatprep.subr.bf16.mxu0 0
      %790 = vmatpush1.bf16.msra.mxu0 0
      %791 = vmatprep.subr.bf16.mxu0 0
      %792 = vmatpush1.bf16.msra.mxu0 0
      %793 = vmatprep.mubr.bf16.mxu0 0
      %794 = vmatmul.mubr.bf16.gmra.mrb[0].mxu0 %v377
      %v795 = vpop.f32.mrb[0].mxu0
      %v796 = vadd.f32 0.0, %v795
      %v797 = vpop.f32.mrb[0].mxu0
      %v798 = vpop.f32.mrb[0].mxu0
      %v799 = vadd.f32 0.0, %v798
      %v800 = vpop.f32.mrb[0].mxu0
      %801 = vmatprep.mubr.bf16.mxu0 0
      %802 = vmatmul.mubr.bf16.gmra.mrb[0].mxu0 %v380
      %v803 = vpop.f32.mrb[0].mxu0
      %v804 = vadd.f32 0.0, %v803
      %v805 = vpop.f32.mrb[0].mxu0
      %v806 = vpop.f32.mrb[0].mxu0
      %v807 = vadd.f32 0.0, %v806
      %v808 = vpop.f32.mrb[0].mxu0
      %809 = vmatprep.mubr.bf16.mxu0 0
      %810 = vmatmul.mubr.bf16.gmra.mrb[0].mxu0 %v383
      %v811 = vpop.f32.mrb[0].mxu0
      %v812 = vadd.f32 0.0, %v811
      %v813 = vpop.f32.mrb[0].mxu0
      %v814 = vpop.f32.mrb[0].mxu0
      %v815 = vadd.f32 0.0, %v814
      %v816 = vpop.f32.mrb[0].mxu0
      %817 = vmatprep.mubr.bf16.mxu0 0
      %818 = vmatmul.mubr.bf16.gmra.mrb[0].mxu0 %v386
      %v819 = vpop.f32.mrb[0].mxu0
      %v820 = vadd.f32 0.0, %v819
      %v821 = vpop.f32.mrb[0].mxu0
      %v822 = vpop.f32.mrb[0].mxu0
      %v823 = vadd.f32 0.0, %v822
      %v824 = vpop.f32.mrb[0].mxu0
      %825 = vmatprep.mubr.bf16.mxu0 0
      %826 = vmatmul.mubr.bf16.gmra.mrb[0].mxu0 %v389
      %v827 = vpop.f32.mrb[0].mxu0
      %v828 = vadd.f32 0.0, %v827
      %v829 = vpop.f32.mrb[0].mxu0
      %v830 = vpop.f32.mrb[0].mxu0
      %v831 = vadd.f32 0.0, %v830
      %v832 = vpop.f32.mrb[0].mxu0
      %833 = vmatprep.mubr.bf16.mxu0 0
      %834 = vmatmul.mubr.bf16.gmra.mrb[0].mxu0 %v392
      %v835 = vpop.f32.mrb[0].mxu0
      %v836 = vadd.f32 0.0, %v835
      %v837 = vpop.f32.mrb[0].mxu0
      %v838 = vpop.f32.mrb[0].mxu0
      %v839 = vadd.f32 0.0, %v838
      %v840 = vpop.f32.mrb[0].mxu0
      %841 = vmatprep.mubr.bf16.mxu0 0
      %842 = vmatmul.mubr.bf16.gmra.mrb[0].mxu0 %v395
      %v843 = vpop.f32.mrb[0].mxu0
      %v844 = vadd.f32 0.0, %v843
      %v845 = vpop.f32.mrb[0].mxu0
      %v846 = vpop.f32.mrb[0].mxu0
      %v847 = vadd.f32 0.0, %v846
      %v848 = vpop.f32.mrb[0].mxu0
      %849 = vmatprep.mubr.bf16.mxu0 0
      %850 = vmatmul.mubr.bf16.gmra.mrb[0].mxu0 %v398
      %v851 = vpop.f32.mrb[0].mxu0
      %v852 = vadd.f32 0.0, %v851
      %v853 = vpop.f32.mrb[0].mxu0
      %v854 = vpop.f32.mrb[0].mxu0
      %v855 = vadd.f32 0.0, %v854
      %v856 = vpop.f32.mrb[0].mxu0
      %857 = vmatprep.mubr.bf16.mxu0 0
      %858 = vmatmul.mubr.bf16.gmra.mrb[0].mxu0 %v401
      %v859 = vpop.f32.mrb[0].mxu0
      %v860 = vadd.f32 0.0, %v859
      %v861 = vpop.f32.mrb[0].mxu0
      %v862 = vpop.f32.mrb[0].mxu0
      %v863 = vadd.f32 0.0, %v862
      %v864 = vpop.f32.mrb[0].mxu0
      %865 = vmatprep.mubr.bf16.mxu0 0
      %866 = vmatmul.mubr.bf16.gmra.mrb[0].mxu0 %v404
      %v867 = vpop.f32.mrb[0].mxu0
      %v868 = vadd.f32 0.0, %v867
      %v869 = vpop.f32.mrb[0].mxu0
      %v870 = vpop.f32.mrb[0].mxu0
      %v871 = vadd.f32 0.0, %v870
      %v872 = vpop.f32.mrb[0].mxu0
      %873 = vmatprep.mubr.bf16.mxu0 0
      %874 = vmatmul.mubr.bf16.gmra.mrb[0].mxu0 %v407
      %v875 = vpop.f32.mrb[0].mxu0
      %v876 = vadd.f32 0.0, %v875
      %v877 = vpop.f32.mrb[0].mxu0
      %v878 = vpop.f32.mrb[0].mxu0
      %v879 = vadd.f32 0.0, %v878
      %v880 = vpop.f32.mrb[0].mxu0
      %881 = vmatprep.mubr.bf16.mxu0 0
      %882 = vmatmul.mubr.bf16.gmra.mrb[0].mxu0 %v410
      %v883 = vpop.f32.mrb[0].mxu0
      %v884 = vadd.f32 0.0, %v883
      %v885 = vpop.f32.mrb[0].mxu0
      %v886 = vpop.f32.mrb[0].mxu0
      %v887 = vadd.f32 0.0, %v886
      %v888 = vpop.f32.mrb[0].mxu0
      %889 = vmatprep.mubr.bf16.mxu0 0
      %890 = vmatmul.mubr.bf16.gmra.mrb[0].mxu0 %v413
      %v891 = vpop.f32.mrb[0].mxu0
      %v892 = vadd.f32 0.0, %v891
      %v893 = vpop.f32.mrb[0].mxu0
      %v894 = vpop.f32.mrb[0].mxu0
      %v895 = vadd.f32 0.0, %v894
      %v896 = vpop.f32.mrb[0].mxu0
      %897 = vmatprep.mubr.bf16.mxu0 0
      %898 = vmatmul.mubr.bf16.gmra.mrb[0].mxu0 %v416
      %v899 = vpop.f32.mrb[0].mxu0
      %v900 = vadd.f32 0.0, %v899
      %v901 = vpop.f32.mrb[0].mxu0
      %v902 = vpop.f32.mrb[0].mxu0
      %v903 = vadd.f32 0.0, %v902
      %v904 = vpop.f32.mrb[0].mxu0
      %905 = vmatprep.mubr.bf16.mxu0 0
      %906 = vmatmul.mubr.bf16.gmra.mrb[0].mxu0 %v419
      %v907 = vpop.f32.mrb[0].mxu0
      %v908 = vadd.f32 0.0, %v907
      %v909 = vpop.f32.mrb[0].mxu0
      %v910 = vpop.f32.mrb[0].mxu0
      %v911 = vadd.f32 0.0, %v910
      %v912 = vpop.f32.mrb[0].mxu0
      %913 = vmatprep.mubr.bf16.mxu0 0
      %914 = vmatmul.mubr.bf16.gmra.mrb[0].mxu0 %v756
      %v915 = vpop.f32.mrb[0].mxu0
      %v916 = vadd.f32 0.0, %v915
      %v917 = vpop.f32.mrb[0].mxu0
      %v918 = vpop.f32.mrb[0].mxu0
      %v919 = vadd.f32 0.0, %v918
      %v920 = vpop.f32.mrb[0].mxu0
      %921 = vdwg.mxu0
      %v922 = vadd.f32 %v627, %v796
      %v923 = vadd.f32 %v630, %v799
      %v924 = vadd.f32 %v635, %v804
      %v925 = vadd.f32 %v638, %v807
      %v926 = vadd.f32 %v643, %v812
      %v927 = vadd.f32 %v646, %v815
      %v928 = vadd.f32 %v651, %v820
      %v929 = vadd.f32 %v654, %v823
      %v930 = vadd.f32 %v659, %v828
      %v931 = vadd.f32 %v662, %v831
      %v932 = vadd.f32 %v667, %v836
      %v933 = vadd.f32 %v670, %v839
      %v934 = vadd.f32 %v675, %v844
      %v935 = vadd.f32 %v678, %v847
      %v936 = vadd.f32 %v683, %v852
      %v937 = vadd.f32 %v686, %v855
      %v938 = vadd.f32 %v691, %v860
      %v939 = vadd.f32 %v694, %v863
      %v940 = vadd.f32 %v699, %v868
      %v941 = vadd.f32 %v702, %v871
      %v942 = vadd.f32 %v707, %v876
      %v943 = vadd.f32 %v710, %v879
      %v944 = vadd.f32 %v715, %v884
      %v945 = vadd.f32 %v718, %v887
      %v946 = vadd.f32 %v723, %v892
      %v947 = vadd.f32 %v726, %v895
      %v948 = vadd.f32 %v731, %v900
      %v949 = vadd.f32 %v734, %v903
      %v950 = vadd.f32 %v739, %v908
      %v951 = vadd.f32 %v742, %v911
      %v952 = vadd.f32 %v747, %v916
      %v953 = vadd.f32 %v750, %v919
      %v954 = vld [vmem:[#allocation2 + $0x1] sm:$0xff]
      %v955 = vld [vmem:[#allocation2 + $0x9] sm:$0xff]
      %v956 = vld [vmem:[#allocation2 + $0x19] sm:$0xff]
      %v957 = vld [vmem:[#allocation2 + $0x21] sm:$0xff]
      %v958 = vld [vmem:[#allocation2 + $0x31] sm:$0xff]
      %v959 = vld [vmem:[#allocation2 + $0x39] sm:$0xff]
      %v960 = vld [vmem:[#allocation2 + $0x49] sm:$0xff]
      %v961 = vld [vmem:[#allocation2 + $0x51] sm:$0xff]
      %v962 = vld [vmem:[#allocation2 + $0x61] sm:$0xff]
      %v963 = vld [vmem:[#allocation2 + $0x69] sm:$0xff]
      %v964 = vld [vmem:[#allocation2 + $0x79] sm:$0xff]
      %v965 = vld [vmem:[#allocation2 + $0x81] sm:$0xff]
      %v966 = vld [vmem:[#allocation2 + $0x91] sm:$0xff]
      %v967 = vld [vmem:[#allocation2 + $0x99] sm:$0xff]
      %v968 = vld [vmem:[#allocation2 + $0xa9] sm:$0xff]
      %v969 = vld [vmem:[#allocation2 + $0xb1] sm:$0xff]
      %v970 = vld [vmem:[#allocation2 + $0xc1] sm:$0xff]
      %v971 = vld [vmem:[#allocation2 + $0xc9] sm:$0xff]
      %v972 = vld [vmem:[#allocation2 + $0xd9] sm:$0xff]
      %v973 = vld [vmem:[#allocation2 + $0xe1] sm:$0xff]
      %v974 = vld [vmem:[#allocation2 + $0xf1] sm:$0xff]
      %v975 = vld [vmem:[#allocation2 + $0xf9] sm:$0xff]
      %v976 = vld [vmem:[#allocation2 + $0x109] sm:$0xff]
      %v977 = vld [vmem:[#allocation2 + $0x111] sm:$0xff]
      %v978 = vld [vmem:[#allocation2 + $0x121] sm:$0xff]
      %v979 = vld [vmem:[#allocation2 + $0x129] sm:$0xff]
      %v980 = vld [vmem:[#allocation2 + $0x139] sm:$0xff]
      %v981 = vld [vmem:[#allocation2 + $0x141] sm:$0xff]
      %v982 = vld [vmem:[#allocation2 + $0x151] sm:$0xff]
      %v983 = vld [vmem:[#allocation2 + $0x159] sm:$0xff]
      %v984 = vld [vmem:[#allocation2 + $0x169] sm:$0xff]
      %v985 = vld [vmem:[#allocation2 + $0x171] sm:$0xff]
      %v986 = vld [vmem:[#allocation2 + $0x181] sm:$0xff]
      %v987 = vld [vmem:[#allocation2 + $0x189] sm:$0xff]
      %v988 = vld [vmem:[#allocation2 + $0x199] sm:$0xff]
      %v989 = vld [vmem:[#allocation2 + $0x1a1] sm:$0xff]
      %v990 = vpack.c.bf16 %v955, %v954
      %v991 = vpack.c.bf16 %v957, %v956
      %v992 = vpack.c.bf16 %v959, %v958
      %v993 = vpack.c.bf16 %v961, %v960
      %v994 = vpack.c.bf16 %v963, %v962
      %v995 = vpack.c.bf16 %v965, %v964
      %v996 = vpack.c.bf16 %v967, %v966
      %v997 = vpack.c.bf16 %v969, %v968
      %v998 = vpack.c.bf16 %v971, %v970
      %v999 = vpack.c.bf16 %v973, %v972
      %v1000 = vpack.c.bf16 %v975, %v974
      %v1001 = vpack.c.bf16 %v977, %v976
      %v1002 = vpack.c.bf16 %v979, %v978
      %v1003 = vpack.c.bf16 %v981, %v980
      %v1004 = vpack.c.bf16 %v983, %v982
      %v1005 = vpack.c.bf16 %v985, %v984
      %v1006 = vpack.c.bf16 %v987, %v986
      %v1007 = vpack.c.bf16 %v989, %v988
      %s1008 = scalar_lea.vmem %s1, 2
      %v1009 = vld [vmem:[%s1008] sm:$0x3]
      %v1011 = vsel %vm205, %v990, 0
      %v1014 = vsel %vm205, %v991, 0
      %v1017 = vsel %vm205, %v992, 0
      %v1020 = vsel %vm205, %v993, 0
      %v1023 = vsel %vm205, %v994, 0
      %v1026 = vsel %vm205, %v995, 0
      %v1029 = vsel %vm205, %v996, 0
      %v1032 = vsel %vm205, %v997, 0
      %v1035 = vsel %vm205, %v998, 0
      %v1038 = vsel %vm205, %v999, 0
      %v1041 = vsel %vm205, %v1000, 0
      %v1044 = vsel %vm205, %v1001, 0
      %v1047 = vsel %vm205, %v1002, 0
      %v1050 = vsel %vm205, %v1003, 0
      %v1053 = vsel %vm205, %v1004, 0
      %v1056 = vsel %vm205, %v1005, 0
      %v1059 = vsel %vm421, %v1009, 0
      %1061 = vmatprep.subr.bf16.mxu0 0
      %1062 = vmatpush1.bf16.msra.mxu0 %v1059
      %1063 = vmatprep.subr.bf16.mxu0 0
      %1064 = vmatpush1.bf16.msra.mxu0 0
      %1065 = vmatprep.subr.bf16.mxu0 0
      %1066 = vmatpush1.bf16.msra.mxu0 0
      %1067 = vmatprep.subr.bf16.mxu0 0
      %1068 = vmatpush1.bf16.msra.mxu0 0
      %1069 = vmatprep.subr.bf16.mxu0 0
      %1070 = vmatpush1.bf16.msra.mxu0 0
      %1071 = vmatprep.subr.bf16.mxu0 0
      %1072 = vmatpush1.bf16.msra.mxu0 0
      %1073 = vmatprep.subr.bf16.mxu0 0
      %1074 = vmatpush1.bf16.msra.mxu0 0
      %1075 = vmatprep.subr.bf16.mxu0 0
      %1076 = vmatpush1.bf16.msra.mxu0 0
      %1077 = vmatprep.subr.bf16.mxu0 0
      %1078 = vmatpush1.bf16.msra.mxu0 0
      %1079 = vmatprep.subr.bf16.mxu0 0
      %1080 = vmatpush1.bf16.msra.mxu0 0
      %1081 = vmatprep.subr.bf16.mxu0 0
      %1082 = vmatpush1.bf16.msra.mxu0 0
      %1083 = vmatprep.subr.bf16.mxu0 0
      %1084 = vmatpush1.bf16.msra.mxu0 0
      %1085 = vmatprep.subr.bf16.mxu0 0
      %1086 = vmatpush1.bf16.msra.mxu0 0
      %1087 = vmatprep.subr.bf16.mxu0 0
      %1088 = vmatpush1.bf16.msra.mxu0 0
      %1089 = vmatprep.subr.bf16.mxu0 0
      %1090 = vmatpush1.bf16.msra.mxu0 0
      %1091 = vmatprep.subr.bf16.mxu0 0
      %1092 = vmatpush1.bf16.msra.mxu0 0
      %1093 = vmatprep.mubr.bf16.mxu0 0
      %1094 = vmatmul.mubr.bf16.gmra.mrb[0].mxu0 %v1011
      %v1095 = vpop.f32.mrb[0].mxu0
      %v1096 = vadd.f32 0.0, %v1095
      %v1097 = vpop.f32.mrb[0].mxu0
      %v1098 = vpop.f32.mrb[0].mxu0
      %v1099 = vadd.f32 0.0, %v1098
      %v1100 = vpop.f32.mrb[0].mxu0
      %1101 = vmatprep.mubr.bf16.mxu0 0
      %1102 = vmatmul.mubr.bf16.gmra.mrb[0].mxu0 %v1014
      %v1103 = vpop.f32.mrb[0].mxu0
      %v1104 = vadd.f32 0.0, %v1103
      %v1105 = vpop.f32.mrb[0].mxu0
      %v1106 = vpop.f32.mrb[0].mxu0
      %v1107 = vadd.f32 0.0, %v1106
      %v1108 = vpop.f32.mrb[0].mxu0
      %1109 = vmatprep.mubr.bf16.mxu0 0
      %1110 = vmatmul.mubr.bf16.gmra.mrb[0].mxu0 %v1017
      %v1111 = vpop.f32.mrb[0].mxu0
      %v1112 = vadd.f32 0.0, %v1111
      %v1113 = vpop.f32.mrb[0].mxu0
      %v1114 = vpop.f32.mrb[0].mxu0
      %v1115 = vadd.f32 0.0, %v1114
      %v1116 = vpop.f32.mrb[0].mxu0
      %1117 = vmatprep.mubr.bf16.mxu0 0
      %1118 = vmatmul.mubr.bf16.gmra.mrb[0].mxu0 %v1020
      %v1119 = vpop.f32.mrb[0].mxu0
      %v1120 = vadd.f32 0.0, %v1119
      %v1121 = vpop.f32.mrb[0].mxu0
      %v1122 = vpop.f32.mrb[0].mxu0
      %v1123 = vadd.f32 0.0, %v1122
      %v1124 = vpop.f32.mrb[0].mxu0
      %1125 = vmatprep.mubr.bf16.mxu0 0
      %1126 = vmatmul.mubr.bf16.gmra.mrb[0].mxu0 %v1023
      %v1127 = vpop.f32.mrb[0].mxu0
      %v1128 = vadd.f32 0.0, %v1127
      %v1129 = vpop.f32.mrb[0].mxu0
      %v1130 = vpop.f32.mrb[0].mxu0
      %v1131 = vadd.f32 0.0, %v1130
      %v1132 = vpop.f32.mrb[0].mxu0
      %1133 = vmatprep.mubr.bf16.mxu0 0
      %1134 = vmatmul.mubr.bf16.gmra.mrb[0].mxu0 %v1026
      %v1135 = vpop.f32.mrb[0].mxu0
      %v1136 = vadd.f32 0.0, %v1135
      %v1137 = vpop.f32.mrb[0].mxu0
      %v1138 = vpop.f32.mrb[0].mxu0
      %v1139 = vadd.f32 0.0, %v1138
      %v1140 = vpop.f32.mrb[0].mxu0
      %1141 = vmatprep.mubr.bf16.mxu0 0
      %1142 = vmatmul.mubr.bf16.gmra.mrb[0].mxu0 %v1029
      %v1143 = vpop.f32.mrb[0].mxu0
      %v1144 = vadd.f32 0.0, %v1143
      %v1145 = vpop.f32.mrb[0].mxu0
      %v1146 = vpop.f32.mrb[0].mxu0
      %v1147 = vadd.f32 0.0, %v1146
      %v1148 = vpop.f32.mrb[0].mxu0
      %1149 = vmatprep.mubr.bf16.mxu0 0
      %1150 = vmatmul.mubr.bf16.gmra.mrb[0].mxu0 %v1032
      %v1151 = vpop.f32.mrb[0].mxu0
      %v1152 = vadd.f32 0.0, %v1151
      %v1153 = vpop.f32.mrb[0].mxu0
      %v1154 = vpop.f32.mrb[0].mxu0
      %v1155 = vadd.f32 0.0, %v1154
      %v1156 = vpop.f32.mrb[0].mxu0
      %1157 = vmatprep.mubr.bf16.mxu0 0
      %1158 = vmatmul.mubr.bf16.gmra.mrb[0].mxu0 %v1035
      %v1159 = vpop.f32.mrb[0].mxu0
      %v1160 = vadd.f32 0.0, %v1159
      %v1161 = vpop.f32.mrb[0].mxu0
      %v1162 = vpop.f32.mrb[0].mxu0
      %v1163 = vadd.f32 0.0, %v1162
      %v1164 = vpop.f32.mrb[0].mxu0
      %1165 = vmatprep.mubr.bf16.mxu0 0
      %1166 = vmatmul.mubr.bf16.gmra.mrb[0].mxu0 %v1038
      %v1167 = vpop.f32.mrb[0].mxu0
      %v1168 = vadd.f32 0.0, %v1167
      %v1169 = vpop.f32.mrb[0].mxu0
      %v1170 = vpop.f32.mrb[0].mxu0
      %v1171 = vadd.f32 0.0, %v1170
      %v1172 = vpop.f32.mrb[0].mxu0
      %1173 = vmatprep.mubr.bf16.mxu0 0
      %1174 = vmatmul.mubr.bf16.gmra.mrb[0].mxu0 %v1041
      %v1175 = vpop.f32.mrb[0].mxu0
      %v1176 = vadd.f32 0.0, %v1175
      %v1177 = vpop.f32.mrb[0].mxu0
      %v1178 = vpop.f32.mrb[0].mxu0
      %v1179 = vadd.f32 0.0, %v1178
      %v1180 = vpop.f32.mrb[0].mxu0
      %1181 = vmatprep.mubr.bf16.mxu0 0
      %1182 = vmatmul.mubr.bf16.gmra.mrb[0].mxu0 %v1044
      %v1183 = vpop.f32.mrb[0].mxu0
      %v1184 = vadd.f32 0.0, %v1183
      %v1185 = vpop.f32.mrb[0].mxu0
      %v1186 = vpop.f32.mrb[0].mxu0
      %v1187 = vadd.f32 0.0, %v1186
      %v1188 = vpop.f32.mrb[0].mxu0
      %1189 = vmatprep.mubr.bf16.mxu0 0
      %1190 = vmatmul.mubr.bf16.gmra.mrb[0].mxu0 %v1047
      %v1191 = vpop.f32.mrb[0].mxu0
      %v1192 = vadd.f32 0.0, %v1191
      %v1193 = vpop.f32.mrb[0].mxu0
      %v1194 = vpop.f32.mrb[0].mxu0
      %v1195 = vadd.f32 0.0, %v1194
      %v1196 = vpop.f32.mrb[0].mxu0
      %1197 = vmatprep.mubr.bf16.mxu0 0
      %1198 = vmatmul.mubr.bf16.gmra.mrb[0].mxu0 %v1050
      %v1199 = vpop.f32.mrb[0].mxu0
      %v1200 = vadd.f32 0.0, %v1199
      %v1201 = vpop.f32.mrb[0].mxu0
      %v1202 = vpop.f32.mrb[0].mxu0
      %v1203 = vadd.f32 0.0, %v1202
      %v1204 = vpop.f32.mrb[0].mxu0
      %1205 = vmatprep.mubr.bf16.mxu0 0
      %1206 = vmatmul.mubr.bf16.gmra.mrb[0].mxu0 %v1053
      %v1207 = vpop.f32.mrb[0].mxu0
      %v1208 = vadd.f32 0.0, %v1207
      %v1209 = vpop.f32.mrb[0].mxu0
      %v1210 = vpop.f32.mrb[0].mxu0
      %v1211 = vadd.f32 0.0, %v1210
      %v1212 = vpop.f32.mrb[0].mxu0
      %1213 = vmatprep.mubr.bf16.mxu0 0
      %1214 = vmatmul.mubr.bf16.gmra.mrb[0].mxu0 %v1056
      %v1215 = vpop.f32.mrb[0].mxu0
      %v1216 = vadd.f32 0.0, %v1215
      %v1217 = vpop.f32.mrb[0].mxu0
      %v1218 = vpop.f32.mrb[0].mxu0
      %v1219 = vadd.f32 0.0, %v1218
      %v1220 = vpop.f32.mrb[0].mxu0
      %1221 = vdwg.mxu0
      %v1222 = vadd.f32 %v922, %v1096
      %v1223 = vadd.f32 %v923, %v1099
      %v1224 = vadd.f32 %v924, %v1104
      %v1225 = vadd.f32 %v925, %v1107
      %v1226 = vadd.f32 %v926, %v1112
      %v1227 = vadd.f32 %v927, %v1115
      %v1228 = vadd.f32 %v928, %v1120
      %v1229 = vadd.f32 %v929, %v1123
      %v1230 = vadd.f32 %v930, %v1128
      %v1231 = vadd.f32 %v931, %v1131
      %v1232 = vadd.f32 %v932, %v1136
      %v1233 = vadd.f32 %v933, %v1139
      %v1234 = vadd.f32 %v934, %v1144
      %v1235 = vadd.f32 %v935, %v1147
      %v1236 = vadd.f32 %v936, %v1152
      %v1237 = vadd.f32 %v937, %v1155
      %v1238 = vadd.f32 %v938, %v1160
      %v1239 = vadd.f32 %v939, %v1163
      %v1240 = vadd.f32 %v940, %v1168
      %v1241 = vadd.f32 %v941, %v1171
      %v1242 = vadd.f32 %v942, %v1176
      %v1243 = vadd.f32 %v943, %v1179
      %v1244 = vadd.f32 %v944, %v1184
      %v1245 = vadd.f32 %v945, %v1187
      %v1246 = vadd.f32 %v946, %v1192
      %v1247 = vadd.f32 %v947, %v1195
      %v1248 = vadd.f32 %v948, %v1200
      %v1249 = vadd.f32 %v949, %v1203
      %v1250 = vadd.f32 %v950, %v1208
      %v1251 = vadd.f32 %v951, %v1211
      %v1252 = vadd.f32 %v952, %v1216
      %v1253 = vadd.f32 %v953, %v1219
      %s1254 = scalar_lea.vmem %s1, 8
      %v1255 = vld [vmem:[%s1254] sm:$0x3]
      %v1257 = vsel %vm205, %v1006, 0
      %v1260 = vsel %vm421, %v1255, 0
      %1262 = vmatprep.subr.bf16.mxu0 0
      %1263 = vmatpush1.bf16.msra.mxu0 %v1260
      %1264 = vmatprep.subr.bf16.mxu0 0
      %1265 = vmatpush1.bf16.msra.mxu0 0
      %1266 = vmatprep.subr.bf16.mxu0 0
      %1267 = vmatpush1.bf16.msra.mxu0 0
      %1268 = vmatprep.subr.bf16.mxu0 0
      %1269 = vmatpush1.bf16.msra.mxu0 0
      %1270 = vmatprep.subr.bf16.mxu0 0
      %1271 = vmatpush1.bf16.msra.mxu0 0
      %1272 = vmatprep.subr.bf16.mxu0 0
      %1273 = vmatpush1.bf16.msra.mxu0 0
      %1274 = vmatprep.subr.bf16.mxu0 0
      %1275 = vmatpush1.bf16.msra.mxu0 0
      %1276 = vmatprep.subr.bf16.mxu0 0
      %1277 = vmatpush1.bf16.msra.mxu0 0
      %1278 = vmatprep.subr.bf16.mxu0 0
      %1279 = vmatpush1.bf16.msra.mxu0 0
      %1280 = vmatprep.subr.bf16.mxu0 0
      %1281 = vmatpush1.bf16.msra.mxu0 0
      %1282 = vmatprep.subr.bf16.mxu0 0
      %1283 = vmatpush1.bf16.msra.mxu0 0
      %1284 = vmatprep.subr.bf16.mxu0 0
      %1285 = vmatpush1.bf16.msra.mxu0 0
      %1286 = vmatprep.subr.bf16.mxu0 0
      %1287 = vmatpush1.bf16.msra.mxu0 0
      %1288 = vmatprep.subr.bf16.mxu0 0
      %1289 = vmatpush1.bf16.msra.mxu0 0
      %1290 = vmatprep.subr.bf16.mxu0 0
      %1291 = vmatpush1.bf16.msra.mxu0 0
      %1292 = vmatprep.subr.bf16.mxu0 0
      %1293 = vmatpush1.bf16.msra.mxu0 0
      %1294 = vmatprep.mubr.bf16.mxu0 0
      %1295 = vmatmul.mubr.bf16.gmra.mrb[0].mxu0 %v1014
      %v1296 = vpop.f32.mrb[0].mxu0
      %v1297 = vadd.f32 0.0, %v1296
      %v1298 = vpop.f32.mrb[0].mxu0
      %v1299 = vpop.f32.mrb[0].mxu0
      %v1300 = vadd.f32 0.0, %v1299
      %v1301 = vpop.f32.mrb[0].mxu0
      %1302 = vmatprep.mubr.bf16.mxu0 0
      %1303 = vmatmul.mubr.bf16.gmra.mrb[0].mxu0 %v1017
      %v1304 = vpop.f32.mrb[0].mxu0
      %v1305 = vadd.f32 0.0, %v1304
      %v1306 = vpop.f32.mrb[0].mxu0
      %v1307 = vpop.f32.mrb[0].mxu0
      %v1308 = vadd.f32 0.0, %v1307
      %v1309 = vpop.f32.mrb[0].mxu0
      %1310 = vmatprep.mubr.bf16.mxu0 0
      %1311 = vmatmul.mubr.bf16.gmra.mrb[0].mxu0 %v1020
      %v1312 = vpop.f32.mrb[0].mxu0
      %v1313 = vadd.f32 0.0, %v1312
      %v1314 = vpop.f32.mrb[0].mxu0
      %v1315 = vpop.f32.mrb[0].mxu0
      %v1316 = vadd.f32 0.0, %v1315
      %v1317 = vpop.f32.mrb[0].mxu0
      %1318 = vmatprep.mubr.bf16.mxu0 0
      %1319 = vmatmul.mubr.bf16.gmra.mrb[0].mxu0 %v1023
      %v1320 = vpop.f32.mrb[0].mxu0
      %v1321 = vadd.f32 0.0, %v1320
      %v1322 = vpop.f32.mrb[0].mxu0
      %v1323 = vpop.f32.mrb[0].mxu0
      %v1324 = vadd.f32 0.0, %v1323
      %v1325 = vpop.f32.mrb[0].mxu0
      %1326 = vmatprep.mubr.bf16.mxu0 0
      %1327 = vmatmul.mubr.bf16.gmra.mrb[0].mxu0 %v1026
      %v1328 = vpop.f32.mrb[0].mxu0
      %v1329 = vadd.f32 0.0, %v1328
      %v1330 = vpop.f32.mrb[0].mxu0
      %v1331 = vpop.f32.mrb[0].mxu0
      %v1332 = vadd.f32 0.0, %v1331
      %v1333 = vpop.f32.mrb[0].mxu0
      %1334 = vmatprep.mubr.bf16.mxu0 0
      %1335 = vmatmul.mubr.bf16.gmra.mrb[0].mxu0 %v1029
      %v1336 = vpop.f32.mrb[0].mxu0
      %v1337 = vadd.f32 0.0, %v1336
      %v1338 = vpop.f32.mrb[0].mxu0
      %v1339 = vpop.f32.mrb[0].mxu0
      %v1340 = vadd.f32 0.0, %v1339
      %v1341 = vpop.f32.mrb[0].mxu0
      %1342 = vmatprep.mubr.bf16.mxu0 0
      %1343 = vmatmul.mubr.bf16.gmra.mrb[0].mxu0 %v1032
      %v1344 = vpop.f32.mrb[0].mxu0
      %v1345 = vadd.f32 0.0, %v1344
      %v1346 = vpop.f32.mrb[0].mxu0
      %v1347 = vpop.f32.mrb[0].mxu0
      %v1348 = vadd.f32 0.0, %v1347
      %v1349 = vpop.f32.mrb[0].mxu0
      %1350 = vmatprep.mubr.bf16.mxu0 0
      %1351 = vmatmul.mubr.bf16.gmra.mrb[0].mxu0 %v1035
      %v1352 = vpop.f32.mrb[0].mxu0
      %v1353 = vadd.f32 0.0, %v1352
      %v1354 = vpop.f32.mrb[0].mxu0
      %v1355 = vpop.f32.mrb[0].mxu0
      %v1356 = vadd.f32 0.0, %v1355
      %v1357 = vpop.f32.mrb[0].mxu0
      %1358 = vmatprep.mubr.bf16.mxu0 0
      %1359 = vmatmul.mubr.bf16.gmra.mrb[0].mxu0 %v1038
      %v1360 = vpop.f32.mrb[0].mxu0
      %v1361 = vadd.f32 0.0, %v1360
      %v1362 = vpop.f32.mrb[0].mxu0
      %v1363 = vpop.f32.mrb[0].mxu0
      %v1364 = vadd.f32 0.0, %v1363
      %v1365 = vpop.f32.mrb[0].mxu0
      %1366 = vmatprep.mubr.bf16.mxu0 0
      %1367 = vmatmul.mubr.bf16.gmra.mrb[0].mxu0 %v1041
      %v1368 = vpop.f32.mrb[0].mxu0
      %v1369 = vadd.f32 0.0, %v1368
      %v1370 = vpop.f32.mrb[0].mxu0
      %v1371 = vpop.f32.mrb[0].mxu0
      %v1372 = vadd.f32 0.0, %v1371
      %v1373 = vpop.f32.mrb[0].mxu0
      %1374 = vmatprep.mubr.bf16.mxu0 0
      %1375 = vmatmul.mubr.bf16.gmra.mrb[0].mxu0 %v1044
      %v1376 = vpop.f32.mrb[0].mxu0
      %v1377 = vadd.f32 0.0, %v1376
      %v1378 = vpop.f32.mrb[0].mxu0
      %v1379 = vpop.f32.mrb[0].mxu0
      %v1380 = vadd.f32 0.0, %v1379
      %v1381 = vpop.f32.mrb[0].mxu0
      %1382 = vmatprep.mubr.bf16.mxu0 0
      %1383 = vmatmul.mubr.bf16.gmra.mrb[0].mxu0 %v1047
      %v1384 = vpop.f32.mrb[0].mxu0
      %v1385 = vadd.f32 0.0, %v1384
      %v1386 = vpop.f32.mrb[0].mxu0
      %v1387 = vpop.f32.mrb[0].mxu0
      %v1388 = vadd.f32 0.0, %v1387
      %v1389 = vpop.f32.mrb[0].mxu0
      %1390 = vmatprep.mubr.bf16.mxu0 0
      %1391 = vmatmul.mubr.bf16.gmra.mrb[0].mxu0 %v1050
      %v1392 = vpop.f32.mrb[0].mxu0
      %v1393 = vadd.f32 0.0, %v1392
      %v1394 = vpop.f32.mrb[0].mxu0
      %v1395 = vpop.f32.mrb[0].mxu0
      %v1396 = vadd.f32 0.0, %v1395
      %v1397 = vpop.f32.mrb[0].mxu0
      %1398 = vmatprep.mubr.bf16.mxu0 0
      %1399 = vmatmul.mubr.bf16.gmra.mrb[0].mxu0 %v1053
      %v1400 = vpop.f32.mrb[0].mxu0
      %v1401 = vadd.f32 0.0, %v1400
      %v1402 = vpop.f32.mrb[0].mxu0
      %v1403 = vpop.f32.mrb[0].mxu0
      %v1404 = vadd.f32 0.0, %v1403
      %v1405 = vpop.f32.mrb[0].mxu0
      %1406 = vmatprep.mubr.bf16.mxu0 0
      %1407 = vmatmul.mubr.bf16.gmra.mrb[0].mxu0 %v1056
      %v1408 = vpop.f32.mrb[0].mxu0
      %v1409 = vadd.f32 0.0, %v1408
      %v1410 = vpop.f32.mrb[0].mxu0
      %v1411 = vpop.f32.mrb[0].mxu0
      %v1412 = vadd.f32 0.0, %v1411
      %v1413 = vpop.f32.mrb[0].mxu0
      %1414 = vmatprep.mubr.bf16.mxu0 0
      %1415 = vmatmul.mubr.bf16.gmra.mrb[0].mxu0 %v1257
      %v1416 = vpop.f32.mrb[0].mxu0
      %v1417 = vadd.f32 0.0, %v1416
      %v1418 = vpop.f32.mrb[0].mxu0
      %v1419 = vpop.f32.mrb[0].mxu0
      %v1420 = vadd.f32 0.0, %v1419
      %v1421 = vpop.f32.mrb[0].mxu0
      %1422 = vdwg.mxu0
      %v1423 = vadd.f32 %v1222, %v1297
      %v1424 = vadd.f32 %v1223, %v1300
      %v1425 = vadd.f32 %v1224, %v1305
      %v1426 = vadd.f32 %v1225, %v1308
      %v1427 = vadd.f32 %v1226, %v1313
      %v1428 = vadd.f32 %v1227, %v1316
      %v1429 = vadd.f32 %v1228, %v1321
      %v1430 = vadd.f32 %v1229, %v1324
      %v1431 = vadd.f32 %v1230, %v1329
      %v1432 = vadd.f32 %v1231, %v1332
      %v1433 = vadd.f32 %v1232, %v1337
      %v1434 = vadd.f32 %v1233, %v1340
      %v1435 = vadd.f32 %v1234, %v1345
      %v1436 = vadd.f32 %v1235, %v1348
      %v1437 = vadd.f32 %v1236, %v1353
      %v1438 = vadd.f32 %v1237, %v1356
      %v1439 = vadd.f32 %v1238, %v1361
      %v1440 = vadd.f32 %v1239, %v1364
      %v1441 = vadd.f32 %v1240, %v1369
      %v1442 = vadd.f32 %v1241, %v1372
      %v1443 = vadd.f32 %v1242, %v1377
      %v1444 = vadd.f32 %v1243, %v1380
      %v1445 = vadd.f32 %v1244, %v1385
      %v1446 = vadd.f32 %v1245, %v1388
      %v1447 = vadd.f32 %v1246, %v1393
      %v1448 = vadd.f32 %v1247, %v1396
      %v1449 = vadd.f32 %v1248, %v1401
      %v1450 = vadd.f32 %v1249, %v1404
      %v1451 = vadd.f32 %v1250, %v1409
      %v1452 = vadd.f32 %v1251, %v1412
      %v1453 = vadd.f32 %v1252, %v1417
      %v1454 = vadd.f32 %v1253, %v1420
      %s1455 = scalar_lea.vmem %s1, 14
      %v1456 = vld [vmem:[%s1455] sm:$0x3]
      %v1458 = vsel %vm205, %v1007, 0
      %v1461 = vsel %vm421, %v1456, 0
      %1463 = vmatprep.subr.bf16.mxu0 0
      %1464 = vmatpush1.bf16.msra.mxu0 %v1461
      %1465 = vmatprep.subr.bf16.mxu0 0
      %1466 = vmatpush1.bf16.msra.mxu0 0
      %1467 = vmatprep.subr.bf16.mxu0 0
      %1468 = vmatpush1.bf16.msra.mxu0 0
      %1469 = vmatprep.subr.bf16.mxu0 0
      %1470 = vmatpush1.bf16.msra.mxu0 0
      %1471 = vmatprep.subr.bf16.mxu0 0
      %1472 = vmatpush1.bf16.msra.mxu0 0
      %1473 = vmatprep.subr.bf16.mxu0 0
      %1474 = vmatpush1.bf16.msra.mxu0 0
      %1475 = vmatprep.subr.bf16.mxu0 0
      %1476 = vmatpush1.bf16.msra.mxu0 0
      %1477 = vmatprep.subr.bf16.mxu0 0
      %1478 = vmatpush1.bf16.msra.mxu0 0
      %1479 = vmatprep.subr.bf16.mxu0 0
      %1480 = vmatpush1.bf16.msra.mxu0 0
      %1481 = vmatprep.subr.bf16.mxu0 0
      %1482 = vmatpush1.bf16.msra.mxu0 0
      %1483 = vmatprep.subr.bf16.mxu0 0
      %1484 = vmatpush1.bf16.msra.mxu0 0
      %1485 = vmatprep.subr.bf16.mxu0 0
      %1486 = vmatpush1.bf16.msra.mxu0 0
      %1487 = vmatprep.subr.bf16.mxu0 0
      %1488 = vmatpush1.bf16.msra.mxu0 0
      %1489 = vmatprep.subr.bf16.mxu0 0
      %1490 = vmatpush1.bf16.msra.mxu0 0
      %1491 = vmatprep.subr.bf16.mxu0 0
      %1492 = vmatpush1.bf16.msra.mxu0 0
      %1493 = vmatprep.subr.bf16.mxu0 0
      %1494 = vmatpush1.bf16.msra.mxu0 0
      %1495 = vmatprep.mubr.bf16.mxu0 0
      %1496 = vmatmul.mubr.bf16.gmra.mrb[0].mxu0 %v1017
      %v1497 = vpop.f32.mrb[0].mxu0
      %v1498 = vadd.f32 0.0, %v1497
      %v1499 = vpop.f32.mrb[0].mxu0
      %v1500 = vpop.f32.mrb[0].mxu0
      %v1501 = vadd.f32 0.0, %v1500
      %v1502 = vpop.f32.mrb[0].mxu0
      %1503 = vmatprep.mubr.bf16.mxu0 0
      %1504 = vmatmul.mubr.bf16.gmra.mrb[0].mxu0 %v1020
      %v1505 = vpop.f32.mrb[0].mxu0
      %v1506 = vadd.f32 0.0, %v1505
      %v1507 = vpop.f32.mrb[0].mxu0
      %v1508 = vpop.f32.mrb[0].mxu0
      %v1509 = vadd.f32 0.0, %v1508
      %v1510 = vpop.f32.mrb[0].mxu0
      %1511 = vmatprep.mubr.bf16.mxu0 0
      %1512 = vmatmul.mubr.bf16.gmra.mrb[0].mxu0 %v1023
      %v1513 = vpop.f32.mrb[0].mxu0
      %v1514 = vadd.f32 0.0, %v1513
      %v1515 = vpop.f32.mrb[0].mxu0
      %v1516 = vpop.f32.mrb[0].mxu0
      %v1517 = vadd.f32 0.0, %v1516
      %v1518 = vpop.f32.mrb[0].mxu0
      %1519 = vmatprep.mubr.bf16.mxu0 0
      %1520 = vmatmul.mubr.bf16.gmra.mrb[0].mxu0 %v1026
      %v1521 = vpop.f32.mrb[0].mxu0
      %v1522 = vadd.f32 0.0, %v1521
      %v1523 = vpop.f32.mrb[0].mxu0
      %v1524 = vpop.f32.mrb[0].mxu0
      %v1525 = vadd.f32 0.0, %v1524
      %v1526 = vpop.f32.mrb[0].mxu0
      %1527 = vmatprep.mubr.bf16.mxu0 0
      %1528 = vmatmul.mubr.bf16.gmra.mrb[0].mxu0 %v1029
      %v1529 = vpop.f32.mrb[0].mxu0
      %v1530 = vadd.f32 0.0, %v1529
      %v1531 = vpop.f32.mrb[0].mxu0
      %v1532 = vpop.f32.mrb[0].mxu0
      %v1533 = vadd.f32 0.0, %v1532
      %v1534 = vpop.f32.mrb[0].mxu0
      %1535 = vmatprep.mubr.bf16.mxu0 0
      %1536 = vmatmul.mubr.bf16.gmra.mrb[0].mxu0 %v1032
      %v1537 = vpop.f32.mrb[0].mxu0
      %v1538 = vadd.f32 0.0, %v1537
      %v1539 = vpop.f32.mrb[0].mxu0
      %v1540 = vpop.f32.mrb[0].mxu0
      %v1541 = vadd.f32 0.0, %v1540
      %v1542 = vpop.f32.mrb[0].mxu0
      %1543 = vmatprep.mubr.bf16.mxu0 0
      %1544 = vmatmul.mubr.bf16.gmra.mrb[0].mxu0 %v1035
      %v1545 = vpop.f32.mrb[0].mxu0
      %v1546 = vadd.f32 0.0, %v1545
      %v1547 = vpop.f32.mrb[0].mxu0
      %v1548 = vpop.f32.mrb[0].mxu0
      %v1549 = vadd.f32 0.0, %v1548
      %v1550 = vpop.f32.mrb[0].mxu0
      %1551 = vmatprep.mubr.bf16.mxu0 0
      %1552 = vmatmul.mubr.bf16.gmra.mrb[0].mxu0 %v1038
      %v1553 = vpop.f32.mrb[0].mxu0
      %v1554 = vadd.f32 0.0, %v1553
      %v1555 = vpop.f32.mrb[0].mxu0
      %v1556 = vpop.f32.mrb[0].mxu0
      %v1557 = vadd.f32 0.0, %v1556
      %v1558 = vpop.f32.mrb[0].mxu0
      %1559 = vmatprep.mubr.bf16.mxu0 0
      %1560 = vmatmul.mubr.bf16.gmra.mrb[0].mxu0 %v1041
      %v1561 = vpop.f32.mrb[0].mxu0
      %v1562 = vadd.f32 0.0, %v1561
      %v1563 = vpop.f32.mrb[0].mxu0
      %v1564 = vpop.f32.mrb[0].mxu0
      %v1565 = vadd.f32 0.0, %v1564
      %v1566 = vpop.f32.mrb[0].mxu0
      %1567 = vmatprep.mubr.bf16.mxu0 0
      %1568 = vmatmul.mubr.bf16.gmra.mrb[0].mxu0 %v1044
      %v1569 = vpop.f32.mrb[0].mxu0
      %v1570 = vadd.f32 0.0, %v1569
      %v1571 = vpop.f32.mrb[0].mxu0
      %v1572 = vpop.f32.mrb[0].mxu0
      %v1573 = vadd.f32 0.0, %v1572
      %v1574 = vpop.f32.mrb[0].mxu0
      %1575 = vmatprep.mubr.bf16.mxu0 0
      %1576 = vmatmul.mubr.bf16.gmra.mrb[0].mxu0 %v1047
      %v1577 = vpop.f32.mrb[0].mxu0
      %v1578 = vadd.f32 0.0, %v1577
      %v1579 = vpop.f32.mrb[0].mxu0
      %v1580 = vpop.f32.mrb[0].mxu0
      %v1581 = vadd.f32 0.0, %v1580
      %v1582 = vpop.f32.mrb[0].mxu0
      %1583 = vmatprep.mubr.bf16.mxu0 0
      %1584 = vmatmul.mubr.bf16.gmra.mrb[0].mxu0 %v1050
      %v1585 = vpop.f32.mrb[0].mxu0
      %v1586 = vadd.f32 0.0, %v1585
      %v1587 = vpop.f32.mrb[0].mxu0
      %v1588 = vpop.f32.mrb[0].mxu0
      %v1589 = vadd.f32 0.0, %v1588
      %v1590 = vpop.f32.mrb[0].mxu0
      %1591 = vmatprep.mubr.bf16.mxu0 0
      %1592 = vmatmul.mubr.bf16.gmra.mrb[0].mxu0 %v1053
      %v1593 = vpop.f32.mrb[0].mxu0
      %v1594 = vadd.f32 0.0, %v1593
      %v1595 = vpop.f32.mrb[0].mxu0
      %v1596 = vpop.f32.mrb[0].mxu0
      %v1597 = vadd.f32 0.0, %v1596
      %v1598 = vpop.f32.mrb[0].mxu0
      %1599 = vmatprep.mubr.bf16.mxu0 0
      %1600 = vmatmul.mubr.bf16.gmra.mrb[0].mxu0 %v1056
      %v1601 = vpop.f32.mrb[0].mxu0
      %v1602 = vadd.f32 0.0, %v1601
      %v1603 = vpop.f32.mrb[0].mxu0
      %v1604 = vpop.f32.mrb[0].mxu0
      %v1605 = vadd.f32 0.0, %v1604
      %v1606 = vpop.f32.mrb[0].mxu0
      %1607 = vmatprep.mubr.bf16.mxu0 0
      %1608 = vmatmul.mubr.bf16.gmra.mrb[0].mxu0 %v1257
      %v1609 = vpop.f32.mrb[0].mxu0
      %v1610 = vadd.f32 0.0, %v1609
      %v1611 = vpop.f32.mrb[0].mxu0
      %v1612 = vpop.f32.mrb[0].mxu0
      %v1613 = vadd.f32 0.0, %v1612
      %v1614 = vpop.f32.mrb[0].mxu0
      %1615 = vmatprep.mubr.bf16.mxu0 0
      %1616 = vmatmul.mubr.bf16.gmra.mrb[0].mxu0 %v1458
      %v1617 = vpop.f32.mrb[0].mxu0
      %v1618 = vadd.f32 0.0, %v1617
      %v1619 = vpop.f32.mrb[0].mxu0
      %v1620 = vpop.f32.mrb[0].mxu0
      %v1621 = vadd.f32 0.0, %v1620
      %v1622 = vpop.f32.mrb[0].mxu0
      %1623 = vdwg.mxu0
      %v1624 = vadd.f32 %v1423, %v1498
      %v1625 = vadd.f32 %v1424, %v1501
      %v1626 = vadd.f32 %v1425, %v1506
      %v1627 = vadd.f32 %v1426, %v1509
      %v1628 = vadd.f32 %v1427, %v1514
      %v1629 = vadd.f32 %v1428, %v1517
      %v1630 = vadd.f32 %v1429, %v1522
      %v1631 = vadd.f32 %v1430, %v1525
      %v1632 = vadd.f32 %v1431, %v1530
      %v1633 = vadd.f32 %v1432, %v1533
      %v1634 = vadd.f32 %v1433, %v1538
      %v1635 = vadd.f32 %v1434, %v1541
      %v1636 = vadd.f32 %v1435, %v1546
      %v1637 = vadd.f32 %v1436, %v1549
      %v1638 = vadd.f32 %v1437, %v1554
      %v1639 = vadd.f32 %v1438, %v1557
      %v1640 = vadd.f32 %v1439, %v1562
      %v1641 = vadd.f32 %v1440, %v1565
      %v1642 = vadd.f32 %v1441, %v1570
      %v1643 = vadd.f32 %v1442, %v1573
      %v1644 = vadd.f32 %v1443, %v1578
      %v1645 = vadd.f32 %v1444, %v1581
      %v1646 = vadd.f32 %v1445, %v1586
      %v1647 = vadd.f32 %v1446, %v1589
      %v1648 = vadd.f32 %v1447, %v1594
      %v1649 = vadd.f32 %v1448, %v1597
      %v1650 = vadd.f32 %v1449, %v1602
      %v1651 = vadd.f32 %v1450, %v1605
      %v1652 = vadd.f32 %v1451, %v1610
      %v1653 = vadd.f32 %v1452, %v1613
      %v1654 = vadd.f32 %v1453, %v1618
      %v1655 = vadd.f32 %v1454, %v1621
      %v1656 = vld [vmem:[#allocation2 + $0x2] sm:$0xff]
      %v1657 = vld [vmem:[#allocation2 + $0xa] sm:$0xff]
      %v1658 = vld [vmem:[#allocation2 + $0x1a] sm:$0xff]
      %v1659 = vld [vmem:[#allocation2 + $0x22] sm:$0xff]
      %v1660 = vld [vmem:[#allocation2 + $0x32] sm:$0xff]
      %v1661 = vld [vmem:[#allocation2 + $0x3a] sm:$0xff]
      %v1662 = vld [vmem:[#allocation2 + $0x4a] sm:$0xff]
      %v1663 = vld [vmem:[#allocation2 + $0x52] sm:$0xff]
      %v1664 = vld [vmem:[#allocation2 + $0x62] sm:$0xff]
      %v1665 = vld [vmem:[#allocation2 + $0x6a] sm:$0xff]
      %v1666 = vld [vmem:[#allocation2 + $0x7a] sm:$0xff]
      %v1667 = vld [vmem:[#allocation2 + $0x82] sm:$0xff]
      %v1668 = vld [vmem:[#allocation2 + $0x92] sm:$0xff]
      %v1669 = vld [vmem:[#allocation2 + $0x9a] sm:$0xff]
      %v1670 = vld [vmem:[#allocation2 + $0xaa] sm:$0xff]
      %v1671 = vld [vmem:[#allocation2 + $0xb2] sm:$0xff]
      %v1672 = vld [vmem:[#allocation2 + $0xc2] sm:$0xff]
      %v1673 = vld [vmem:[#allocation2 + $0xca] sm:$0xff]
      %v1674 = vld [vmem:[#allocation2 + $0xda] sm:$0xff]
      %v1675 = vld [vmem:[#allocation2 + $0xe2] sm:$0xff]
      %v1676 = vld [vmem:[#allocation2 + $0xf2] sm:$0xff]
      %v1677 = vld [vmem:[#allocation2 + $0xfa] sm:$0xff]
      %v1678 = vld [vmem:[#allocation2 + $0x10a] sm:$0xff]
      %v1679 = vld [vmem:[#allocation2 + $0x112] sm:$0xff]
      %v1680 = vld [vmem:[#allocation2 + $0x122] sm:$0xff]
      %v1681 = vld [vmem:[#allocation2 + $0x12a] sm:$0xff]
      %v1682 = vld [vmem:[#allocation2 + $0x13a] sm:$0xff]
      %v1683 = vld [vmem:[#allocation2 + $0x142] sm:$0xff]
      %v1684 = vld [vmem:[#allocation2 + $0x152] sm:$0xff]
      %v1685 = vld [vmem:[#allocation2 + $0x15a] sm:$0xff]
      %v1686 = vld [vmem:[#allocation2 + $0x16a] sm:$0xff]
      %v1687 = vld [vmem:[#allocation2 + $0x172] sm:$0xff]
      %v1688 = vld [vmem:[#allocation2 + $0x182] sm:$0xff]
      %v1689 = vld [vmem:[#allocation2 + $0x18a] sm:$0xff]
      %v1690 = vld [vmem:[#allocation2 + $0x19a] sm:$0xff]
      %v1691 = vld [vmem:[#allocation2 + $0x1a2] sm:$0xff]
      %v1692 = vpack.c.bf16 %v1657, %v1656
      %v1693 = vpack.c.bf16 %v1659, %v1658
      %v1694 = vpack.c.bf16 %v1661, %v1660
      %v1695 = vpack.c.bf16 %v1663, %v1662
      %v1696 = vpack.c.bf16 %v1665, %v1664
      %v1697 = vpack.c.bf16 %v1667, %v1666
      %v1698 = vpack.c.bf16 %v1669, %v1668
      %v1699 = vpack.c.bf16 %v1671, %v1670
      %v1700 = vpack.c.bf16 %v1673, %v1672
      %v1701 = vpack.c.bf16 %v1675, %v1674
      %v1702 = vpack.c.bf16 %v1677, %v1676
      %v1703 = vpack.c.bf16 %v1679, %v1678
      %v1704 = vpack.c.bf16 %v1681, %v1680
      %v1705 = vpack.c.bf16 %v1683, %v1682
      %v1706 = vpack.c.bf16 %v1685, %v1684
      %v1707 = vpack.c.bf16 %v1687, %v1686
      %v1708 = vpack.c.bf16 %v1689, %v1688
      %v1709 = vpack.c.bf16 %v1691, %v1690
      %s1710 = scalar_lea.vmem %s1, 4
      %v1711 = vld [vmem:[%s1710] sm:$0x3]
      %v1713 = vsel %vm205, %v1692, 0
      %v1716 = vsel %vm205, %v1693, 0
      %v1719 = vsel %vm205, %v1694, 0
      %v1722 = vsel %vm205, %v1695, 0
      %v1725 = vsel %vm205, %v1696, 0
      %v1728 = vsel %vm205, %v1697, 0
      %v1731 = vsel %vm205, %v1698, 0
      %v1734 = vsel %vm205, %v1699, 0
      %v1737 = vsel %vm205, %v1700, 0
      %v1740 = vsel %vm205, %v1701, 0
      %v1743 = vsel %vm205, %v1702, 0
      %v1746 = vsel %vm205, %v1703, 0
      %v1749 = vsel %vm205, %v1704, 0
      %v1752 = vsel %vm205, %v1705, 0
      %v1755 = vsel %vm205, %v1706, 0
      %v1758 = vsel %vm205, %v1707, 0
      %v1761 = vsel %vm421, %v1711, 0
      %1763 = vmatprep.subr.bf16.mxu0 0
      %1764 = vmatpush1.bf16.msra.mxu0 %v1761
      %1765 = vmatprep.subr.bf16.mxu0 0
      %1766 = vmatpush1.bf16.msra.mxu0 0
      %1767 = vmatprep.subr.bf16.mxu0 0
      %1768 = vmatpush1.bf16.msra.mxu0 0
      %1769 = vmatprep.subr.bf16.mxu0 0
      %1770 = vmatpush1.bf16.msra.mxu0 0
      %1771 = vmatprep.subr.bf16.mxu0 0
      %1772 = vmatpush1.bf16.msra.mxu0 0
      %1773 = vmatprep.subr.bf16.mxu0 0
      %1774 = vmatpush1.bf16.msra.mxu0 0
      %1775 = vmatprep.subr.bf16.mxu0 0
      %1776 = vmatpush1.bf16.msra.mxu0 0
      %1777 = vmatprep.subr.bf16.mxu0 0
      %1778 = vmatpush1.bf16.msra.mxu0 0
      %1779 = vmatprep.subr.bf16.mxu0 0
      %1780 = vmatpush1.bf16.msra.mxu0 0
      %1781 = vmatprep.subr.bf16.mxu0 0
      %1782 = vmatpush1.bf16.msra.mxu0 0
      %1783 = vmatprep.subr.bf16.mxu0 0
      %1784 = vmatpush1.bf16.msra.mxu0 0
      %1785 = vmatprep.subr.bf16.mxu0 0
      %1786 = vmatpush1.bf16.msra.mxu0 0
      %1787 = vmatprep.subr.bf16.mxu0 0
      %1788 = vmatpush1.bf16.msra.mxu0 0
      %1789 = vmatprep.subr.bf16.mxu0 0
      %1790 = vmatpush1.bf16.msra.mxu0 0
      %1791 = vmatprep.subr.bf16.mxu0 0
      %1792 = vmatpush1.bf16.msra.mxu0 0
      %1793 = vmatprep.subr.bf16.mxu0 0
      %1794 = vmatpush1.bf16.msra.mxu0 0
      %1795 = vmatprep.mubr.bf16.mxu0 0
      %1796 = vmatmul.mubr.bf16.gmra.mrb[0].mxu0 %v1713
      %v1797 = vpop.f32.mrb[0].mxu0
      %v1798 = vadd.f32 0.0, %v1797
      %v1799 = vpop.f32.mrb[0].mxu0
      %v1800 = vpop.f32.mrb[0].mxu0
      %v1801 = vadd.f32 0.0, %v1800
      %v1802 = vpop.f32.mrb[0].mxu0
      %1803 = vmatprep.mubr.bf16.mxu0 0
      %1804 = vmatmul.mubr.bf16.gmra.mrb[0].mxu0 %v1716
      %v1805 = vpop.f32.mrb[0].mxu0
      %v1806 = vadd.f32 0.0, %v1805
      %v1807 = vpop.f32.mrb[0].mxu0
      %v1808 = vpop.f32.mrb[0].mxu0
      %v1809 = vadd.f32 0.0, %v1808
      %v1810 = vpop.f32.mrb[0].mxu0
      %1811 = vmatprep.mubr.bf16.mxu0 0
      %1812 = vmatmul.mubr.bf16.gmra.mrb[0].mxu0 %v1719
      %v1813 = vpop.f32.mrb[0].mxu0
      %v1814 = vadd.f32 0.0, %v1813
      %v1815 = vpop.f32.mrb[0].mxu0
      %v1816 = vpop.f32.mrb[0].mxu0
      %v1817 = vadd.f32 0.0, %v1816
      %v1818 = vpop.f32.mrb[0].mxu0
      %1819 = vmatprep.mubr.bf16.mxu0 0
      %1820 = vmatmul.mubr.bf16.gmra.mrb[0].mxu0 %v1722
      %v1821 = vpop.f32.mrb[0].mxu0
      %v1822 = vadd.f32 0.0, %v1821
      %v1823 = vpop.f32.mrb[0].mxu0
      %v1824 = vpop.f32.mrb[0].mxu0
      %v1825 = vadd.f32 0.0, %v1824
      %v1826 = vpop.f32.mrb[0].mxu0
      %1827 = vmatprep.mubr.bf16.mxu0 0
      %1828 = vmatmul.mubr.bf16.gmra.mrb[0].mxu0 %v1725
      %v1829 = vpop.f32.mrb[0].mxu0
      %v1830 = vadd.f32 0.0, %v1829
      %v1831 = vpop.f32.mrb[0].mxu0
      %v1832 = vpop.f32.mrb[0].mxu0
      %v1833 = vadd.f32 0.0, %v1832
      %v1834 = vpop.f32.mrb[0].mxu0
      %1835 = vmatprep.mubr.bf16.mxu0 0
      %1836 = vmatmul.mubr.bf16.gmra.mrb[0].mxu0 %v1728
      %v1837 = vpop.f32.mrb[0].mxu0
      %v1838 = vadd.f32 0.0, %v1837
      %v1839 = vpop.f32.mrb[0].mxu0
      %v1840 = vpop.f32.mrb[0].mxu0
      %v1841 = vadd.f32 0.0, %v1840
      %v1842 = vpop.f32.mrb[0].mxu0
      %1843 = vmatprep.mubr.bf16.mxu0 0
      %1844 = vmatmul.mubr.bf16.gmra.mrb[0].mxu0 %v1731
      %v1845 = vpop.f32.mrb[0].mxu0
      %v1846 = vadd.f32 0.0, %v1845
      %v1847 = vpop.f32.mrb[0].mxu0
      %v1848 = vpop.f32.mrb[0].mxu0
      %v1849 = vadd.f32 0.0, %v1848
      %v1850 = vpop.f32.mrb[0].mxu0
      %1851 = vmatprep.mubr.bf16.mxu0 0
      %1852 = vmatmul.mubr.bf16.gmra.mrb[0].mxu0 %v1734
      %v1853 = vpop.f32.mrb[0].mxu0
      %v1854 = vadd.f32 0.0, %v1853
      %v1855 = vpop.f32.mrb[0].mxu0
      %v1856 = vpop.f32.mrb[0].mxu0
      %v1857 = vadd.f32 0.0, %v1856
      %v1858 = vpop.f32.mrb[0].mxu0
      %1859 = vmatprep.mubr.bf16.mxu0 0
      %1860 = vmatmul.mubr.bf16.gmra.mrb[0].mxu0 %v1737
      %v1861 = vpop.f32.mrb[0].mxu0
      %v1862 = vadd.f32 0.0, %v1861
      %v1863 = vpop.f32.mrb[0].mxu0
      %v1864 = vpop.f32.mrb[0].mxu0
      %v1865 = vadd.f32 0.0, %v1864
      %v1866 = vpop.f32.mrb[0].mxu0
      %1867 = vmatprep.mubr.bf16.mxu0 0
      %1868 = vmatmul.mubr.bf16.gmra.mrb[0].mxu0 %v1740
      %v1869 = vpop.f32.mrb[0].mxu0
      %v1870 = vadd.f32 0.0, %v1869
      %v1871 = vpop.f32.mrb[0].mxu0
      %v1872 = vpop.f32.mrb[0].mxu0
      %v1873 = vadd.f32 0.0, %v1872
      %v1874 = vpop.f32.mrb[0].mxu0
      %1875 = vmatprep.mubr.bf16.mxu0 0
      %1876 = vmatmul.mubr.bf16.gmra.mrb[0].mxu0 %v1743
      %v1877 = vpop.f32.mrb[0].mxu0
      %v1878 = vadd.f32 0.0, %v1877
      %v1879 = vpop.f32.mrb[0].mxu0
      %v1880 = vpop.f32.mrb[0].mxu0
      %v1881 = vadd.f32 0.0, %v1880
      %v1882 = vpop.f32.mrb[0].mxu0
      %1883 = vmatprep.mubr.bf16.mxu0 0
      %1884 = vmatmul.mubr.bf16.gmra.mrb[0].mxu0 %v1746
      %v1885 = vpop.f32.mrb[0].mxu0
      %v1886 = vadd.f32 0.0, %v1885
      %v1887 = vpop.f32.mrb[0].mxu0
      %v1888 = vpop.f32.mrb[0].mxu0
      %v1889 = vadd.f32 0.0, %v1888
      %v1890 = vpop.f32.mrb[0].mxu0
      %1891 = vmatprep.mubr.bf16.mxu0 0
      %1892 = vmatmul.mubr.bf16.gmra.mrb[0].mxu0 %v1749
      %v1893 = vpop.f32.mrb[0].mxu0
      %v1894 = vadd.f32 0.0, %v1893
      %v1895 = vpop.f32.mrb[0].mxu0
      %v1896 = vpop.f32.mrb[0].mxu0
      %v1897 = vadd.f32 0.0, %v1896
      %v1898 = vpop.f32.mrb[0].mxu0
      %1899 = vmatprep.mubr.bf16.mxu0 0
      %1900 = vmatmul.mubr.bf16.gmra.mrb[0].mxu0 %v1752
      %v1901 = vpop.f32.mrb[0].mxu0
      %v1902 = vadd.f32 0.0, %v1901
      %v1903 = vpop.f32.mrb[0].mxu0
      %v1904 = vpop.f32.mrb[0].mxu0
      %v1905 = vadd.f32 0.0, %v1904
      %v1906 = vpop.f32.mrb[0].mxu0
      %1907 = vmatprep.mubr.bf16.mxu0 0
      %1908 = vmatmul.mubr.bf16.gmra.mrb[0].mxu0 %v1755
      %v1909 = vpop.f32.mrb[0].mxu0
      %v1910 = vadd.f32 0.0, %v1909
      %v1911 = vpop.f32.mrb[0].mxu0
      %v1912 = vpop.f32.mrb[0].mxu0
      %v1913 = vadd.f32 0.0, %v1912
      %v1914 = vpop.f32.mrb[0].mxu0
      %1915 = vmatprep.mubr.bf16.mxu0 0
      %1916 = vmatmul.mubr.bf16.gmra.mrb[0].mxu0 %v1758
      %v1917 = vpop.f32.mrb[0].mxu0
      %v1918 = vadd.f32 0.0, %v1917
      %v1919 = vpop.f32.mrb[0].mxu0
      %v1920 = vpop.f32.mrb[0].mxu0
      %v1921 = vadd.f32 0.0, %v1920
      %v1922 = vpop.f32.mrb[0].mxu0
      %1923 = vdwg.mxu0
      %v1924 = vadd.f32 %v1624, %v1798
      %v1925 = vadd.f32 %v1625, %v1801
      %v1926 = vadd.f32 %v1626, %v1806
      %v1927 = vadd.f32 %v1627, %v1809
      %v1928 = vadd.f32 %v1628, %v1814
      %v1929 = vadd.f32 %v1629, %v1817
      %v1930 = vadd.f32 %v1630, %v1822
      %v1931 = vadd.f32 %v1631, %v1825
      %v1932 = vadd.f32 %v1632, %v1830
      %v1933 = vadd.f32 %v1633, %v1833
      %v1934 = vadd.f32 %v1634, %v1838
      %v1935 = vadd.f32 %v1635, %v1841
      %v1936 = vadd.f32 %v1636, %v1846
      %v1937 = vadd.f32 %v1637, %v1849
      %v1938 = vadd.f32 %v1638, %v1854
      %v1939 = vadd.f32 %v1639, %v1857
      %v1940 = vadd.f32 %v1640, %v1862
      %v1941 = vadd.f32 %v1641, %v1865
      %v1942 = vadd.f32 %v1642, %v1870
      %v1943 = vadd.f32 %v1643, %v1873
      %v1944 = vadd.f32 %v1644, %v1878
      %v1945 = vadd.f32 %v1645, %v1881
      %v1946 = vadd.f32 %v1646, %v1886
      %v1947 = vadd.f32 %v1647, %v1889
      %v1948 = vadd.f32 %v1648, %v1894
      %v1949 = vadd.f32 %v1649, %v1897
      %v1950 = vadd.f32 %v1650, %v1902
      %v1951 = vadd.f32 %v1651, %v1905
      %v1952 = vadd.f32 %v1652, %v1910
      %v1953 = vadd.f32 %v1653, %v1913
      %v1954 = vadd.f32 %v1654, %v1918
      %v1955 = vadd.f32 %v1655, %v1921
      %s1956 = scalar_lea.vmem %s1, 10
      %v1957 = vld [vmem:[%s1956] sm:$0x3]
      %v1959 = vsel %vm205, %v1708, 0
      %v1962 = vsel %vm421, %v1957, 0
      %1964 = vmatprep.subr.bf16.mxu0 0
      %1965 = vmatpush1.bf16.msra.mxu0 %v1962
      %1966 = vmatprep.subr.bf16.mxu0 0
      %1967 = vmatpush1.bf16.msra.mxu0 0
      %1968 = vmatprep.subr.bf16.mxu0 0
      %1969 = vmatpush1.bf16.msra.mxu0 0
      %1970 = vmatprep.subr.bf16.mxu0 0
      %1971 = vmatpush1.bf16.msra.mxu0 0
      %1972 = vmatprep.subr.bf16.mxu0 0
      %1973 = vmatpush1.bf16.msra.mxu0 0
      %1974 = vmatprep.subr.bf16.mxu0 0
      %1975 = vmatpush1.bf16.msra.mxu0 0
      %1976 = vmatprep.subr.bf16.mxu0 0
      %1977 = vmatpush1.bf16.msra.mxu0 0
      %1978 = vmatprep.subr.bf16.mxu0 0
      %1979 = vmatpush1.bf16.msra.mxu0 0
      %1980 = vmatprep.subr.bf16.mxu0 0
      %1981 = vmatpush1.bf16.msra.mxu0 0
      %1982 = vmatprep.subr.bf16.mxu0 0
      %1983 = vmatpush1.bf16.msra.mxu0 0
      %1984 = vmatprep.subr.bf16.mxu0 0
      %1985 = vmatpush1.bf16.msra.mxu0 0
      %1986 = vmatprep.subr.bf16.mxu0 0
      %1987 = vmatpush1.bf16.msra.mxu0 0
      %1988 = vmatprep.subr.bf16.mxu0 0
      %1989 = vmatpush1.bf16.msra.mxu0 0
      %1990 = vmatprep.subr.bf16.mxu0 0
      %1991 = vmatpush1.bf16.msra.mxu0 0
      %1992 = vmatprep.subr.bf16.mxu0 0
      %1993 = vmatpush1.bf16.msra.mxu0 0
      %1994 = vmatprep.subr.bf16.mxu0 0
      %1995 = vmatpush1.bf16.msra.mxu0 0
      %1996 = vmatprep.mubr.bf16.mxu0 0
      %1997 = vmatmul.mubr.bf16.gmra.mrb[0].mxu0 %v1716
      %v1998 = vpop.f32.mrb[0].mxu0
      %v1999 = vadd.f32 0.0, %v1998
      %v2000 = vpop.f32.mrb[0].mxu0
      %v2001 = vpop.f32.mrb[0].mxu0
      %v2002 = vadd.f32 0.0, %v2001
      %v2003 = vpop.f32.mrb[0].mxu0
      %2004 = vmatprep.mubr.bf16.mxu0 0
      %2005 = vmatmul.mubr.bf16.gmra.mrb[0].mxu0 %v1719
      %v2006 = vpop.f32.mrb[0].mxu0
      %v2007 = vadd.f32 0.0, %v2006
      %v2008 = vpop.f32.mrb[0].mxu0
      %v2009 = vpop.f32.mrb[0].mxu0
      %v2010 = vadd.f32 0.0, %v2009
      %v2011 = vpop.f32.mrb[0].mxu0
      %2012 = vmatprep.mubr.bf16.mxu0 0
      %2013 = vmatmul.mubr.bf16.gmra.mrb[0].mxu0 %v1722
      %v2014 = vpop.f32.mrb[0].mxu0
      %v2015 = vadd.f32 0.0, %v2014
      %v2016 = vpop.f32.mrb[0].mxu0
      %v2017 = vpop.f32.mrb[0].mxu0
      %v2018 = vadd.f32 0.0, %v2017
      %v2019 = vpop.f32.mrb[0].mxu0
      %2020 = vmatprep.mubr.bf16.mxu0 0
      %2021 = vmatmul.mubr.bf16.gmra.mrb[0].mxu0 %v1725
      %v2022 = vpop.f32.mrb[0].mxu0
      %v2023 = vadd.f32 0.0, %v2022
      %v2024 = vpop.f32.mrb[0].mxu0
      %v2025 = vpop.f32.mrb[0].mxu0
      %v2026 = vadd.f32 0.0, %v2025
      %v2027 = vpop.f32.mrb[0].mxu0
      %2028 = vmatprep.mubr.bf16.mxu0 0
      %2029 = vmatmul.mubr.bf16.gmra.mrb[0].mxu0 %v1728
      %v2030 = vpop.f32.mrb[0].mxu0
      %v2031 = vadd.f32 0.0, %v2030
      %v2032 = vpop.f32.mrb[0].mxu0
      %v2033 = vpop.f32.mrb[0].mxu0
      %v2034 = vadd.f32 0.0, %v2033
      %v2035 = vpop.f32.mrb[0].mxu0
      %2036 = vmatprep.mubr.bf16.mxu0 0
      %2037 = vmatmul.mubr.bf16.gmra.mrb[0].mxu0 %v1731
      %v2038 = vpop.f32.mrb[0].mxu0
      %v2039 = vadd.f32 0.0, %v2038
      %v2040 = vpop.f32.mrb[0].mxu0
      %v2041 = vpop.f32.mrb[0].mxu0
      %v2042 = vadd.f32 0.0, %v2041
      %v2043 = vpop.f32.mrb[0].mxu0
      %2044 = vmatprep.mubr.bf16.mxu0 0
      %2045 = vmatmul.mubr.bf16.gmra.mrb[0].mxu0 %v1734
      %v2046 = vpop.f32.mrb[0].mxu0
      %v2047 = vadd.f32 0.0, %v2046
      %v2048 = vpop.f32.mrb[0].mxu0
      %v2049 = vpop.f32.mrb[0].mxu0
      %v2050 = vadd.f32 0.0, %v2049
      %v2051 = vpop.f32.mrb[0].mxu0
      %2052 = vmatprep.mubr.bf16.mxu0 0
      %2053 = vmatmul.mubr.bf16.gmra.mrb[0].mxu0 %v1737
      %v2054 = vpop.f32.mrb[0].mxu0
      %v2055 = vadd.f32 0.0, %v2054
      %v2056 = vpop.f32.mrb[0].mxu0
      %v2057 = vpop.f32.mrb[0].mxu0
      %v2058 = vadd.f32 0.0, %v2057
      %v2059 = vpop.f32.mrb[0].mxu0
      %2060 = vmatprep.mubr.bf16.mxu0 0
      %2061 = vmatmul.mubr.bf16.gmra.mrb[0].mxu0 %v1740
      %v2062 = vpop.f32.mrb[0].mxu0
      %v2063 = vadd.f32 0.0, %v2062
      %v2064 = vpop.f32.mrb[0].mxu0
      %v2065 = vpop.f32.mrb[0].mxu0
      %v2066 = vadd.f32 0.0, %v2065
      %v2067 = vpop.f32.mrb[0].mxu0
      %2068 = vmatprep.mubr.bf16.mxu0 0
      %2069 = vmatmul.mubr.bf16.gmra.mrb[0].mxu0 %v1743
      %v2070 = vpop.f32.mrb[0].mxu0
      %v2071 = vadd.f32 0.0, %v2070
      %v2072 = vpop.f32.mrb[0].mxu0
      %v2073 = vpop.f32.mrb[0].mxu0
      %v2074 = vadd.f32 0.0, %v2073
      %v2075 = vpop.f32.mrb[0].mxu0
      %2076 = vmatprep.mubr.bf16.mxu0 0
      %2077 = vmatmul.mubr.bf16.gmra.mrb[0].mxu0 %v1746
      %v2078 = vpop.f32.mrb[0].mxu0
      %v2079 = vadd.f32 0.0, %v2078
      %v2080 = vpop.f32.mrb[0].mxu0
      %v2081 = vpop.f32.mrb[0].mxu0
      %v2082 = vadd.f32 0.0, %v2081
      %v2083 = vpop.f32.mrb[0].mxu0
      %2084 = vmatprep.mubr.bf16.mxu0 0
      %2085 = vmatmul.mubr.bf16.gmra.mrb[0].mxu0 %v1749
      %v2086 = vpop.f32.mrb[0].mxu0
      %v2087 = vadd.f32 0.0, %v2086
      %v2088 = vpop.f32.mrb[0].mxu0
      %v2089 = vpop.f32.mrb[0].mxu0
      %v2090 = vadd.f32 0.0, %v2089
      %v2091 = vpop.f32.mrb[0].mxu0
      %2092 = vmatprep.mubr.bf16.mxu0 0
      %2093 = vmatmul.mubr.bf16.gmra.mrb[0].mxu0 %v1752
      %v2094 = vpop.f32.mrb[0].mxu0
      %v2095 = vadd.f32 0.0, %v2094
      %v2096 = vpop.f32.mrb[0].mxu0
      %v2097 = vpop.f32.mrb[0].mxu0
      %v2098 = vadd.f32 0.0, %v2097
      %v2099 = vpop.f32.mrb[0].mxu0
      %2100 = vmatprep.mubr.bf16.mxu0 0
      %2101 = vmatmul.mubr.bf16.gmra.mrb[0].mxu0 %v1755
      %v2102 = vpop.f32.mrb[0].mxu0
      %v2103 = vadd.f32 0.0, %v2102
      %v2104 = vpop.f32.mrb[0].mxu0
      %v2105 = vpop.f32.mrb[0].mxu0
      %v2106 = vadd.f32 0.0, %v2105
      %v2107 = vpop.f32.mrb[0].mxu0
      %2108 = vmatprep.mubr.bf16.mxu0 0
      %2109 = vmatmul.mubr.bf16.gmra.mrb[0].mxu0 %v1758
      %v2110 = vpop.f32.mrb[0].mxu0
      %v2111 = vadd.f32 0.0, %v2110
      %v2112 = vpop.f32.mrb[0].mxu0
      %v2113 = vpop.f32.mrb[0].mxu0
      %v2114 = vadd.f32 0.0, %v2113
      %v2115 = vpop.f32.mrb[0].mxu0
      %2116 = vmatprep.mubr.bf16.mxu0 0
      %2117 = vmatmul.mubr.bf16.gmra.mrb[0].mxu0 %v1959
      %v2118 = vpop.f32.mrb[0].mxu0
      %v2119 = vadd.f32 0.0, %v2118
      %v2120 = vpop.f32.mrb[0].mxu0
      %v2121 = vpop.f32.mrb[0].mxu0
      %v2122 = vadd.f32 0.0, %v2121
      %v2123 = vpop.f32.mrb[0].mxu0
      %2124 = vdwg.mxu0
      %v2125 = vadd.f32 %v1924, %v1999
      %v2126 = vadd.f32 %v1925, %v2002
      %v2127 = vadd.f32 %v1926, %v2007
      %v2128 = vadd.f32 %v1927, %v2010
      %v2129 = vadd.f32 %v1928, %v2015
      %v2130 = vadd.f32 %v1929, %v2018
      %v2131 = vadd.f32 %v1930, %v2023
      %v2132 = vadd.f32 %v1931, %v2026
      %v2133 = vadd.f32 %v1932, %v2031
      %v2134 = vadd.f32 %v1933, %v2034
      %v2135 = vadd.f32 %v1934, %v2039
      %v2136 = vadd.f32 %v1935, %v2042
      %v2137 = vadd.f32 %v1936, %v2047
      %v2138 = vadd.f32 %v1937, %v2050
      %v2139 = vadd.f32 %v1938, %v2055
      %v2140 = vadd.f32 %v1939, %v2058
      %v2141 = vadd.f32 %v1940, %v2063
      %v2142 = vadd.f32 %v1941, %v2066
      %v2143 = vadd.f32 %v1942, %v2071
      %v2144 = vadd.f32 %v1943, %v2074
      %v2145 = vadd.f32 %v1944, %v2079
      %v2146 = vadd.f32 %v1945, %v2082
      %v2147 = vadd.f32 %v1946, %v2087
      %v2148 = vadd.f32 %v1947, %v2090
      %v2149 = vadd.f32 %v1948, %v2095
      %v2150 = vadd.f32 %v1949, %v2098
      %v2151 = vadd.f32 %v1950, %v2103
      %v2152 = vadd.f32 %v1951, %v2106
      %v2153 = vadd.f32 %v1952, %v2111
      %v2154 = vadd.f32 %v1953, %v2114
      %v2155 = vadd.f32 %v1954, %v2119
      %v2156 = vadd.f32 %v1955, %v2122
      %s2157 = scalar_lea.vmem %s1, 16
      %v2158 = vld [vmem:[%s2157] sm:$0x3]
      %v2160 = vsel %vm205, %v1709, 0
      %v2163 = vsel %vm421, %v2158, 0
      %2165 = vmatprep.subr.bf16.mxu0 0
      %2166 = vmatpush1.bf16.msra.mxu0 %v2163
      %2167 = vmatprep.subr.bf16.mxu0 0
      %2168 = vmatpush1.bf16.msra.mxu0 0
      %2169 = vmatprep.subr.bf16.mxu0 0
      %2170 = vmatpush1.bf16.msra.mxu0 0
      %2171 = vmatprep.subr.bf16.mxu0 0
      %2172 = vmatpush1.bf16.msra.mxu0 0
      %2173 = vmatprep.subr.bf16.mxu0 0
      %2174 = vmatpush1.bf16.msra.mxu0 0
      %2175 = vmatprep.subr.bf16.mxu0 0
      %2176 = vmatpush1.bf16.msra.mxu0 0
      %2177 = vmatprep.subr.bf16.mxu0 0
      %2178 = vmatpush1.bf16.msra.mxu0 0
      %2179 = vmatprep.subr.bf16.mxu0 0
      %2180 = vmatpush1.bf16.msra.mxu0 0
      %2181 = vmatprep.subr.bf16.mxu0 0
      %2182 = vmatpush1.bf16.msra.mxu0 0
      %2183 = vmatprep.subr.bf16.mxu0 0
      %2184 = vmatpush1.bf16.msra.mxu0 0
      %2185 = vmatprep.subr.bf16.mxu0 0
      %2186 = vmatpush1.bf16.msra.mxu0 0
      %2187 = vmatprep.subr.bf16.mxu0 0
      %2188 = vmatpush1.bf16.msra.mxu0 0
      %2189 = vmatprep.subr.bf16.mxu0 0
      %2190 = vmatpush1.bf16.msra.mxu0 0
      %2191 = vmatprep.subr.bf16.mxu0 0
      %2192 = vmatpush1.bf16.msra.mxu0 0
      %2193 = vmatprep.subr.bf16.mxu0 0
      %2194 = vmatpush1.bf16.msra.mxu0 0
      %2195 = vmatprep.subr.bf16.mxu0 0
      %2196 = vmatpush1.bf16.msra.mxu0 0
      %2197 = vmatprep.mubr.bf16.mxu0 0
      %2198 = vmatmul.mubr.bf16.gmra.mrb[0].mxu0 %v1719
      %v2199 = vpop.f32.mrb[0].mxu0
      %v2200 = vadd.f32 0.0, %v2199
      %v2201 = vpop.f32.mrb[0].mxu0
      %v2202 = vpop.f32.mrb[0].mxu0
      %v2203 = vadd.f32 0.0, %v2202
      %v2204 = vpop.f32.mrb[0].mxu0
      %2205 = vmatprep.mubr.bf16.mxu0 0
      %2206 = vmatmul.mubr.bf16.gmra.mrb[0].mxu0 %v1722
      %v2207 = vpop.f32.mrb[0].mxu0
      %v2208 = vadd.f32 0.0, %v2207
      %v2209 = vpop.f32.mrb[0].mxu0
      %v2210 = vpop.f32.mrb[0].mxu0
      %v2211 = vadd.f32 0.0, %v2210
      %v2212 = vpop.f32.mrb[0].mxu0
      %2213 = vmatprep.mubr.bf16.mxu0 0
      %2214 = vmatmul.mubr.bf16.gmra.mrb[0].mxu0 %v1725
      %v2215 = vpop.f32.mrb[0].mxu0
      %v2216 = vadd.f32 0.0, %v2215
      %v2217 = vpop.f32.mrb[0].mxu0
      %v2218 = vpop.f32.mrb[0].mxu0
      %v2219 = vadd.f32 0.0, %v2218
      %v2220 = vpop.f32.mrb[0].mxu0
      %2221 = vmatprep.mubr.bf16.mxu0 0
      %2222 = vmatmul.mubr.bf16.gmra.mrb[0].mxu0 %v1728
      %v2223 = vpop.f32.mrb[0].mxu0
      %v2224 = vadd.f32 0.0, %v2223
      %v2225 = vpop.f32.mrb[0].mxu0
      %v2226 = vpop.f32.mrb[0].mxu0
      %v2227 = vadd.f32 0.0, %v2226
      %v2228 = vpop.f32.mrb[0].mxu0
      %2229 = vmatprep.mubr.bf16.mxu0 0
      %2230 = vmatmul.mubr.bf16.gmra.mrb[0].mxu0 %v1731
      %v2231 = vpop.f32.mrb[0].mxu0
      %v2232 = vadd.f32 0.0, %v2231
      %v2233 = vpop.f32.mrb[0].mxu0
      %v2234 = vpop.f32.mrb[0].mxu0
      %v2235 = vadd.f32 0.0, %v2234
      %v2236 = vpop.f32.mrb[0].mxu0
      %2237 = vmatprep.mubr.bf16.mxu0 0
      %2238 = vmatmul.mubr.bf16.gmra.mrb[0].mxu0 %v1734
      %v2239 = vpop.f32.mrb[0].mxu0
      %v2240 = vadd.f32 0.0, %v2239
      %v2241 = vpop.f32.mrb[0].mxu0
      %v2242 = vpop.f32.mrb[0].mxu0
      %v2243 = vadd.f32 0.0, %v2242
      %v2244 = vpop.f32.mrb[0].mxu0
      %2245 = vmatprep.mubr.bf16.mxu0 0
      %2246 = vmatmul.mubr.bf16.gmra.mrb[0].mxu0 %v1737
      %v2247 = vpop.f32.mrb[0].mxu0
      %v2248 = vadd.f32 0.0, %v2247
      %v2249 = vpop.f32.mrb[0].mxu0
      %v2250 = vpop.f32.mrb[0].mxu0
      %v2251 = vadd.f32 0.0, %v2250
      %v2252 = vpop.f32.mrb[0].mxu0
      %2253 = vmatprep.mubr.bf16.mxu0 0
      %2254 = vmatmul.mubr.bf16.gmra.mrb[0].mxu0 %v1740
      %v2255 = vpop.f32.mrb[0].mxu0
      %v2256 = vadd.f32 0.0, %v2255
      %v2257 = vpop.f32.mrb[0].mxu0
      %v2258 = vpop.f32.mrb[0].mxu0
      %v2259 = vadd.f32 0.0, %v2258
      %v2260 = vpop.f32.mrb[0].mxu0
      %2261 = vmatprep.mubr.bf16.mxu0 0
      %2262 = vmatmul.mubr.bf16.gmra.mrb[0].mxu0 %v1743
      %v2263 = vpop.f32.mrb[0].mxu0
      %v2264 = vadd.f32 0.0, %v2263
      %v2265 = vpop.f32.mrb[0].mxu0
      %v2266 = vpop.f32.mrb[0].mxu0
      %v2267 = vadd.f32 0.0, %v2266
      %v2268 = vpop.f32.mrb[0].mxu0
      %2269 = vmatprep.mubr.bf16.mxu0 0
      %2270 = vmatmul.mubr.bf16.gmra.mrb[0].mxu0 %v1746
      %v2271 = vpop.f32.mrb[0].mxu0
      %v2272 = vadd.f32 0.0, %v2271
      %v2273 = vpop.f32.mrb[0].mxu0
      %v2274 = vpop.f32.mrb[0].mxu0
      %v2275 = vadd.f32 0.0, %v2274
      %v2276 = vpop.f32.mrb[0].mxu0
      %2277 = vmatprep.mubr.bf16.mxu0 0
      %2278 = vmatmul.mubr.bf16.gmra.mrb[0].mxu0 %v1749
      %v2279 = vpop.f32.mrb[0].mxu0
      %v2280 = vadd.f32 0.0, %v2279
      %v2281 = vpop.f32.mrb[0].mxu0
      %v2282 = vpop.f32.mrb[0].mxu0
      %v2283 = vadd.f32 0.0, %v2282
      %v2284 = vpop.f32.mrb[0].mxu0
      %2285 = vmatprep.mubr.bf16.mxu0 0
      %2286 = vmatmul.mubr.bf16.gmra.mrb[0].mxu0 %v1752
      %v2287 = vpop.f32.mrb[0].mxu0
      %v2288 = vadd.f32 0.0, %v2287
      %v2289 = vpop.f32.mrb[0].mxu0
      %v2290 = vpop.f32.mrb[0].mxu0
      %v2291 = vadd.f32 0.0, %v2290
      %v2292 = vpop.f32.mrb[0].mxu0
      %2293 = vmatprep.mubr.bf16.mxu0 0
      %2294 = vmatmul.mubr.bf16.gmra.mrb[0].mxu0 %v1755
      %v2295 = vpop.f32.mrb[0].mxu0
      %v2296 = vadd.f32 0.0, %v2295
      %v2297 = vpop.f32.mrb[0].mxu0
      %v2298 = vpop.f32.mrb[0].mxu0
      %v2299 = vadd.f32 0.0, %v2298
      %v2300 = vpop.f32.mrb[0].mxu0
      %2301 = vmatprep.mubr.bf16.mxu0 0
      %2302 = vmatmul.mubr.bf16.gmra.mrb[0].mxu0 %v1758
      %v2303 = vpop.f32.mrb[0].mxu0
      %v2304 = vadd.f32 0.0, %v2303
      %v2305 = vpop.f32.mrb[0].mxu0
      %v2306 = vpop.f32.mrb[0].mxu0
      %v2307 = vadd.f32 0.0, %v2306
      %v2308 = vpop.f32.mrb[0].mxu0
      %2309 = vmatprep.mubr.bf16.mxu0 0
      %2310 = vmatmul.mubr.bf16.gmra.mrb[0].mxu0 %v1959
      %v2311 = vpop.f32.mrb[0].mxu0
      %v2312 = vadd.f32 0.0, %v2311
      %v2313 = vpop.f32.mrb[0].mxu0
      %v2314 = vpop.f32.mrb[0].mxu0
      %v2315 = vadd.f32 0.0, %v2314
      %v2316 = vpop.f32.mrb[0].mxu0
      %2317 = vmatprep.mubr.bf16.mxu0 0
      %2318 = vmatmul.mubr.bf16.gmra.mrb[0].mxu0 %v2160
      %v2319 = vpop.f32.mrb[0].mxu0
      %v2320 = vadd.f32 0.0, %v2319
      %v2321 = vpop.f32.mrb[0].mxu0
      %v2322 = vpop.f32.mrb[0].mxu0
      %v2323 = vadd.f32 0.0, %v2322
      %v2324 = vpop.f32.mrb[0].mxu0
      %2325 = vdwg.mxu0
      %v2326 = vadd.f32 %v2125, %v2200
      %v2327 = vadd.f32 %v2126, %v2203
      %v2328 = vadd.f32 %v2127, %v2208
      %v2329 = vadd.f32 %v2128, %v2211
      %v2330 = vadd.f32 %v2129, %v2216
      %v2331 = vadd.f32 %v2130, %v2219
      %v2332 = vadd.f32 %v2131, %v2224
      %v2333 = vadd.f32 %v2132, %v2227
      %v2334 = vadd.f32 %v2133, %v2232
      %v2335 = vadd.f32 %v2134, %v2235
      %v2336 = vadd.f32 %v2135, %v2240
      %v2337 = vadd.f32 %v2136, %v2243
      %v2338 = vadd.f32 %v2137, %v2248
      %v2339 = vadd.f32 %v2138, %v2251
      %v2340 = vadd.f32 %v2139, %v2256
      %v2341 = vadd.f32 %v2140, %v2259
      %v2342 = vadd.f32 %v2141, %v2264
      %v2343 = vadd.f32 %v2142, %v2267
      %v2344 = vadd.f32 %v2143, %v2272
      %v2345 = vadd.f32 %v2144, %v2275
      %v2346 = vadd.f32 %v2145, %v2280
      %v2347 = vadd.f32 %v2146, %v2283
      %v2348 = vadd.f32 %v2147, %v2288
      %v2349 = vadd.f32 %v2148, %v2291
      %v2350 = vadd.f32 %v2149, %v2296
      %v2351 = vadd.f32 %v2150, %v2299
      %v2352 = vadd.f32 %v2151, %v2304
      %v2353 = vadd.f32 %v2152, %v2307
      %v2354 = vadd.f32 %v2153, %v2312
      %v2355 = vadd.f32 %v2154, %v2315
      %v2356 = vadd.f32 %v2155, %v2320
      %v2357 = vadd.f32 %v2156, %v2323
      %v2358 = vsel %vm205, %v2326, 0.0
      %v2359 = vsel %vm205, %v2327, 0.0
      %v2360 = vadd.f32 %v2358, %v2359
      %v2361 = vsel %vm205, %v2328, 0.0
      %v2362 = vadd.f32 %v2360, %v2361
      %v2363 = vsel %vm205, %v2329, 0.0
      %v2364 = vadd.f32 %v2362, %v2363
      %v2365 = vsel %vm205, %v2330, 0.0
      %v2366 = vadd.f32 %v2364, %v2365
      %v2367 = vsel %vm205, %v2331, 0.0
      %v2368 = vadd.f32 %v2366, %v2367
      %v2369 = vsel %vm205, %v2332, 0.0
      %v2370 = vadd.f32 %v2368, %v2369
      %v2371 = vsel %vm205, %v2333, 0.0
      %v2372 = vadd.f32 %v2370, %v2371
      %v2373 = vsel %vm205, %v2334, 0.0
      %v2374 = vadd.f32 %v2372, %v2373
      %v2375 = vsel %vm205, %v2335, 0.0
      %v2376 = vadd.f32 %v2374, %v2375
      %v2377 = vsel %vm205, %v2336, 0.0
      %v2378 = vadd.f32 %v2376, %v2377
      %v2379 = vsel %vm205, %v2337, 0.0
      %v2380 = vadd.f32 %v2378, %v2379
      %v2381 = vsel %vm205, %v2338, 0.0
      %v2382 = vadd.f32 %v2380, %v2381
      %v2383 = vsel %vm205, %v2339, 0.0
      %v2384 = vadd.f32 %v2382, %v2383
      %v2385 = vsel %vm205, %v2340, 0.0
      %v2386 = vadd.f32 %v2384, %v2385
      %v2387 = vsel %vm205, %v2341, 0.0
      %v2388 = vadd.f32 %v2386, %v2387
      %v2389 = vsel %vm205, %v2342, 0.0
      %v2390 = vadd.f32 %v2388, %v2389
      %v2391 = vsel %vm205, %v2343, 0.0
      %v2392 = vadd.f32 %v2390, %v2391
      %v2393 = vsel %vm205, %v2344, 0.0
      %v2394 = vadd.f32 %v2392, %v2393
      %v2395 = vsel %vm205, %v2345, 0.0
      %v2396 = vadd.f32 %v2394, %v2395
      %v2397 = vsel %vm205, %v2346, 0.0
      %v2398 = vadd.f32 %v2396, %v2397
      %v2399 = vsel %vm205, %v2347, 0.0
      %v2400 = vadd.f32 %v2398, %v2399
      %v2401 = vsel %vm205, %v2348, 0.0
      %v2402 = vadd.f32 %v2400, %v2401
      %v2403 = vsel %vm205, %v2349, 0.0
      %v2404 = vadd.f32 %v2402, %v2403
      %v2405 = vsel %vm205, %v2350, 0.0
      %v2406 = vadd.f32 %v2404, %v2405
      %v2407 = vsel %vm205, %v2351, 0.0
      %v2408 = vadd.f32 %v2406, %v2407
      %v2409 = vsel %vm205, %v2352, 0.0
      %v2410 = vadd.f32 %v2408, %v2409
      %v2411 = vsel %vm205, %v2353, 0.0
      %v2412 = vadd.f32 %v2410, %v2411
      %v2413 = vsel %vm205, %v2354, 0.0
      %v2414 = vadd.f32 %v2412, %v2413
      %v2415 = vsel %vm205, %v2355, 0.0
      %v2416 = vadd.f32 %v2414, %v2415
      %v2417 = vsel %vm205, %v2356, 0.0
      %v2418 = vadd.f32 %v2416, %v2417
      %v2419 = vsel %vm205, %v2357, 0.0
      %v2420 = vadd.f32 %v2418, %v2419
      %v2421 = vrot.slane %v2420, 4
      %v2422 = vadd.f32 %v2420, %v2421
      %v2423 = vrot.slane %v2422, 2
      %v2424 = vadd.f32 %v2422, %v2423
      %v2425 = vrot.slane %v2424, 1
      %v2426 = vadd.f32 %v2424, %v2425
      %v2427 = vrcp.pop 256.0
      %v2428 = vmul.f32 %v2426, %v2427
      %v2429 = vsub.f32 %v2326, %v2428
      %v2430 = vsub.f32 %v2327, %v2428
      %v2431 = vsub.f32 %v2328, %v2428
      %v2432 = vsub.f32 %v2329, %v2428
      %v2433 = vsub.f32 %v2330, %v2428
      %v2434 = vsub.f32 %v2331, %v2428
      %v2435 = vsub.f32 %v2332, %v2428
      %v2436 = vsub.f32 %v2333, %v2428
      %v2437 = vsub.f32 %v2334, %v2428
      %v2438 = vsub.f32 %v2335, %v2428
      %v2439 = vsub.f32 %v2336, %v2428
      %v2440 = vsub.f32 %v2337, %v2428
      %v2441 = vsub.f32 %v2338, %v2428
      %v2442 = vsub.f32 %v2339, %v2428
      %v2443 = vsub.f32 %v2340, %v2428
      %v2444 = vsub.f32 %v2341, %v2428
      %v2445 = vsub.f32 %v2342, %v2428
      %v2446 = vsub.f32 %v2343, %v2428
      %v2447 = vsub.f32 %v2344, %v2428
      %v2448 = vsub.f32 %v2345, %v2428
      %v2449 = vsub.f32 %v2346, %v2428
      %v2450 = vsub.f32 %v2347, %v2428
      %v2451 = vsub.f32 %v2348, %v2428
      %v2452 = vsub.f32 %v2349, %v2428
      %v2453 = vsub.f32 %v2350, %v2428
      %v2454 = vsub.f32 %v2351, %v2428
      %v2455 = vsub.f32 %v2352, %v2428
      %v2456 = vsub.f32 %v2353, %v2428
      %v2457 = vsub.f32 %v2354, %v2428
      %v2458 = vsub.f32 %v2355, %v2428
      %v2459 = vsub.f32 %v2356, %v2428
      %v2460 = vsub.f32 %v2357, %v2428
      %v2461 = vmul.f32 %v2429, %v2429
      %v2462 = vmul.f32 %v2430, %v2430
      %v2463 = vmul.f32 %v2431, %v2431
      %v2464 = vmul.f32 %v2432, %v2432
      %v2465 = vmul.f32 %v2433, %v2433
      %v2466 = vmul.f32 %v2434, %v2434
      %v2467 = vmul.f32 %v2435, %v2435
      %v2468 = vmul.f32 %v2436, %v2436
      %v2469 = vmul.f32 %v2437, %v2437
      %v2470 = vmul.f32 %v2438, %v2438
      %v2471 = vmul.f32 %v2439, %v2439
      %v2472 = vmul.f32 %v2440, %v2440
      %v2473 = vmul.f32 %v2441, %v2441
      %v2474 = vmul.f32 %v2442, %v2442
      %v2475 = vmul.f32 %v2443, %v2443
      %v2476 = vmul.f32 %v2444, %v2444
      %v2477 = vmul.f32 %v2445, %v2445
      %v2478 = vmul.f32 %v2446, %v2446
      %v2479 = vmul.f32 %v2447, %v2447
      %v2480 = vmul.f32 %v2448, %v2448
      %v2481 = vmul.f32 %v2449, %v2449
      %v2482 = vmul.f32 %v2450, %v2450
      %v2483 = vmul.f32 %v2451, %v2451
      %v2484 = vmul.f32 %v2452, %v2452
      %v2485 = vmul.f32 %v2453, %v2453
      %v2486 = vmul.f32 %v2454, %v2454
      %v2487 = vmul.f32 %v2455, %v2455
      %v2488 = vmul.f32 %v2456, %v2456
      %v2489 = vmul.f32 %v2457, %v2457
      %v2490 = vmul.f32 %v2458, %v2458
      %v2491 = vmul.f32 %v2459, %v2459
      %v2492 = vmul.f32 %v2460, %v2460
      %v2493 = vsel %vm205, %v2461, 0.0
      %v2494 = vsel %vm205, %v2462, 0.0
      %v2495 = vadd.f32 %v2493, %v2494
      %v2496 = vsel %vm205, %v2463, 0.0
      %v2497 = vadd.f32 %v2495, %v2496
      %v2498 = vsel %vm205, %v2464, 0.0
      %v2499 = vadd.f32 %v2497, %v2498
      %v2500 = vsel %vm205, %v2465, 0.0
      %v2501 = vadd.f32 %v2499, %v2500
      %v2502 = vsel %vm205, %v2466, 0.0
      %v2503 = vadd.f32 %v2501, %v2502
      %v2504 = vsel %vm205, %v2467, 0.0
      %v2505 = vadd.f32 %v2503, %v2504
      %v2506 = vsel %vm205, %v2468, 0.0
      %v2507 = vadd.f32 %v2505, %v2506
      %v2508 = vsel %vm205, %v2469, 0.0
      %v2509 = vadd.f32 %v2507, %v2508
      %v2510 = vsel %vm205, %v2470, 0.0
      %v2511 = vadd.f32 %v2509, %v2510
      %v2512 = vsel %vm205, %v2471, 0.0
      %v2513 = vadd.f32 %v2511, %v2512
      %v2514 = vsel %vm205, %v2472, 0.0
      %v2515 = vadd.f32 %v2513, %v2514
      %v2516 = vsel %vm205, %v2473, 0.0
      %v2517 = vadd.f32 %v2515, %v2516
      %v2518 = vsel %vm205, %v2474, 0.0
      %v2519 = vadd.f32 %v2517, %v2518
      %v2520 = vsel %vm205, %v2475, 0.0
      %v2521 = vadd.f32 %v2519, %v2520
      %v2522 = vsel %vm205, %v2476, 0.0
      %v2523 = vadd.f32 %v2521, %v2522
      %v2524 = vsel %vm205, %v2477, 0.0
      %v2525 = vadd.f32 %v2523, %v2524
      %v2526 = vsel %vm205, %v2478, 0.0
      %v2527 = vadd.f32 %v2525, %v2526
      %v2528 = vsel %vm205, %v2479, 0.0
      %v2529 = vadd.f32 %v2527, %v2528
      %v2530 = vsel %vm205, %v2480, 0.0
      %v2531 = vadd.f32 %v2529, %v2530
      %v2532 = vsel %vm205, %v2481, 0.0
      %v2533 = vadd.f32 %v2531, %v2532
      %v2534 = vsel %vm205, %v2482, 0.0
      %v2535 = vadd.f32 %v2533, %v2534
      %v2536 = vsel %vm205, %v2483, 0.0
      %v2537 = vadd.f32 %v2535, %v2536
      %v2538 = vsel %vm205, %v2484, 0.0
      %v2539 = vadd.f32 %v2537, %v2538
      %v2540 = vsel %vm205, %v2485, 0.0
      %v2541 = vadd.f32 %v2539, %v2540
      %v2542 = vsel %vm205, %v2486, 0.0
      %v2543 = vadd.f32 %v2541, %v2542
      %v2544 = vsel %vm205, %v2487, 0.0
      %v2545 = vadd.f32 %v2543, %v2544
      %v2546 = vsel %vm205, %v2488, 0.0
      %v2547 = vadd.f32 %v2545, %v2546
      %v2548 = vsel %vm205, %v2489, 0.0
      %v2549 = vadd.f32 %v2547, %v2548
      %v2550 = vsel %vm205, %v2490, 0.0
      %v2551 = vadd.f32 %v2549, %v2550
      %v2552 = vsel %vm205, %v2491, 0.0
      %v2553 = vadd.f32 %v2551, %v2552
      %v2554 = vsel %vm205, %v2492, 0.0
      %v2555 = vadd.f32 %v2553, %v2554
      %v2556 = vrot.slane %v2555, 4
      %v2557 = vadd.f32 %v2555, %v2556
      %v2558 = vrot.slane %v2557, 2
      %v2559 = vadd.f32 %v2557, %v2558
      %v2560 = vrot.slane %v2559, 1
      %v2561 = vadd.f32 %v2559, %v2560
      %v2562 = vmul.f32 %v2561, %v2427
      %v2563 = vadd.f32 %v2562, 1e-05
      %v2564 = vrsqrt.pop %v2563
      %v2565 = vmul.f32 %v2429, %v2564
      %v2566 = vmul.f32 %v2430, %v2564
      %v2567 = vmul.f32 %v2431, %v2564
      %v2568 = vmul.f32 %v2432, %v2564
      %v2569 = vmul.f32 %v2433, %v2564
      %v2570 = vmul.f32 %v2434, %v2564
      %v2571 = vmul.f32 %v2435, %v2564
      %v2572 = vmul.f32 %v2436, %v2564
      %v2573 = vmul.f32 %v2437, %v2564
      %v2574 = vmul.f32 %v2438, %v2564
      %v2575 = vmul.f32 %v2439, %v2564
      %v2576 = vmul.f32 %v2440, %v2564
      %v2577 = vmul.f32 %v2441, %v2564
      %v2578 = vmul.f32 %v2442, %v2564
      %v2579 = vmul.f32 %v2443, %v2564
      %v2580 = vmul.f32 %v2444, %v2564
      %v2581 = vmul.f32 %v2445, %v2564
      %v2582 = vmul.f32 %v2446, %v2564
      %v2583 = vmul.f32 %v2447, %v2564
      %v2584 = vmul.f32 %v2448, %v2564
      %v2585 = vmul.f32 %v2449, %v2564
      %v2586 = vmul.f32 %v2450, %v2564
      %v2587 = vmul.f32 %v2451, %v2564
      %v2588 = vmul.f32 %v2452, %v2564
      %v2589 = vmul.f32 %v2453, %v2564
      %v2590 = vmul.f32 %v2454, %v2564
      %v2591 = vmul.f32 %v2455, %v2564
      %v2592 = vmul.f32 %v2456, %v2564
      %v2593 = vmul.f32 %v2457, %v2564
      %v2594 = vmul.f32 %v2458, %v2564
      %v2595 = vmul.f32 %v2459, %v2564
      %v2596 = vmul.f32 %v2460, %v2564
      %v2597 = vmax.f32 %v2565, 0.0
      %v2598 = vmax.f32 %v2566, 0.0
      %v2599 = vmax.f32 %v2567, 0.0
      %v2600 = vmax.f32 %v2568, 0.0
      %v2601 = vmax.f32 %v2569, 0.0
      %v2602 = vmax.f32 %v2570, 0.0
      %v2603 = vmax.f32 %v2571, 0.0
      %v2604 = vmax.f32 %v2572, 0.0
      %v2605 = vmax.f32 %v2573, 0.0
      %v2606 = vmax.f32 %v2574, 0.0
      %v2607 = vmax.f32 %v2575, 0.0
      %v2608 = vmax.f32 %v2576, 0.0
      %v2609 = vmax.f32 %v2577, 0.0
      %v2610 = vmax.f32 %v2578, 0.0
      %v2611 = vmax.f32 %v2579, 0.0
      %v2612 = vmax.f32 %v2580, 0.0
      %v2613 = vmax.f32 %v2581, 0.0
      %v2614 = vmax.f32 %v2582, 0.0
      %v2615 = vmax.f32 %v2583, 0.0
      %v2616 = vmax.f32 %v2584, 0.0
      %v2617 = vmax.f32 %v2585, 0.0
      %v2618 = vmax.f32 %v2586, 0.0
      %v2619 = vmax.f32 %v2587, 0.0
      %v2620 = vmax.f32 %v2588, 0.0
      %v2621 = vmax.f32 %v2589, 0.0
      %v2622 = vmax.f32 %v2590, 0.0
      %v2623 = vmax.f32 %v2591, 0.0
      %v2624 = vmax.f32 %v2592, 0.0
      %v2625 = vmax.f32 %v2593, 0.0
      %v2626 = vmax.f32 %v2594, 0.0
      %v2627 = vmax.f32 %v2595, 0.0
      %v2628 = vmax.f32 %v2596, 0.0
      %2629 = vst.msk [vmem:[%s204 + $0x1] sm:$0xff] %vm205, %v2597
      %2630 = vst.msk [vmem:[%s204 + $0x9] sm:$0xff] %vm205, %v2598
      %2631 = vst.msk [vmem:[%s204 + $0x19] sm:$0xff] %vm205, %v2599
      %2632 = vst.msk [vmem:[%s204 + $0x21] sm:$0xff] %vm205, %v2600
      %2633 = vst.msk [vmem:[%s204 + $0x31] sm:$0xff] %vm205, %v2601
      %2634 = vst.msk [vmem:[%s204 + $0x39] sm:$0xff] %vm205, %v2602
      %2635 = vst.msk [vmem:[%s204 + $0x49] sm:$0xff] %vm205, %v2603
      %2636 = vst.msk [vmem:[%s204 + $0x51] sm:$0xff] %vm205, %v2604
      %2637 = vst.msk [vmem:[%s204 + $0x61] sm:$0xff] %vm205, %v2605
      %2638 = vst.msk [vmem:[%s204 + $0x69] sm:$0xff] %vm205, %v2606
      %2639 = vst.msk [vmem:[%s204 + $0x79] sm:$0xff] %vm205, %v2607
      %2640 = vst.msk [vmem:[%s204 + $0x81] sm:$0xff] %vm205, %v2608
      %2641 = vst.msk [vmem:[%s204 + $0x91] sm:$0xff] %vm205, %v2609
      %2642 = vst.msk [vmem:[%s204 + $0x99] sm:$0xff] %vm205, %v2610
      %2643 = vst.msk [vmem:[%s204 + $0xa9] sm:$0xff] %vm205, %v2611
      %2644 = vst.msk [vmem:[%s204 + $0xb1] sm:$0xff] %vm205, %v2612
      %2645 = vst.msk [vmem:[%s204 + $0xc1] sm:$0xff] %vm205, %v2613
      %2646 = vst.msk [vmem:[%s204 + $0xc9] sm:$0xff] %vm205, %v2614
      %2647 = vst.msk [vmem:[%s204 + $0xd9] sm:$0xff] %vm205, %v2615
      %2648 = vst.msk [vmem:[%s204 + $0xe1] sm:$0xff] %vm205, %v2616
      %2649 = vst.msk [vmem:[%s204 + $0xf1] sm:$0xff] %vm205, %v2617
      %2650 = vst.msk [vmem:[%s204 + $0xf9] sm:$0xff] %vm205, %v2618
      %2651 = vst.msk [vmem:[%s204 + $0x109] sm:$0xff] %vm205, %v2619
      %2652 = vst.msk [vmem:[%s204 + $0x111] sm:$0xff] %vm205, %v2620
      %2653 = vst.msk [vmem:[%s204 + $0x121] sm:$0xff] %vm205, %v2621
      %2654 = vst.msk [vmem:[%s204 + $0x129] sm:$0xff] %vm205, %v2622
      %2655 = vst.msk [vmem:[%s204 + $0x139] sm:$0xff] %vm205, %v2623
      %2656 = vst.msk [vmem:[%s204 + $0x141] sm:$0xff] %vm205, %v2624
      %2657 = vst.msk [vmem:[%s204 + $0x151] sm:$0xff] %vm205, %v2625
      %2658 = vst.msk [vmem:[%s204 + $0x159] sm:$0xff] %vm205, %v2626
      %2659 = vst.msk [vmem:[%s204 + $0x169] sm:$0xff] %vm205, %v2627
      %2660 = vst.msk [vmem:[%s204 + $0x171] sm:$0xff] %vm205, %v2628
      %2661 = vst.msk [vmem:[#allocation2 + $0x1] sm:$0xff] %vm205, %v2599
      %2662 = vst.msk [vmem:[#allocation2 + $0x9] sm:$0xff] %vm205, %v2600
      %2663 = vst.msk [vmem:[%s240 + $0x1] sm:$0xff] %vm205, %v2625
      %2664 = vst.msk [vmem:[%s240 + $0x9] sm:$0xff] %vm205, %v2626
      %v2665 = vld [vmem:[#allocation2 + $0x2] sm:$0x1]
      %v2666 = vld [vmem:[#allocation2 + $0x1a] sm:$0x1]
      %v2667 = vld [vmem:[#allocation2 + $0x32] sm:$0x1]
      %v2668 = vld [vmem:[#allocation2 + $0x4a] sm:$0x1]
      %v2669 = vld [vmem:[#allocation2 + $0x62] sm:$0x1]
      %v2670 = vld [vmem:[#allocation2 + $0x7a] sm:$0x1]
      %v2671 = vld [vmem:[#allocation2 + $0x92] sm:$0x1]
      %v2672 = vld [vmem:[#allocation2 + $0xaa] sm:$0x1]
      %v2673 = vld [vmem:[#allocation2 + $0xc2] sm:$0x1]
      %v2674 = vld [vmem:[#allocation2 + $0xda] sm:$0x1]
      %v2675 = vld [vmem:[#allocation2 + $0xf2] sm:$0x1]
      %v2676 = vld [vmem:[#allocation2 + $0x10a] sm:$0x1]
      %v2677 = vld [vmem:[#allocation2 + $0x122] sm:$0x1]
      %v2678 = vld [vmem:[#allocation2 + $0x13a] sm:$0x1]
      %v2679 = vld [vmem:[#allocation2 + $0x152] sm:$0x1]
      %v2680 = vld [vmem:[#allocation2 + $0x16a] sm:$0x1]
      %v2681 = vld [vmem:[#allocation2 + $0x182] sm:$0x1]
      %v2682 = vld [vmem:[#allocation2 + $0x19a] sm:$0x1]
      %2683 = vst.msk [vmem:[#allocation2] sm:$0x1] %vm261, %v2665
      %2684 = vst.msk [vmem:[#allocation2 + $0x18] sm:$0x1] %vm261, %v2666
      %2685 = vst.msk [vmem:[#allocation2 + $0x30] sm:$0x1] %vm261, %v2667
      %2686 = vst.msk [vmem:[#allocation2 + $0x48] sm:$0x1] %vm261, %v2668
      %2687 = vst.msk [vmem:[#allocation2 + $0x60] sm:$0x1] %vm261, %v2669
      %2688 = vst.msk [vmem:[#allocation2 + $0x78] sm:$0x1] %vm261, %v2670
      %2689 = vst.msk [vmem:[#allocation2 + $0x90] sm:$0x1] %vm261, %v2671
      %2690 = vst.msk [vmem:[#allocation2 + $0xa8] sm:$0x1] %vm261, %v2672
      %2691 = vst.msk [vmem:[#allocation2 + $0xc0] sm:$0x1] %vm261, %v2673
      %2692 = vst.msk [vmem:[#allocation2 + $0xd8] sm:$0x1] %vm261, %v2674
      %2693 = vst.msk [vmem:[#allocation2 + $0xf0] sm:$0x1] %vm261, %v2675
      %2694 = vst.msk [vmem:[#allocation2 + $0x108] sm:$0x1] %vm261, %v2676
      %2695 = vst.msk [vmem:[#allocation2 + $0x120] sm:$0x1] %vm261, %v2677
      %2696 = vst.msk [vmem:[#allocation2 + $0x138] sm:$0x1] %vm261, %v2678
      %2697 = vst.msk [vmem:[#allocation2 + $0x150] sm:$0x1] %vm261, %v2679
      %2698 = vst.msk [vmem:[#allocation2 + $0x168] sm:$0x1] %vm261, %v2680
      %2699 = vst.msk [vmem:[#allocation2 + $0x180] sm:$0x1] %vm261, %v2681
      %2700 = vst.msk [vmem:[#allocation2 + $0x198] sm:$0x1] %vm261, %v2682
      %v2701 = vld [vmem:[#allocation2 + $0xf] sm:$0x1]
      %v2702 = vld [vmem:[#allocation2 + $0x27] sm:$0x1]
      %v2703 = vld [vmem:[#allocation2 + $0x3f] sm:$0x1]
      %v2704 = vld [vmem:[#allocation2 + $0x57] sm:$0x1]
      %v2705 = vld [vmem:[#allocation2 + $0x6f] sm:$0x1]
      %v2706 = vld [vmem:[#allocation2 + $0x87] sm:$0x1]
      %v2707 = vld [vmem:[#allocation2 + $0x9f] sm:$0x1]
      %v2708 = vld [vmem:[#allocation2 + $0xb7] sm:$0x1]
      %v2709 = vld [vmem:[#allocation2 + $0xcf] sm:$0x1]
      %v2710 = vld [vmem:[#allocation2 + $0xe7] sm:$0x1]
      %v2711 = vld [vmem:[#allocation2 + $0xff] sm:$0x1]
      %v2712 = vld [vmem:[#allocation2 + $0x117] sm:$0x1]
      %v2713 = vld [vmem:[#allocation2 + $0x12f] sm:$0x1]
      %v2714 = vld [vmem:[#allocation2 + $0x147] sm:$0x1]
      %v2715 = vld [vmem:[#allocation2 + $0x15f] sm:$0x1]
      %v2716 = vld [vmem:[#allocation2 + $0x177] sm:$0x1]
      %v2717 = vld [vmem:[#allocation2 + $0x18f] sm:$0x1]
      %v2718 = vld [vmem:[#allocation2 + $0x1a7] sm:$0x1]
      %2719 = vst.msk [vmem:[#allocation2 + $0x11] sm:$0x1] %vm261, %v2701
      %2720 = vst.msk [vmem:[#allocation2 + $0x29] sm:$0x1] %vm261, %v2702
      %2721 = vst.msk [vmem:[#allocation2 + $0x41] sm:$0x1] %vm261, %v2703
      %2722 = vst.msk [vmem:[#allocation2 + $0x59] sm:$0x1] %vm261, %v2704
      %2723 = vst.msk [vmem:[#allocation2 + $0x71] sm:$0x1] %vm261, %v2705
      %2724 = vst.msk [vmem:[#allocation2 + $0x89] sm:$0x1] %vm261, %v2706
      %2725 = vst.msk [vmem:[#allocation2 + $0xa1] sm:$0x1] %vm261, %v2707
      %2726 = vst.msk [vmem:[#allocation2 + $0xb9] sm:$0x1] %vm261, %v2708
      %2727 = vst.msk [vmem:[#allocation2 + $0xd1] sm:$0x1] %vm261, %v2709
      %2728 = vst.msk [vmem:[#allocation2 + $0xe9] sm:$0x1] %vm261, %v2710
      %2729 = vst.msk [vmem:[#allocation2 + $0x101] sm:$0x1] %vm261, %v2711
      %2730 = vst.msk [vmem:[#allocation2 + $0x119] sm:$0x1] %vm261, %v2712
      %2731 = vst.msk [vmem:[#allocation2 + $0x131] sm:$0x1] %vm261, %v2713
      %2732 = vst.msk [vmem:[#allocation2 + $0x149] sm:$0x1] %vm261, %v2714
      %2733 = vst.msk [vmem:[#allocation2 + $0x161] sm:$0x1] %vm261, %v2715
      %2734 = vst.msk [vmem:[#allocation2 + $0x179] sm:$0x1] %vm261, %v2716
      %2735 = vst.msk [vmem:[#allocation2 + $0x191] sm:$0x1] %vm261, %v2717
      %2736 = vst.msk [vmem:[#allocation2 + $0x1a9] sm:$0x1] %vm261, %v2718
      %v2737 = vld [vmem:[#allocation2] sm:$0xff]
      %v2738 = vld [vmem:[#allocation2 + $0x8] sm:$0xff]
      %v2739 = vld [vmem:[#allocation2 + $0x18] sm:$0xff]
      %v2740 = vld [vmem:[#allocation2 + $0x20] sm:$0xff]
      %v2741 = vld [vmem:[#allocation2 + $0x30] sm:$0xff]
      %v2742 = vld [vmem:[#allocation2 + $0x38] sm:$0xff]
      %v2743 = vld [vmem:[#allocation2 + $0x48] sm:$0xff]
      %v2744 = vld [vmem:[#allocation2 + $0x50] sm:$0xff]
      %v2745 = vld [vmem:[#allocation2 + $0x60] sm:$0xff]
      %v2746 = vld [vmem:[#allocation2 + $0x68] sm:$0xff]
      %v2747 = vld [vmem:[#allocation2 + $0x78] sm:$0xff]
      %v2748 = vld [vmem:[#allocation2 + $0x80] sm:$0xff]
      %v2749 = vld [vmem:[#allocation2 + $0x90] sm:$0xff]
      %v2750 = vld [vmem:[#allocation2 + $0x98] sm:$0xff]
      %v2751 = vld [vmem:[#allocation2 + $0xa8] sm:$0xff]
      %v2752 = vld [vmem:[#allocation2 + $0xb0] sm:$0xff]
      %v2753 = vld [vmem:[#allocation2 + $0xc0] sm:$0xff]
      %v2754 = vld [vmem:[#allocation2 + $0xc8] sm:$0xff]
      %v2755 = vld [vmem:[#allocation2 + $0xd8] sm:$0xff]
      %v2756 = vld [vmem:[#allocation2 + $0xe0] sm:$0xff]
      %v2757 = vld [vmem:[#allocation2 + $0xf0] sm:$0xff]
      %v2758 = vld [vmem:[#allocation2 + $0xf8] sm:$0xff]
      %v2759 = vld [vmem:[#allocation2 + $0x108] sm:$0xff]
      %v2760 = vld [vmem:[#allocation2 + $0x110] sm:$0xff]
      %v2761 = vld [vmem:[#allocation2 + $0x120] sm:$0xff]
      %v2762 = vld [vmem:[#allocation2 + $0x128] sm:$0xff]
      %v2763 = vld [vmem:[#allocation2 + $0x138] sm:$0xff]
      %v2764 = vld [vmem:[#allocation2 + $0x140] sm:$0xff]
      %v2765 = vld [vmem:[#allocation2 + $0x150] sm:$0xff]
      %v2766 = vld [vmem:[#allocation2 + $0x158] sm:$0xff]
      %v2767 = vld [vmem:[#allocation2 + $0x168] sm:$0xff]
      %v2768 = vld [vmem:[#allocation2 + $0x170] sm:$0xff]
      %v2769 = vld [vmem:[#allocation2 + $0x180] sm:$0xff]
      %v2770 = vld [vmem:[#allocation2 + $0x188] sm:$0xff]
      %v2771 = vld [vmem:[#allocation2 + $0x198] sm:$0xff]
      %v2772 = vld [vmem:[#allocation2 + $0x1a0] sm:$0xff]
      %v2773 = vpack.c.bf16 %v2738, %v2737
      %v2774 = vpack.c.bf16 %v2740, %v2739
      %v2775 = vpack.c.bf16 %v2742, %v2741
      %v2776 = vpack.c.bf16 %v2744, %v2743
      %v2777 = vpack.c.bf16 %v2746, %v2745
      %v2778 = vpack.c.bf16 %v2748, %v2747
      %v2779 = vpack.c.bf16 %v2750, %v2749
      %v2780 = vpack.c.bf16 %v2752, %v2751
      %v2781 = vpack.c.bf16 %v2754, %v2753
      %v2782 = vpack.c.bf16 %v2756, %v2755
      %v2783 = vpack.c.bf16 %v2758, %v2757
      %v2784 = vpack.c.bf16 %v2760, %v2759
      %v2785 = vpack.c.bf16 %v2762, %v2761
      %v2786 = vpack.c.bf16 %v2764, %v2763
      %v2787 = vpack.c.bf16 %v2766, %v2765
      %v2788 = vpack.c.bf16 %v2768, %v2767
      %v2789 = vpack.c.bf16 %v2770, %v2769
      %v2790 = vpack.c.bf16 %v2772, %v2771
      %v2791 = vld [vmem:[%s2] sm:$0x3]
      %s2792 = scalar_lea.vmem %s2, 6
      %v2793 = vld [vmem:[%s2792] sm:$0x3]
      %v2795 = vsel %vm205, %v2774, 0
      %v2798 = vsel %vm205, %v2775, 0
      %v2801 = vsel %vm205, %v2776, 0
      %v2804 = vsel %vm205, %v2777, 0
      %v2807 = vsel %vm205, %v2778, 0
      %v2810 = vsel %vm205, %v2779, 0
      %v2813 = vsel %vm205, %v2780, 0
      %v2816 = vsel %vm205, %v2781, 0
      %v2819 = vsel %vm205, %v2782, 0
      %v2822 = vsel %vm205, %v2783, 0
      %v2825 = vsel %vm205, %v2784, 0
      %v2828 = vsel %vm205, %v2785, 0
      %v2831 = vsel %vm205, %v2786, 0
      %v2834 = vsel %vm205, %v2787, 0
      %v2837 = vsel %vm205, %v2788, 0
      %v2840 = vsel %vm205, %v2789, 0
      %v2843 = vsel %vm421, %v2793, 0
      %2845 = vmatprep.subr.bf16.mxu0 0
      %2846 = vmatpush1.bf16.msra.mxu0 %v2843
      %2847 = vmatprep.subr.bf16.mxu0 0
      %2848 = vmatpush1.bf16.msra.mxu0 0
      %2849 = vmatprep.subr.bf16.mxu0 0
      %2850 = vmatpush1.bf16.msra.mxu0 0
      %2851 = vmatprep.subr.bf16.mxu0 0
      %2852 = vmatpush1.bf16.msra.mxu0 0
      %2853 = vmatprep.subr.bf16.mxu0 0
      %2854 = vmatpush1.bf16.msra.mxu0 0
      %2855 = vmatprep.subr.bf16.mxu0 0
      %2856 = vmatpush1.bf16.msra.mxu0 0
      %2857 = vmatprep.subr.bf16.mxu0 0
      %2858 = vmatpush1.bf16.msra.mxu0 0
      %2859 = vmatprep.subr.bf16.mxu0 0
      %2860 = vmatpush1.bf16.msra.mxu0 0
      %2861 = vmatprep.subr.bf16.mxu0 0
      %2862 = vmatpush1.bf16.msra.mxu0 0
      %2863 = vmatprep.subr.bf16.mxu0 0
      %2864 = vmatpush1.bf16.msra.mxu0 0
      %2865 = vmatprep.subr.bf16.mxu0 0
      %2866 = vmatpush1.bf16.msra.mxu0 0
      %2867 = vmatprep.subr.bf16.mxu0 0
      %2868 = vmatpush1.bf16.msra.mxu0 0
      %2869 = vmatprep.subr.bf16.mxu0 0
      %2870 = vmatpush1.bf16.msra.mxu0 0
      %2871 = vmatprep.subr.bf16.mxu0 0
      %2872 = vmatpush1.bf16.msra.mxu0 0
      %2873 = vmatprep.subr.bf16.mxu0 0
      %2874 = vmatpush1.bf16.msra.mxu0 0
      %2875 = vmatprep.subr.bf16.mxu0 0
      %2876 = vmatpush1.bf16.msra.mxu0 0
      %2877 = vmatprep.mubr.bf16.mxu0 0
      %2878 = vmatmul.mubr.bf16.gmra.mrb[0].mxu0 %v2795
      %v2879 = vpop.f32.mrb[0].mxu0
      %v2880 = vadd.f32 0.0, %v2879
      %v2881 = vpop.f32.mrb[0].mxu0
      %v2882 = vpop.f32.mrb[0].mxu0
      %v2883 = vadd.f32 0.0, %v2882
      %v2884 = vpop.f32.mrb[0].mxu0
      %2885 = vmatprep.mubr.bf16.mxu0 0
      %2886 = vmatmul.mubr.bf16.gmra.mrb[0].mxu0 %v2798
      %v2887 = vpop.f32.mrb[0].mxu0
      %v2888 = vadd.f32 0.0, %v2887
      %v2889 = vpop.f32.mrb[0].mxu0
      %v2890 = vpop.f32.mrb[0].mxu0
      %v2891 = vadd.f32 0.0, %v2890
      %v2892 = vpop.f32.mrb[0].mxu0
      %2893 = vmatprep.mubr.bf16.mxu0 0
      %2894 = vmatmul.mubr.bf16.gmra.mrb[0].mxu0 %v2801
      %v2895 = vpop.f32.mrb[0].mxu0
      %v2896 = vadd.f32 0.0, %v2895
      %v2897 = vpop.f32.mrb[0].mxu0
      %v2898 = vpop.f32.mrb[0].mxu0
      %v2899 = vadd.f32 0.0, %v2898
      %v2900 = vpop.f32.mrb[0].mxu0
      %2901 = vmatprep.mubr.bf16.mxu0 0
      %2902 = vmatmul.mubr.bf16.gmra.mrb[0].mxu0 %v2804
      %v2903 = vpop.f32.mrb[0].mxu0
      %v2904 = vadd.f32 0.0, %v2903
      %v2905 = vpop.f32.mrb[0].mxu0
      %v2906 = vpop.f32.mrb[0].mxu0
      %v2907 = vadd.f32 0.0, %v2906
      %v2908 = vpop.f32.mrb[0].mxu0
      %2909 = vmatprep.mubr.bf16.mxu0 0
      %2910 = vmatmul.mubr.bf16.gmra.mrb[0].mxu0 %v2807
      %v2911 = vpop.f32.mrb[0].mxu0
      %v2912 = vadd.f32 0.0, %v2911
      %v2913 = vpop.f32.mrb[0].mxu0
      %v2914 = vpop.f32.mrb[0].mxu0
      %v2915 = vadd.f32 0.0, %v2914
      %v2916 = vpop.f32.mrb[0].mxu0
      %2917 = vmatprep.mubr.bf16.mxu0 0
      %2918 = vmatmul.mubr.bf16.gmra.mrb[0].mxu0 %v2810
      %v2919 = vpop.f32.mrb[0].mxu0
      %v2920 = vadd.f32 0.0, %v2919
      %v2921 = vpop.f32.mrb[0].mxu0
      %v2922 = vpop.f32.mrb[0].mxu0
      %v2923 = vadd.f32 0.0, %v2922
      %v2924 = vpop.f32.mrb[0].mxu0
      %2925 = vmatprep.mubr.bf16.mxu0 0
      %2926 = vmatmul.mubr.bf16.gmra.mrb[0].mxu0 %v2813
      %v2927 = vpop.f32.mrb[0].mxu0
      %v2928 = vadd.f32 0.0, %v2927
      %v2929 = vpop.f32.mrb[0].mxu0
      %v2930 = vpop.f32.mrb[0].mxu0
      %v2931 = vadd.f32 0.0, %v2930
      %v2932 = vpop.f32.mrb[0].mxu0
      %2933 = vmatprep.mubr.bf16.mxu0 0
      %2934 = vmatmul.mubr.bf16.gmra.mrb[0].mxu0 %v2816
      %v2935 = vpop.f32.mrb[0].mxu0
      %v2936 = vadd.f32 0.0, %v2935
      %v2937 = vpop.f32.mrb[0].mxu0
      %v2938 = vpop.f32.mrb[0].mxu0
      %v2939 = vadd.f32 0.0, %v2938
      %v2940 = vpop.f32.mrb[0].mxu0
      %2941 = vmatprep.mubr.bf16.mxu0 0
      %2942 = vmatmul.mubr.bf16.gmra.mrb[0].mxu0 %v2819
      %v2943 = vpop.f32.mrb[0].mxu0
      %v2944 = vadd.f32 0.0, %v2943
      %v2945 = vpop.f32.mrb[0].mxu0
      %v2946 = vpop.f32.mrb[0].mxu0
      %v2947 = vadd.f32 0.0, %v2946
      %v2948 = vpop.f32.mrb[0].mxu0
      %2949 = vmatprep.mubr.bf16.mxu0 0
      %2950 = vmatmul.mubr.bf16.gmra.mrb[0].mxu0 %v2822
      %v2951 = vpop.f32.mrb[0].mxu0
      %v2952 = vadd.f32 0.0, %v2951
      %v2953 = vpop.f32.mrb[0].mxu0
      %v2954 = vpop.f32.mrb[0].mxu0
      %v2955 = vadd.f32 0.0, %v2954
      %v2956 = vpop.f32.mrb[0].mxu0
      %2957 = vmatprep.mubr.bf16.mxu0 0
      %2958 = vmatmul.mubr.bf16.gmra.mrb[0].mxu0 %v2825
      %v2959 = vpop.f32.mrb[0].mxu0
      %v2960 = vadd.f32 0.0, %v2959
      %v2961 = vpop.f32.mrb[0].mxu0
      %v2962 = vpop.f32.mrb[0].mxu0
      %v2963 = vadd.f32 0.0, %v2962
      %v2964 = vpop.f32.mrb[0].mxu0
      %2965 = vmatprep.mubr.bf16.mxu0 0
      %2966 = vmatmul.mubr.bf16.gmra.mrb[0].mxu0 %v2828
      %v2967 = vpop.f32.mrb[0].mxu0
      %v2968 = vadd.f32 0.0, %v2967
      %v2969 = vpop.f32.mrb[0].mxu0
      %v2970 = vpop.f32.mrb[0].mxu0
      %v2971 = vadd.f32 0.0, %v2970
      %v2972 = vpop.f32.mrb[0].mxu0
      %2973 = vmatprep.mubr.bf16.mxu0 0
      %2974 = vmatmul.mubr.bf16.gmra.mrb[0].mxu0 %v2831
      %v2975 = vpop.f32.mrb[0].mxu0
      %v2976 = vadd.f32 0.0, %v2975
      %v2977 = vpop.f32.mrb[0].mxu0
      %v2978 = vpop.f32.mrb[0].mxu0
      %v2979 = vadd.f32 0.0, %v2978
      %v2980 = vpop.f32.mrb[0].mxu0
      %2981 = vmatprep.mubr.bf16.mxu0 0
      %2982 = vmatmul.mubr.bf16.gmra.mrb[0].mxu0 %v2834
      %v2983 = vpop.f32.mrb[0].mxu0
      %v2984 = vadd.f32 0.0, %v2983
      %v2985 = vpop.f32.mrb[0].mxu0
      %v2986 = vpop.f32.mrb[0].mxu0
      %v2987 = vadd.f32 0.0, %v2986
      %v2988 = vpop.f32.mrb[0].mxu0
      %2989 = vmatprep.mubr.bf16.mxu0 0
      %2990 = vmatmul.mubr.bf16.gmra.mrb[0].mxu0 %v2837
      %v2991 = vpop.f32.mrb[0].mxu0
      %v2992 = vadd.f32 0.0, %v2991
      %v2993 = vpop.f32.mrb[0].mxu0
      %v2994 = vpop.f32.mrb[0].mxu0
      %v2995 = vadd.f32 0.0, %v2994
      %v2996 = vpop.f32.mrb[0].mxu0
      %2997 = vmatprep.mubr.bf16.mxu0 0
      %2998 = vmatmul.mubr.bf16.gmra.mrb[0].mxu0 %v2840
      %v2999 = vpop.f32.mrb[0].mxu0
      %v3000 = vadd.f32 0.0, %v2999
      %v3001 = vpop.f32.mrb[0].mxu0
      %v3002 = vpop.f32.mrb[0].mxu0
      %v3003 = vadd.f32 0.0, %v3002
      %v3004 = vpop.f32.mrb[0].mxu0
      %3005 = vdwg.mxu0
      %v3007 = vsel %vm205, %v2773, 0
      %v3010 = vsel %vm421, %v2791, 0
      %3012 = vmatprep.subr.bf16.mxu0 0
      %3013 = vmatpush1.bf16.msra.mxu0 %v3010
      %3014 = vmatprep.subr.bf16.mxu0 0
      %3015 = vmatpush1.bf16.msra.mxu0 0
      %3016 = vmatprep.subr.bf16.mxu0 0
      %3017 = vmatpush1.bf16.msra.mxu0 0
      %3018 = vmatprep.subr.bf16.mxu0 0
      %3019 = vmatpush1.bf16.msra.mxu0 0
      %3020 = vmatprep.subr.bf16.mxu0 0
      %3021 = vmatpush1.bf16.msra.mxu0 0
      %3022 = vmatprep.subr.bf16.mxu0 0
      %3023 = vmatpush1.bf16.msra.mxu0 0
      %3024 = vmatprep.subr.bf16.mxu0 0
      %3025 = vmatpush1.bf16.msra.mxu0 0
      %3026 = vmatprep.subr.bf16.mxu0 0
      %3027 = vmatpush1.bf16.msra.mxu0 0
      %3028 = vmatprep.subr.bf16.mxu0 0
      %3029 = vmatpush1.bf16.msra.mxu0 0
      %3030 = vmatprep.subr.bf16.mxu0 0
      %3031 = vmatpush1.bf16.msra.mxu0 0
      %3032 = vmatprep.subr.bf16.mxu0 0
      %3033 = vmatpush1.bf16.msra.mxu0 0
      %3034 = vmatprep.subr.bf16.mxu0 0
      %3035 = vmatpush1.bf16.msra.mxu0 0
      %3036 = vmatprep.subr.bf16.mxu0 0
      %3037 = vmatpush1.bf16.msra.mxu0 0
      %3038 = vmatprep.subr.bf16.mxu0 0
      %3039 = vmatpush1.bf16.msra.mxu0 0
      %3040 = vmatprep.subr.bf16.mxu0 0
      %3041 = vmatpush1.bf16.msra.mxu0 0
      %3042 = vmatprep.subr.bf16.mxu0 0
      %3043 = vmatpush1.bf16.msra.mxu0 0
      %3044 = vmatprep.mubr.bf16.mxu0 0
      %3045 = vmatmul.mubr.bf16.gmra.mrb[0].mxu0 %v3007
      %v3046 = vpop.f32.mrb[0].mxu0
      %v3047 = vadd.f32 %v2880, %v3046
      %v3048 = vpop.f32.mrb[0].mxu0
      %v3049 = vpop.f32.mrb[0].mxu0
      %v3050 = vadd.f32 %v2883, %v3049
      %v3051 = vpop.f32.mrb[0].mxu0
      %3052 = vmatprep.mubr.bf16.mxu0 0
      %3053 = vmatmul.mubr.bf16.gmra.mrb[0].mxu0 %v2795
      %v3054 = vpop.f32.mrb[0].mxu0
      %v3055 = vadd.f32 %v2888, %v3054
      %v3056 = vpop.f32.mrb[0].mxu0
      %v3057 = vpop.f32.mrb[0].mxu0
      %v3058 = vadd.f32 %v2891, %v3057
      %v3059 = vpop.f32.mrb[0].mxu0
      %3060 = vmatprep.mubr.bf16.mxu0 0
      %3061 = vmatmul.mubr.bf16.gmra.mrb[0].mxu0 %v2798
      %v3062 = vpop.f32.mrb[0].mxu0
      %v3063 = vadd.f32 %v2896, %v3062
      %v3064 = vpop.f32.mrb[0].mxu0
      %v3065 = vpop.f32.mrb[0].mxu0
      %v3066 = vadd.f32 %v2899, %v3065
      %v3067 = vpop.f32.mrb[0].mxu0
      %3068 = vmatprep.mubr.bf16.mxu0 0
      %3069 = vmatmul.mubr.bf16.gmra.mrb[0].mxu0 %v2801
      %v3070 = vpop.f32.mrb[0].mxu0
      %v3071 = vadd.f32 %v2904, %v3070
      %v3072 = vpop.f32.mrb[0].mxu0
      %v3073 = vpop.f32.mrb[0].mxu0
      %v3074 = vadd.f32 %v2907, %v3073
      %v3075 = vpop.f32.mrb[0].mxu0
      %3076 = vmatprep.mubr.bf16.mxu0 0
      %3077 = vmatmul.mubr.bf16.gmra.mrb[0].mxu0 %v2804
      %v3078 = vpop.f32.mrb[0].mxu0
      %v3079 = vadd.f32 %v2912, %v3078
      %v3080 = vpop.f32.mrb[0].mxu0
      %v3081 = vpop.f32.mrb[0].mxu0
      %v3082 = vadd.f32 %v2915, %v3081
      %v3083 = vpop.f32.mrb[0].mxu0
      %3084 = vmatprep.mubr.bf16.mxu0 0
      %3085 = vmatmul.mubr.bf16.gmra.mrb[0].mxu0 %v2807
      %v3086 = vpop.f32.mrb[0].mxu0
      %v3087 = vadd.f32 %v2920, %v3086
      %v3088 = vpop.f32.mrb[0].mxu0
      %v3089 = vpop.f32.mrb[0].mxu0
      %v3090 = vadd.f32 %v2923, %v3089
      %v3091 = vpop.f32.mrb[0].mxu0
      %3092 = vmatprep.mubr.bf16.mxu0 0
      %3093 = vmatmul.mubr.bf16.gmra.mrb[0].mxu0 %v2810
      %v3094 = vpop.f32.mrb[0].mxu0
      %v3095 = vadd.f32 %v2928, %v3094
      %v3096 = vpop.f32.mrb[0].mxu0
      %v3097 = vpop.f32.mrb[0].mxu0
      %v3098 = vadd.f32 %v2931, %v3097
      %v3099 = vpop.f32.mrb[0].mxu0
      %3100 = vmatprep.mubr.bf16.mxu0 0
      %3101 = vmatmul.mubr.bf16.gmra.mrb[0].mxu0 %v2813
      %v3102 = vpop.f32.mrb[0].mxu0
      %v3103 = vadd.f32 %v2936, %v3102
      %v3104 = vpop.f32.mrb[0].mxu0
      %v3105 = vpop.f32.mrb[0].mxu0
      %v3106 = vadd.f32 %v2939, %v3105
      %v3107 = vpop.f32.mrb[0].mxu0
      %3108 = vmatprep.mubr.bf16.mxu0 0
      %3109 = vmatmul.mubr.bf16.gmra.mrb[0].mxu0 %v2816
      %v3110 = vpop.f32.mrb[0].mxu0
      %v3111 = vadd.f32 %v2944, %v3110
      %v3112 = vpop.f32.mrb[0].mxu0
      %v3113 = vpop.f32.mrb[0].mxu0
      %v3114 = vadd.f32 %v2947, %v3113
      %v3115 = vpop.f32.mrb[0].mxu0
      %3116 = vmatprep.mubr.bf16.mxu0 0
      %3117 = vmatmul.mubr.bf16.gmra.mrb[0].mxu0 %v2819
      %v3118 = vpop.f32.mrb[0].mxu0
      %v3119 = vadd.f32 %v2952, %v3118
      %v3120 = vpop.f32.mrb[0].mxu0
      %v3121 = vpop.f32.mrb[0].mxu0
      %v3122 = vadd.f32 %v2955, %v3121
      %v3123 = vpop.f32.mrb[0].mxu0
      %3124 = vmatprep.mubr.bf16.mxu0 0
      %3125 = vmatmul.mubr.bf16.gmra.mrb[0].mxu0 %v2822
      %v3126 = vpop.f32.mrb[0].mxu0
      %v3127 = vadd.f32 %v2960, %v3126
      %v3128 = vpop.f32.mrb[0].mxu0
      %v3129 = vpop.f32.mrb[0].mxu0
      %v3130 = vadd.f32 %v2963, %v3129
      %v3131 = vpop.f32.mrb[0].mxu0
      %3132 = vmatprep.mubr.bf16.mxu0 0
      %3133 = vmatmul.mubr.bf16.gmra.mrb[0].mxu0 %v2825
      %v3134 = vpop.f32.mrb[0].mxu0
      %v3135 = vadd.f32 %v2968, %v3134
      %v3136 = vpop.f32.mrb[0].mxu0
      %v3137 = vpop.f32.mrb[0].mxu0
      %v3138 = vadd.f32 %v2971, %v3137
      %v3139 = vpop.f32.mrb[0].mxu0
      %3140 = vmatprep.mubr.bf16.mxu0 0
      %3141 = vmatmul.mubr.bf16.gmra.mrb[0].mxu0 %v2828
      %v3142 = vpop.f32.mrb[0].mxu0
      %v3143 = vadd.f32 %v2976, %v3142
      %v3144 = vpop.f32.mrb[0].mxu0
      %v3145 = vpop.f32.mrb[0].mxu0
      %v3146 = vadd.f32 %v2979, %v3145
      %v3147 = vpop.f32.mrb[0].mxu0
      %3148 = vmatprep.mubr.bf16.mxu0 0
      %3149 = vmatmul.mubr.bf16.gmra.mrb[0].mxu0 %v2831
      %v3150 = vpop.f32.mrb[0].mxu0
      %v3151 = vadd.f32 %v2984, %v3150
      %v3152 = vpop.f32.mrb[0].mxu0
      %v3153 = vpop.f32.mrb[0].mxu0
      %v3154 = vadd.f32 %v2987, %v3153
      %v3155 = vpop.f32.mrb[0].mxu0
      %3156 = vmatprep.mubr.bf16.mxu0 0
      %3157 = vmatmul.mubr.bf16.gmra.mrb[0].mxu0 %v2834
      %v3158 = vpop.f32.mrb[0].mxu0
      %v3159 = vadd.f32 %v2992, %v3158
      %v3160 = vpop.f32.mrb[0].mxu0
      %v3161 = vpop.f32.mrb[0].mxu0
      %v3162 = vadd.f32 %v2995, %v3161
      %v3163 = vpop.f32.mrb[0].mxu0
      %3164 = vmatprep.mubr.bf16.mxu0 0
      %3165 = vmatmul.mubr.bf16.gmra.mrb[0].mxu0 %v2837
      %v3166 = vpop.f32.mrb[0].mxu0
      %v3167 = vadd.f32 %v3000, %v3166
      %v3168 = vpop.f32.mrb[0].mxu0
      %v3169 = vpop.f32.mrb[0].mxu0
      %v3170 = vadd.f32 %v3003, %v3169
      %v3171 = vpop.f32.mrb[0].mxu0
      %3172 = vdwg.mxu0
      %s3173 = scalar_lea.vmem %s2, 12
      %v3174 = vld [vmem:[%s3173] sm:$0x3]
      %v3176 = vsel %vm205, %v2790, 0
      %v3179 = vsel %vm421, %v3174, 0
      %3181 = vmatprep.subr.bf16.mxu0 0
      %3182 = vmatpush1.bf16.msra.mxu0 %v3179
      %3183 = vmatprep.subr.bf16.mxu0 0
      %3184 = vmatpush1.bf16.msra.mxu0 0
      %3185 = vmatprep.subr.bf16.mxu0 0
      %3186 = vmatpush1.bf16.msra.mxu0 0
      %3187 = vmatprep.subr.bf16.mxu0 0
      %3188 = vmatpush1.bf16.msra.mxu0 0
      %3189 = vmatprep.subr.bf16.mxu0 0
      %3190 = vmatpush1.bf16.msra.mxu0 0
      %3191 = vmatprep.subr.bf16.mxu0 0
      %3192 = vmatpush1.bf16.msra.mxu0 0
      %3193 = vmatprep.subr.bf16.mxu0 0
      %3194 = vmatpush1.bf16.msra.mxu0 0
      %3195 = vmatprep.subr.bf16.mxu0 0
      %3196 = vmatpush1.bf16.msra.mxu0 0
      %3197 = vmatprep.subr.bf16.mxu0 0
      %3198 = vmatpush1.bf16.msra.mxu0 0
      %3199 = vmatprep.subr.bf16.mxu0 0
      %3200 = vmatpush1.bf16.msra.mxu0 0
      %3201 = vmatprep.subr.bf16.mxu0 0
      %3202 = vmatpush1.bf16.msra.mxu0 0
      %3203 = vmatprep.subr.bf16.mxu0 0
      %3204 = vmatpush1.bf16.msra.mxu0 0
      %3205 = vmatprep.subr.bf16.mxu0 0
      %3206 = vmatpush1.bf16.msra.mxu0 0
      %3207 = vmatprep.subr.bf16.mxu0 0
      %3208 = vmatpush1.bf16.msra.mxu0 0
      %3209 = vmatprep.subr.bf16.mxu0 0
      %3210 = vmatpush1.bf16.msra.mxu0 0
      %3211 = vmatprep.subr.bf16.mxu0 0
      %3212 = vmatpush1.bf16.msra.mxu0 0
      %3213 = vmatprep.mubr.bf16.mxu0 0
      %3214 = vmatmul.mubr.bf16.gmra.mrb[0].mxu0 %v2798
      %v3215 = vpop.f32.mrb[0].mxu0
      %v3216 = vadd.f32 0.0, %v3215
      %v3217 = vpop.f32.mrb[0].mxu0
      %v3218 = vpop.f32.mrb[0].mxu0
      %v3219 = vadd.f32 0.0, %v3218
      %v3220 = vpop.f32.mrb[0].mxu0
      %3221 = vmatprep.mubr.bf16.mxu0 0
      %3222 = vmatmul.mubr.bf16.gmra.mrb[0].mxu0 %v2801
      %v3223 = vpop.f32.mrb[0].mxu0
      %v3224 = vadd.f32 0.0, %v3223
      %v3225 = vpop.f32.mrb[0].mxu0
      %v3226 = vpop.f32.mrb[0].mxu0
      %v3227 = vadd.f32 0.0, %v3226
      %v3228 = vpop.f32.mrb[0].mxu0
      %3229 = vmatprep.mubr.bf16.mxu0 0
      %3230 = vmatmul.mubr.bf16.gmra.mrb[0].mxu0 %v2804
      %v3231 = vpop.f32.mrb[0].mxu0
      %v3232 = vadd.f32 0.0, %v3231
      %v3233 = vpop.f32.mrb[0].mxu0
      %v3234 = vpop.f32.mrb[0].mxu0
      %v3235 = vadd.f32 0.0, %v3234
      %v3236 = vpop.f32.mrb[0].mxu0
      %3237 = vmatprep.mubr.bf16.mxu0 0
      %3238 = vmatmul.mubr.bf16.gmra.mrb[0].mxu0 %v2807
      %v3239 = vpop.f32.mrb[0].mxu0
      %v3240 = vadd.f32 0.0, %v3239
      %v3241 = vpop.f32.mrb[0].mxu0
      %v3242 = vpop.f32.mrb[0].mxu0
      %v3243 = vadd.f32 0.0, %v3242
      %v3244 = vpop.f32.mrb[0].mxu0
      %3245 = vmatprep.mubr.bf16.mxu0 0
      %3246 = vmatmul.mubr.bf16.gmra.mrb[0].mxu0 %v2810
      %v3247 = vpop.f32.mrb[0].mxu0
      %v3248 = vadd.f32 0.0, %v3247
      %v3249 = vpop.f32.mrb[0].mxu0
      %v3250 = vpop.f32.mrb[0].mxu0
      %v3251 = vadd.f32 0.0, %v3250
      %v3252 = vpop.f32.mrb[0].mxu0
      %3253 = vmatprep.mubr.bf16.mxu0 0
      %3254 = vmatmul.mubr.bf16.gmra.mrb[0].mxu0 %v2813
      %v3255 = vpop.f32.mrb[0].mxu0
      %v3256 = vadd.f32 0.0, %v3255
      %v3257 = vpop.f32.mrb[0].mxu0
      %v3258 = vpop.f32.mrb[0].mxu0
      %v3259 = vadd.f32 0.0, %v3258
      %v3260 = vpop.f32.mrb[0].mxu0
      %3261 = vmatprep.mubr.bf16.mxu0 0
      %3262 = vmatmul.mubr.bf16.gmra.mrb[0].mxu0 %v2816
      %v3263 = vpop.f32.mrb[0].mxu0
      %v3264 = vadd.f32 0.0, %v3263
      %v3265 = vpop.f32.mrb[0].mxu0
      %v3266 = vpop.f32.mrb[0].mxu0
      %v3267 = vadd.f32 0.0, %v3266
      %v3268 = vpop.f32.mrb[0].mxu0
      %3269 = vmatprep.mubr.bf16.mxu0 0
      %3270 = vmatmul.mubr.bf16.gmra.mrb[0].mxu0 %v2819
      %v3271 = vpop.f32.mrb[0].mxu0
      %v3272 = vadd.f32 0.0, %v3271
      %v3273 = vpop.f32.mrb[0].mxu0
      %v3274 = vpop.f32.mrb[0].mxu0
      %v3275 = vadd.f32 0.0, %v3274
      %v3276 = vpop.f32.mrb[0].mxu0
      %3277 = vmatprep.mubr.bf16.mxu0 0
      %3278 = vmatmul.mubr.bf16.gmra.mrb[0].mxu0 %v2822
      %v3279 = vpop.f32.mrb[0].mxu0
      %v3280 = vadd.f32 0.0, %v3279
      %v3281 = vpop.f32.mrb[0].mxu0
      %v3282 = vpop.f32.mrb[0].mxu0
      %v3283 = vadd.f32 0.0, %v3282
      %v3284 = vpop.f32.mrb[0].mxu0
      %3285 = vmatprep.mubr.bf16.mxu0 0
      %3286 = vmatmul.mubr.bf16.gmra.mrb[0].mxu0 %v2825
      %v3287 = vpop.f32.mrb[0].mxu0
      %v3288 = vadd.f32 0.0, %v3287
      %v3289 = vpop.f32.mrb[0].mxu0
      %v3290 = vpop.f32.mrb[0].mxu0
      %v3291 = vadd.f32 0.0, %v3290
      %v3292 = vpop.f32.mrb[0].mxu0
      %3293 = vmatprep.mubr.bf16.mxu0 0
      %3294 = vmatmul.mubr.bf16.gmra.mrb[0].mxu0 %v2828
      %v3295 = vpop.f32.mrb[0].mxu0
      %v3296 = vadd.f32 0.0, %v3295
      %v3297 = vpop.f32.mrb[0].mxu0
      %v3298 = vpop.f32.mrb[0].mxu0
      %v3299 = vadd.f32 0.0, %v3298
      %v3300 = vpop.f32.mrb[0].mxu0
      %3301 = vmatprep.mubr.bf16.mxu0 0
      %3302 = vmatmul.mubr.bf16.gmra.mrb[0].mxu0 %v2831
      %v3303 = vpop.f32.mrb[0].mxu0
      %v3304 = vadd.f32 0.0, %v3303
      %v3305 = vpop.f32.mrb[0].mxu0
      %v3306 = vpop.f32.mrb[0].mxu0
      %v3307 = vadd.f32 0.0, %v3306
      %v3308 = vpop.f32.mrb[0].mxu0
      %3309 = vmatprep.mubr.bf16.mxu0 0
      %3310 = vmatmul.mubr.bf16.gmra.mrb[0].mxu0 %v2834
      %v3311 = vpop.f32.mrb[0].mxu0
      %v3312 = vadd.f32 0.0, %v3311
      %v3313 = vpop.f32.mrb[0].mxu0
      %v3314 = vpop.f32.mrb[0].mxu0
      %v3315 = vadd.f32 0.0, %v3314
      %v3316 = vpop.f32.mrb[0].mxu0
      %3317 = vmatprep.mubr.bf16.mxu0 0
      %3318 = vmatmul.mubr.bf16.gmra.mrb[0].mxu0 %v2837
      %v3319 = vpop.f32.mrb[0].mxu0
      %v3320 = vadd.f32 0.0, %v3319
      %v3321 = vpop.f32.mrb[0].mxu0
      %v3322 = vpop.f32.mrb[0].mxu0
      %v3323 = vadd.f32 0.0, %v3322
      %v3324 = vpop.f32.mrb[0].mxu0
      %3325 = vmatprep.mubr.bf16.mxu0 0
      %3326 = vmatmul.mubr.bf16.gmra.mrb[0].mxu0 %v2840
      %v3327 = vpop.f32.mrb[0].mxu0
      %v3328 = vadd.f32 0.0, %v3327
      %v3329 = vpop.f32.mrb[0].mxu0
      %v3330 = vpop.f32.mrb[0].mxu0
      %v3331 = vadd.f32 0.0, %v3330
      %v3332 = vpop.f32.mrb[0].mxu0
      %3333 = vmatprep.mubr.bf16.mxu0 0
      %3334 = vmatmul.mubr.bf16.gmra.mrb[0].mxu0 %v3176
      %v3335 = vpop.f32.mrb[0].mxu0
      %v3336 = vadd.f32 0.0, %v3335
      %v3337 = vpop.f32.mrb[0].mxu0
      %v3338 = vpop.f32.mrb[0].mxu0
      %v3339 = vadd.f32 0.0, %v3338
      %v3340 = vpop.f32.mrb[0].mxu0
      %3341 = vdwg.mxu0
      %v3342 = vadd.f32 %v3047, %v3216
      %v3343 = vadd.f32 %v3050, %v3219
      %v3344 = vadd.f32 %v3055, %v3224
      %v3345 = vadd.f32 %v3058, %v3227
      %v3346 = vadd.f32 %v3063, %v3232
      %v3347 = vadd.f32 %v3066, %v3235
      %v3348 = vadd.f32 %v3071, %v3240
      %v3349 = vadd.f32 %v3074, %v3243
      %v3350 = vadd.f32 %v3079, %v3248
      %v3351 = vadd.f32 %v3082, %v3251
      %v3352 = vadd.f32 %v3087, %v3256
      %v3353 = vadd.f32 %v3090, %v3259
      %v3354 = vadd.f32 %v3095, %v3264
      %v3355 = vadd.f32 %v3098, %v3267
      %v3356 = vadd.f32 %v3103, %v3272
      %v3357 = vadd.f32 %v3106, %v3275
      %v3358 = vadd.f32 %v3111, %v3280
      %v3359 = vadd.f32 %v3114, %v3283
      %v3360 = vadd.f32 %v3119, %v3288
      %v3361 = vadd.f32 %v3122, %v3291
      %v3362 = vadd.f32 %v3127, %v3296
      %v3363 = vadd.f32 %v3130, %v3299
      %v3364 = vadd.f32 %v3135, %v3304
      %v3365 = vadd.f32 %v3138, %v3307
      %v3366 = vadd.f32 %v3143, %v3312
      %v3367 = vadd.f32 %v3146, %v3315
      %v3368 = vadd.f32 %v3151, %v3320
      %v3369 = vadd.f32 %v3154, %v3323
      %v3370 = vadd.f32 %v3159, %v3328
      %v3371 = vadd.f32 %v3162, %v3331
      %v3372 = vadd.f32 %v3167, %v3336
      %v3373 = vadd.f32 %v3170, %v3339
      %v3374 = vld [vmem:[#allocation2 + $0x1] sm:$0xff]
      %v3375 = vld [vmem:[#allocation2 + $0x9] sm:$0xff]
      %v3376 = vld [vmem:[#allocation2 + $0x19] sm:$0xff]
      %v3377 = vld [vmem:[#allocation2 + $0x21] sm:$0xff]
      %v3378 = vld [vmem:[#allocation2 + $0x31] sm:$0xff]
      %v3379 = vld [vmem:[#allocation2 + $0x39] sm:$0xff]
      %v3380 = vld [vmem:[#allocation2 + $0x49] sm:$0xff]
      %v3381 = vld [vmem:[#allocation2 + $0x51] sm:$0xff]
      %v3382 = vld [vmem:[#allocation2 + $0x61] sm:$0xff]
      %v3383 = vld [vmem:[#allocation2 + $0x69] sm:$0xff]
      %v3384 = vld [vmem:[#allocation2 + $0x79] sm:$0xff]
      %v3385 = vld [vmem:[#allocation2 + $0x81] sm:$0xff]
      %v3386 = vld [vmem:[#allocation2 + $0x91] sm:$0xff]
      %v3387 = vld [vmem:[#allocation2 + $0x99] sm:$0xff]
      %v3388 = vld [vmem:[#allocation2 + $0xa9] sm:$0xff]
      %v3389 = vld [vmem:[#allocation2 + $0xb1] sm:$0xff]
      %v3390 = vld [vmem:[#allocation2 + $0xc1] sm:$0xff]
      %v3391 = vld [vmem:[#allocation2 + $0xc9] sm:$0xff]
      %v3392 = vld [vmem:[#allocation2 + $0xd9] sm:$0xff]
      %v3393 = vld [vmem:[#allocation2 + $0xe1] sm:$0xff]
      %v3394 = vld [vmem:[#allocation2 + $0xf1] sm:$0xff]
      %v3395 = vld [vmem:[#allocation2 + $0xf9] sm:$0xff]
      %v3396 = vld [vmem:[#allocation2 + $0x109] sm:$0xff]
      %v3397 = vld [vmem:[#allocation2 + $0x111] sm:$0xff]
      %v3398 = vld [vmem:[#allocation2 + $0x121] sm:$0xff]
      %v3399 = vld [vmem:[#allocation2 + $0x129] sm:$0xff]
      %v3400 = vld [vmem:[#allocation2 + $0x139] sm:$0xff]
      %v3401 = vld [vmem:[#allocation2 + $0x141] sm:$0xff]
      %v3402 = vld [vmem:[#allocation2 + $0x151] sm:$0xff]
      %v3403 = vld [vmem:[#allocation2 + $0x159] sm:$0xff]
      %v3404 = vld [vmem:[#allocation2 + $0x169] sm:$0xff]
      %v3405 = vld [vmem:[#allocation2 + $0x171] sm:$0xff]
      %v3406 = vld [vmem:[#allocation2 + $0x181] sm:$0xff]
      %v3407 = vld [vmem:[#allocation2 + $0x189] sm:$0xff]
      %v3408 = vld [vmem:[#allocation2 + $0x199] sm:$0xff]
      %v3409 = vld [vmem:[#allocation2 + $0x1a1] sm:$0xff]
      %v3410 = vpack.c.bf16 %v3375, %v3374
      %v3411 = vpack.c.bf16 %v3377, %v3376
      %v3412 = vpack.c.bf16 %v3379, %v3378
      %v3413 = vpack.c.bf16 %v3381, %v3380
      %v3414 = vpack.c.bf16 %v3383, %v3382
      %v3415 = vpack.c.bf16 %v3385, %v3384
      %v3416 = vpack.c.bf16 %v3387, %v3386
      %v3417 = vpack.c.bf16 %v3389, %v3388
      %v3418 = vpack.c.bf16 %v3391, %v3390
      %v3419 = vpack.c.bf16 %v3393, %v3392
      %v3420 = vpack.c.bf16 %v3395, %v3394
      %v3421 = vpack.c.bf16 %v3397, %v3396
      %v3422 = vpack.c.bf16 %v3399, %v3398
      %v3423 = vpack.c.bf16 %v3401, %v3400
      %v3424 = vpack.c.bf16 %v3403, %v3402
      %v3425 = vpack.c.bf16 %v3405, %v3404
      %v3426 = vpack.c.bf16 %v3407, %v3406
      %v3427 = vpack.c.bf16 %v3409, %v3408
      %s3428 = scalar_lea.vmem %s2, 2
      %v3429 = vld [vmem:[%s3428] sm:$0x3]
      %v3431 = vsel %vm205, %v3410, 0
      %v3434 = vsel %vm205, %v3411, 0
      %v3437 = vsel %vm205, %v3412, 0
      %v3440 = vsel %vm205, %v3413, 0
      %v3443 = vsel %vm205, %v3414, 0
      %v3446 = vsel %vm205, %v3415, 0
      %v3449 = vsel %vm205, %v3416, 0
      %v3452 = vsel %vm205, %v3417, 0
      %v3455 = vsel %vm205, %v3418, 0
      %v3458 = vsel %vm205, %v3419, 0
      %v3461 = vsel %vm205, %v3420, 0
      %v3464 = vsel %vm205, %v3421, 0
      %v3467 = vsel %vm205, %v3422, 0
      %v3470 = vsel %vm205, %v3423, 0
      %v3473 = vsel %vm205, %v3424, 0
      %v3476 = vsel %vm205, %v3425, 0
      %v3479 = vsel %vm421, %v3429, 0
      %3481 = vmatprep.subr.bf16.mxu0 0
      %3482 = vmatpush1.bf16.msra.mxu0 %v3479
      %3483 = vmatprep.subr.bf16.mxu0 0
      %3484 = vmatpush1.bf16.msra.mxu0 0
      %3485 = vmatprep.subr.bf16.mxu0 0
      %3486 = vmatpush1.bf16.msra.mxu0 0
      %3487 = vmatprep.subr.bf16.mxu0 0
      %3488 = vmatpush1.bf16.msra.mxu0 0
      %3489 = vmatprep.subr.bf16.mxu0 0
      %3490 = vmatpush1.bf16.msra.mxu0 0
      %3491 = vmatprep.subr.bf16.mxu0 0
      %3492 = vmatpush1.bf16.msra.mxu0 0
      %3493 = vmatprep.subr.bf16.mxu0 0
      %3494 = vmatpush1.bf16.msra.mxu0 0
      %3495 = vmatprep.subr.bf16.mxu0 0
      %3496 = vmatpush1.bf16.msra.mxu0 0
      %3497 = vmatprep.subr.bf16.mxu0 0
      %3498 = vmatpush1.bf16.msra.mxu0 0
      %3499 = vmatprep.subr.bf16.mxu0 0
      %3500 = vmatpush1.bf16.msra.mxu0 0
      %3501 = vmatprep.subr.bf16.mxu0 0
      %3502 = vmatpush1.bf16.msra.mxu0 0
      %3503 = vmatprep.subr.bf16.mxu0 0
      %3504 = vmatpush1.bf16.msra.mxu0 0
      %3505 = vmatprep.subr.bf16.mxu0 0
      %3506 = vmatpush1.bf16.msra.mxu0 0
      %3507 = vmatprep.subr.bf16.mxu0 0
      %3508 = vmatpush1.bf16.msra.mxu0 0
      %3509 = vmatprep.subr.bf16.mxu0 0
      %3510 = vmatpush1.bf16.msra.mxu0 0
      %3511 = vmatprep.subr.bf16.mxu0 0
      %3512 = vmatpush1.bf16.msra.mxu0 0
      %3513 = vmatprep.mubr.bf16.mxu0 0
      %3514 = vmatmul.mubr.bf16.gmra.mrb[0].mxu0 %v3431
      %v3515 = vpop.f32.mrb[0].mxu0
      %v3516 = vadd.f32 0.0, %v3515
      %v3517 = vpop.f32.mrb[0].mxu0
      %v3518 = vpop.f32.mrb[0].mxu0
      %v3519 = vadd.f32 0.0, %v3518
      %v3520 = vpop.f32.mrb[0].mxu0
      %3521 = vmatprep.mubr.bf16.mxu0 0
      %3522 = vmatmul.mubr.bf16.gmra.mrb[0].mxu0 %v3434
      %v3523 = vpop.f32.mrb[0].mxu0
      %v3524 = vadd.f32 0.0, %v3523
      %v3525 = vpop.f32.mrb[0].mxu0
      %v3526 = vpop.f32.mrb[0].mxu0
      %v3527 = vadd.f32 0.0, %v3526
      %v3528 = vpop.f32.mrb[0].mxu0
      %3529 = vmatprep.mubr.bf16.mxu0 0
      %3530 = vmatmul.mubr.bf16.gmra.mrb[0].mxu0 %v3437
      %v3531 = vpop.f32.mrb[0].mxu0
      %v3532 = vadd.f32 0.0, %v3531
      %v3533 = vpop.f32.mrb[0].mxu0
      %v3534 = vpop.f32.mrb[0].mxu0
      %v3535 = vadd.f32 0.0, %v3534
      %v3536 = vpop.f32.mrb[0].mxu0
      %3537 = vmatprep.mubr.bf16.mxu0 0
      %3538 = vmatmul.mubr.bf16.gmra.mrb[0].mxu0 %v3440
      %v3539 = vpop.f32.mrb[0].mxu0
      %v3540 = vadd.f32 0.0, %v3539
      %v3541 = vpop.f32.mrb[0].mxu0
      %v3542 = vpop.f32.mrb[0].mxu0
      %v3543 = vadd.f32 0.0, %v3542
      %v3544 = vpop.f32.mrb[0].mxu0
      %3545 = vmatprep.mubr.bf16.mxu0 0
      %3546 = vmatmul.mubr.bf16.gmra.mrb[0].mxu0 %v3443
      %v3547 = vpop.f32.mrb[0].mxu0
      %v3548 = vadd.f32 0.0, %v3547
      %v3549 = vpop.f32.mrb[0].mxu0
      %v3550 = vpop.f32.mrb[0].mxu0
      %v3551 = vadd.f32 0.0, %v3550
      %v3552 = vpop.f32.mrb[0].mxu0
      %3553 = vmatprep.mubr.bf16.mxu0 0
      %3554 = vmatmul.mubr.bf16.gmra.mrb[0].mxu0 %v3446
      %v3555 = vpop.f32.mrb[0].mxu0
      %v3556 = vadd.f32 0.0, %v3555
      %v3557 = vpop.f32.mrb[0].mxu0
      %v3558 = vpop.f32.mrb[0].mxu0
      %v3559 = vadd.f32 0.0, %v3558
      %v3560 = vpop.f32.mrb[0].mxu0
      %3561 = vmatprep.mubr.bf16.mxu0 0
      %3562 = vmatmul.mubr.bf16.gmra.mrb[0].mxu0 %v3449
      %v3563 = vpop.f32.mrb[0].mxu0
      %v3564 = vadd.f32 0.0, %v3563
      %v3565 = vpop.f32.mrb[0].mxu0
      %v3566 = vpop.f32.mrb[0].mxu0
      %v3567 = vadd.f32 0.0, %v3566
      %v3568 = vpop.f32.mrb[0].mxu0
      %3569 = vmatprep.mubr.bf16.mxu0 0
      %3570 = vmatmul.mubr.bf16.gmra.mrb[0].mxu0 %v3452
      %v3571 = vpop.f32.mrb[0].mxu0
      %v3572 = vadd.f32 0.0, %v3571
      %v3573 = vpop.f32.mrb[0].mxu0
      %v3574 = vpop.f32.mrb[0].mxu0
      %v3575 = vadd.f32 0.0, %v3574
      %v3576 = vpop.f32.mrb[0].mxu0
      %3577 = vmatprep.mubr.bf16.mxu0 0
      %3578 = vmatmul.mubr.bf16.gmra.mrb[0].mxu0 %v3455
      %v3579 = vpop.f32.mrb[0].mxu0
      %v3580 = vadd.f32 0.0, %v3579
      %v3581 = vpop.f32.mrb[0].mxu0
      %v3582 = vpop.f32.mrb[0].mxu0
      %v3583 = vadd.f32 0.0, %v3582
      %v3584 = vpop.f32.mrb[0].mxu0
      %3585 = vmatprep.mubr.bf16.mxu0 0
      %3586 = vmatmul.mubr.bf16.gmra.mrb[0].mxu0 %v3458
      %v3587 = vpop.f32.mrb[0].mxu0
      %v3588 = vadd.f32 0.0, %v3587
      %v3589 = vpop.f32.mrb[0].mxu0
      %v3590 = vpop.f32.mrb[0].mxu0
      %v3591 = vadd.f32 0.0, %v3590
      %v3592 = vpop.f32.mrb[0].mxu0
      %3593 = vmatprep.mubr.bf16.mxu0 0
      %3594 = vmatmul.mubr.bf16.gmra.mrb[0].mxu0 %v3461
      %v3595 = vpop.f32.mrb[0].mxu0
      %v3596 = vadd.f32 0.0, %v3595
      %v3597 = vpop.f32.mrb[0].mxu0
      %v3598 = vpop.f32.mrb[0].mxu0
      %v3599 = vadd.f32 0.0, %v3598
      %v3600 = vpop.f32.mrb[0].mxu0
      %3601 = vmatprep.mubr.bf16.mxu0 0
      %3602 = vmatmul.mubr.bf16.gmra.mrb[0].mxu0 %v3464
      %v3603 = vpop.f32.mrb[0].mxu0
      %v3604 = vadd.f32 0.0, %v3603
      %v3605 = vpop.f32.mrb[0].mxu0
      %v3606 = vpop.f32.mrb[0].mxu0
      %v3607 = vadd.f32 0.0, %v3606
      %v3608 = vpop.f32.mrb[0].mxu0
      %3609 = vmatprep.mubr.bf16.mxu0 0
      %3610 = vmatmul.mubr.bf16.gmra.mrb[0].mxu0 %v3467
      %v3611 = vpop.f32.mrb[0].mxu0
      %v3612 = vadd.f32 0.0, %v3611
      %v3613 = vpop.f32.mrb[0].mxu0
      %v3614 = vpop.f32.mrb[0].mxu0
      %v3615 = vadd.f32 0.0, %v3614
      %v3616 = vpop.f32.mrb[0].mxu0
      %3617 = vmatprep.mubr.bf16.mxu0 0
      %3618 = vmatmul.mubr.bf16.gmra.mrb[0].mxu0 %v3470
      %v3619 = vpop.f32.mrb[0].mxu0
      %v3620 = vadd.f32 0.0, %v3619
      %v3621 = vpop.f32.mrb[0].mxu0
      %v3622 = vpop.f32.mrb[0].mxu0
      %v3623 = vadd.f32 0.0, %v3622
      %v3624 = vpop.f32.mrb[0].mxu0
      %3625 = vmatprep.mubr.bf16.mxu0 0
      %3626 = vmatmul.mubr.bf16.gmra.mrb[0].mxu0 %v3473
      %v3627 = vpop.f32.mrb[0].mxu0
      %v3628 = vadd.f32 0.0, %v3627
      %v3629 = vpop.f32.mrb[0].mxu0
      %v3630 = vpop.f32.mrb[0].mxu0
      %v3631 = vadd.f32 0.0, %v3630
      %v3632 = vpop.f32.mrb[0].mxu0
      %3633 = vmatprep.mubr.bf16.mxu0 0
      %3634 = vmatmul.mubr.bf16.gmra.mrb[0].mxu0 %v3476
      %v3635 = vpop.f32.mrb[0].mxu0
      %v3636 = vadd.f32 0.0, %v3635
      %v3637 = vpop.f32.mrb[0].mxu0
      %v3638 = vpop.f32.mrb[0].mxu0
      %v3639 = vadd.f32 0.0, %v3638
      %v3640 = vpop.f32.mrb[0].mxu0
      %3641 = vdwg.mxu0
      %v3642 = vadd.f32 %v3342, %v3516
      %v3643 = vadd.f32 %v3343, %v3519
      %v3644 = vadd.f32 %v3344, %v3524
      %v3645 = vadd.f32 %v3345, %v3527
      %v3646 = vadd.f32 %v3346, %v3532
      %v3647 = vadd.f32 %v3347, %v3535
      %v3648 = vadd.f32 %v3348, %v3540
      %v3649 = vadd.f32 %v3349, %v3543
      %v3650 = vadd.f32 %v3350, %v3548
      %v3651 = vadd.f32 %v3351, %v3551
      %v3652 = vadd.f32 %v3352, %v3556
      %v3653 = vadd.f32 %v3353, %v3559
      %v3654 = vadd.f32 %v3354, %v3564
      %v3655 = vadd.f32 %v3355, %v3567
      %v3656 = vadd.f32 %v3356, %v3572
      %v3657 = vadd.f32 %v3357, %v3575
      %v3658 = vadd.f32 %v3358, %v3580
      %v3659 = vadd.f32 %v3359, %v3583
      %v3660 = vadd.f32 %v3360, %v3588
      %v3661 = vadd.f32 %v3361, %v3591
      %v3662 = vadd.f32 %v3362, %v3596
      %v3663 = vadd.f32 %v3363, %v3599
      %v3664 = vadd.f32 %v3364, %v3604
      %v3665 = vadd.f32 %v3365, %v3607
      %v3666 = vadd.f32 %v3366, %v3612
      %v3667 = vadd.f32 %v3367, %v3615
      %v3668 = vadd.f32 %v3368, %v3620
      %v3669 = vadd.f32 %v3369, %v3623
      %v3670 = vadd.f32 %v3370, %v3628
      %v3671 = vadd.f32 %v3371, %v3631
      %v3672 = vadd.f32 %v3372, %v3636
      %v3673 = vadd.f32 %v3373, %v3639
      %s3674 = scalar_lea.vmem %s2, 8
      %v3675 = vld [vmem:[%s3674] sm:$0x3]
      %v3677 = vsel %vm205, %v3426, 0
      %v3680 = vsel %vm421, %v3675, 0
      %3682 = vmatprep.subr.bf16.mxu0 0
      %3683 = vmatpush1.bf16.msra.mxu0 %v3680
      %3684 = vmatprep.subr.bf16.mxu0 0
      %3685 = vmatpush1.bf16.msra.mxu0 0
      %3686 = vmatprep.subr.bf16.mxu0 0
      %3687 = vmatpush1.bf16.msra.mxu0 0
      %3688 = vmatprep.subr.bf16.mxu0 0
      %3689 = vmatpush1.bf16.msra.mxu0 0
      %3690 = vmatprep.subr.bf16.mxu0 0
      %3691 = vmatpush1.bf16.msra.mxu0 0
      %3692 = vmatprep.subr.bf16.mxu0 0
      %3693 = vmatpush1.bf16.msra.mxu0 0
      %3694 = vmatprep.subr.bf16.mxu0 0
      %3695 = vmatpush1.bf16.msra.mxu0 0
      %3696 = vmatprep.subr.bf16.mxu0 0
      %3697 = vmatpush1.bf16.msra.mxu0 0
      %3698 = vmatprep.subr.bf16.mxu0 0
      %3699 = vmatpush1.bf16.msra.mxu0 0
      %3700 = vmatprep.subr.bf16.mxu0 0
      %3701 = vmatpush1.bf16.msra.mxu0 0
      %3702 = vmatprep.subr.bf16.mxu0 0
      %3703 = vmatpush1.bf16.msra.mxu0 0
      %3704 = vmatprep.subr.bf16.mxu0 0
      %3705 = vmatpush1.bf16.msra.mxu0 0
      %3706 = vmatprep.subr.bf16.mxu0 0
      %3707 = vmatpush1.bf16.msra.mxu0 0
      %3708 = vmatprep.subr.bf16.mxu0 0
      %3709 = vmatpush1.bf16.msra.mxu0 0
      %3710 = vmatprep.subr.bf16.mxu0 0
      %3711 = vmatpush1.bf16.msra.mxu0 0
      %3712 = vmatprep.subr.bf16.mxu0 0
      %3713 = vmatpush1.bf16.msra.mxu0 0
      %3714 = vmatprep.mubr.bf16.mxu0 0
      %3715 = vmatmul.mubr.bf16.gmra.mrb[0].mxu0 %v3434
      %v3716 = vpop.f32.mrb[0].mxu0
      %v3717 = vadd.f32 0.0, %v3716
      %v3718 = vpop.f32.mrb[0].mxu0
      %v3719 = vpop.f32.mrb[0].mxu0
      %v3720 = vadd.f32 0.0, %v3719
      %v3721 = vpop.f32.mrb[0].mxu0
      %3722 = vmatprep.mubr.bf16.mxu0 0
      %3723 = vmatmul.mubr.bf16.gmra.mrb[0].mxu0 %v3437
      %v3724 = vpop.f32.mrb[0].mxu0
      %v3725 = vadd.f32 0.0, %v3724
      %v3726 = vpop.f32.mrb[0].mxu0
      %v3727 = vpop.f32.mrb[0].mxu0
      %v3728 = vadd.f32 0.0, %v3727
      %v3729 = vpop.f32.mrb[0].mxu0
      %3730 = vmatprep.mubr.bf16.mxu0 0
      %3731 = vmatmul.mubr.bf16.gmra.mrb[0].mxu0 %v3440
      %v3732 = vpop.f32.mrb[0].mxu0
      %v3733 = vadd.f32 0.0, %v3732
      %v3734 = vpop.f32.mrb[0].mxu0
      %v3735 = vpop.f32.mrb[0].mxu0
      %v3736 = vadd.f32 0.0, %v3735
      %v3737 = vpop.f32.mrb[0].mxu0
      %3738 = vmatprep.mubr.bf16.mxu0 0
      %3739 = vmatmul.mubr.bf16.gmra.mrb[0].mxu0 %v3443
      %v3740 = vpop.f32.mrb[0].mxu0
      %v3741 = vadd.f32 0.0, %v3740
      %v3742 = vpop.f32.mrb[0].mxu0
      %v3743 = vpop.f32.mrb[0].mxu0
      %v3744 = vadd.f32 0.0, %v3743
      %v3745 = vpop.f32.mrb[0].mxu0
      %3746 = vmatprep.mubr.bf16.mxu0 0
      %3747 = vmatmul.mubr.bf16.gmra.mrb[0].mxu0 %v3446
      %v3748 = vpop.f32.mrb[0].mxu0
      %v3749 = vadd.f32 0.0, %v3748
      %v3750 = vpop.f32.mrb[0].mxu0
      %v3751 = vpop.f32.mrb[0].mxu0
      %v3752 = vadd.f32 0.0, %v3751
      %v3753 = vpop.f32.mrb[0].mxu0
      %3754 = vmatprep.mubr.bf16.mxu0 0
      %3755 = vmatmul.mubr.bf16.gmra.mrb[0].mxu0 %v3449
      %v3756 = vpop.f32.mrb[0].mxu0
      %v3757 = vadd.f32 0.0, %v3756
      %v3758 = vpop.f32.mrb[0].mxu0
      %v3759 = vpop.f32.mrb[0].mxu0
      %v3760 = vadd.f32 0.0, %v3759
      %v3761 = vpop.f32.mrb[0].mxu0
      %3762 = vmatprep.mubr.bf16.mxu0 0
      %3763 = vmatmul.mubr.bf16.gmra.mrb[0].mxu0 %v3452
      %v3764 = vpop.f32.mrb[0].mxu0
      %v3765 = vadd.f32 0.0, %v3764
      %v3766 = vpop.f32.mrb[0].mxu0
      %v3767 = vpop.f32.mrb[0].mxu0
      %v3768 = vadd.f32 0.0, %v3767
      %v3769 = vpop.f32.mrb[0].mxu0
      %3770 = vmatprep.mubr.bf16.mxu0 0
      %3771 = vmatmul.mubr.bf16.gmra.mrb[0].mxu0 %v3455
      %v3772 = vpop.f32.mrb[0].mxu0
      %v3773 = vadd.f32 0.0, %v3772
      %v3774 = vpop.f32.mrb[0].mxu0
      %v3775 = vpop.f32.mrb[0].mxu0
      %v3776 = vadd.f32 0.0, %v3775
      %v3777 = vpop.f32.mrb[0].mxu0
      %3778 = vmatprep.mubr.bf16.mxu0 0
      %3779 = vmatmul.mubr.bf16.gmra.mrb[0].mxu0 %v3458
      %v3780 = vpop.f32.mrb[0].mxu0
      %v3781 = vadd.f32 0.0, %v3780
      %v3782 = vpop.f32.mrb[0].mxu0
      %v3783 = vpop.f32.mrb[0].mxu0
      %v3784 = vadd.f32 0.0, %v3783
      %v3785 = vpop.f32.mrb[0].mxu0
      %3786 = vmatprep.mubr.bf16.mxu0 0
      %3787 = vmatmul.mubr.bf16.gmra.mrb[0].mxu0 %v3461
      %v3788 = vpop.f32.mrb[0].mxu0
      %v3789 = vadd.f32 0.0, %v3788
      %v3790 = vpop.f32.mrb[0].mxu0
      %v3791 = vpop.f32.mrb[0].mxu0
      %v3792 = vadd.f32 0.0, %v3791
      %v3793 = vpop.f32.mrb[0].mxu0
      %3794 = vmatprep.mubr.bf16.mxu0 0
      %3795 = vmatmul.mubr.bf16.gmra.mrb[0].mxu0 %v3464
      %v3796 = vpop.f32.mrb[0].mxu0
      %v3797 = vadd.f32 0.0, %v3796
      %v3798 = vpop.f32.mrb[0].mxu0
      %v3799 = vpop.f32.mrb[0].mxu0
      %v3800 = vadd.f32 0.0, %v3799
      %v3801 = vpop.f32.mrb[0].mxu0
      %3802 = vmatprep.mubr.bf16.mxu0 0
      %3803 = vmatmul.mubr.bf16.gmra.mrb[0].mxu0 %v3467
      %v3804 = vpop.f32.mrb[0].mxu0
      %v3805 = vadd.f32 0.0, %v3804
      %v3806 = vpop.f32.mrb[0].mxu0
      %v3807 = vpop.f32.mrb[0].mxu0
      %v3808 = vadd.f32 0.0, %v3807
      %v3809 = vpop.f32.mrb[0].mxu0
      %3810 = vmatprep.mubr.bf16.mxu0 0
      %3811 = vmatmul.mubr.bf16.gmra.mrb[0].mxu0 %v3470
      %v3812 = vpop.f32.mrb[0].mxu0
      %v3813 = vadd.f32 0.0, %v3812
      %v3814 = vpop.f32.mrb[0].mxu0
      %v3815 = vpop.f32.mrb[0].mxu0
      %v3816 = vadd.f32 0.0, %v3815
      %v3817 = vpop.f32.mrb[0].mxu0
      %3818 = vmatprep.mubr.bf16.mxu0 0
      %3819 = vmatmul.mubr.bf16.gmra.mrb[0].mxu0 %v3473
      %v3820 = vpop.f32.mrb[0].mxu0
      %v3821 = vadd.f32 0.0, %v3820
      %v3822 = vpop.f32.mrb[0].mxu0
      %v3823 = vpop.f32.mrb[0].mxu0
      %v3824 = vadd.f32 0.0, %v3823
      %v3825 = vpop.f32.mrb[0].mxu0
      %3826 = vmatprep.mubr.bf16.mxu0 0
      %3827 = vmatmul.mubr.bf16.gmra.mrb[0].mxu0 %v3476
      %v3828 = vpop.f32.mrb[0].mxu0
      %v3829 = vadd.f32 0.0, %v3828
      %v3830 = vpop.f32.mrb[0].mxu0
      %v3831 = vpop.f32.mrb[0].mxu0
      %v3832 = vadd.f32 0.0, %v3831
      %v3833 = vpop.f32.mrb[0].mxu0
      %3834 = vmatprep.mubr.bf16.mxu0 0
      %3835 = vmatmul.mubr.bf16.gmra.mrb[0].mxu0 %v3677
      %v3836 = vpop.f32.mrb[0].mxu0
      %v3837 = vadd.f32 0.0, %v3836
      %v3838 = vpop.f32.mrb[0].mxu0
      %v3839 = vpop.f32.mrb[0].mxu0
      %v3840 = vadd.f32 0.0, %v3839
      %v3841 = vpop.f32.mrb[0].mxu0
      %3842 = vdwg.mxu0
      %v3843 = vadd.f32 %v3642, %v3717
      %v3844 = vadd.f32 %v3643, %v3720
      %v3845 = vadd.f32 %v3644, %v3725
      %v3846 = vadd.f32 %v3645, %v3728
      %v3847 = vadd.f32 %v3646, %v3733
      %v3848 = vadd.f32 %v3647, %v3736
      %v3849 = vadd.f32 %v3648, %v3741
      %v3850 = vadd.f32 %v3649, %v3744
      %v3851 = vadd.f32 %v3650, %v3749
      %v3852 = vadd.f32 %v3651, %v3752
      %v3853 = vadd.f32 %v3652, %v3757
      %v3854 = vadd.f32 %v3653, %v3760
      %v3855 = vadd.f32 %v3654, %v3765
      %v3856 = vadd.f32 %v3655, %v3768
      %v3857 = vadd.f32 %v3656, %v3773
      %v3858 = vadd.f32 %v3657, %v3776
      %v3859 = vadd.f32 %v3658, %v3781
      %v3860 = vadd.f32 %v3659, %v3784
      %v3861 = vadd.f32 %v3660, %v3789
      %v3862 = vadd.f32 %v3661, %v3792
      %v3863 = vadd.f32 %v3662, %v3797
      %v3864 = vadd.f32 %v3663, %v3800
      %v3865 = vadd.f32 %v3664, %v3805
      %v3866 = vadd.f32 %v3665, %v3808
      %v3867 = vadd.f32 %v3666, %v3813
      %v3868 = vadd.f32 %v3667, %v3816
      %v3869 = vadd.f32 %v3668, %v3821
      %v3870 = vadd.f32 %v3669, %v3824
      %v3871 = vadd.f32 %v3670, %v3829
      %v3872 = vadd.f32 %v3671, %v3832
      %v3873 = vadd.f32 %v3672, %v3837
      %v3874 = vadd.f32 %v3673, %v3840
      %s3875 = scalar_lea.vmem %s2, 14
      %v3876 = vld [vmem:[%s3875] sm:$0x3]
      %v3878 = vsel %vm205, %v3427, 0
      %v3881 = vsel %vm421, %v3876, 0
      %3883 = vmatprep.subr.bf16.mxu0 0
      %3884 = vmatpush1.bf16.msra.mxu0 %v3881
      %3885 = vmatprep.subr.bf16.mxu0 0
      %3886 = vmatpush1.bf16.msra.mxu0 0
      %3887 = vmatprep.subr.bf16.mxu0 0
      %3888 = vmatpush1.bf16.msra.mxu0 0
      %3889 = vmatprep.subr.bf16.mxu0 0
      %3890 = vmatpush1.bf16.msra.mxu0 0
      %3891 = vmatprep.subr.bf16.mxu0 0
      %3892 = vmatpush1.bf16.msra.mxu0 0
      %3893 = vmatprep.subr.bf16.mxu0 0
      %3894 = vmatpush1.bf16.msra.mxu0 0
      %3895 = vmatprep.subr.bf16.mxu0 0
      %3896 = vmatpush1.bf16.msra.mxu0 0
      %3897 = vmatprep.subr.bf16.mxu0 0
      %3898 = vmatpush1.bf16.msra.mxu0 0
      %3899 = vmatprep.subr.bf16.mxu0 0
      %3900 = vmatpush1.bf16.msra.mxu0 0
      %3901 = vmatprep.subr.bf16.mxu0 0
      %3902 = vmatpush1.bf16.msra.mxu0 0
      %3903 = vmatprep.subr.bf16.mxu0 0
      %3904 = vmatpush1.bf16.msra.mxu0 0
      %3905 = vmatprep.subr.bf16.mxu0 0
      %3906 = vmatpush1.bf16.msra.mxu0 0
      %3907 = vmatprep.subr.bf16.mxu0 0
      %3908 = vmatpush1.bf16.msra.mxu0 0
      %3909 = vmatprep.subr.bf16.mxu0 0
      %3910 = vmatpush1.bf16.msra.mxu0 0
      %3911 = vmatprep.subr.bf16.mxu0 0
      %3912 = vmatpush1.bf16.msra.mxu0 0
      %3913 = vmatprep.subr.bf16.mxu0 0
      %3914 = vmatpush1.bf16.msra.mxu0 0
      %3915 = vmatprep.mubr.bf16.mxu0 0
      %3916 = vmatmul.mubr.bf16.gmra.mrb[0].mxu0 %v3437
      %v3917 = vpop.f32.mrb[0].mxu0
      %v3918 = vadd.f32 0.0, %v3917
      %v3919 = vpop.f32.mrb[0].mxu0
      %v3920 = vpop.f32.mrb[0].mxu0
      %v3921 = vadd.f32 0.0, %v3920
      %v3922 = vpop.f32.mrb[0].mxu0
      %3923 = vmatprep.mubr.bf16.mxu0 0
      %3924 = vmatmul.mubr.bf16.gmra.mrb[0].mxu0 %v3440
      %v3925 = vpop.f32.mrb[0].mxu0
      %v3926 = vadd.f32 0.0, %v3925
      %v3927 = vpop.f32.mrb[0].mxu0
      %v3928 = vpop.f32.mrb[0].mxu0
      %v3929 = vadd.f32 0.0, %v3928
      %v3930 = vpop.f32.mrb[0].mxu0
      %3931 = vmatprep.mubr.bf16.mxu0 0
      %3932 = vmatmul.mubr.bf16.gmra.mrb[0].mxu0 %v3443
      %v3933 = vpop.f32.mrb[0].mxu0
      %v3934 = vadd.f32 0.0, %v3933
      %v3935 = vpop.f32.mrb[0].mxu0
      %v3936 = vpop.f32.mrb[0].mxu0
      %v3937 = vadd.f32 0.0, %v3936
      %v3938 = vpop.f32.mrb[0].mxu0
      %3939 = vmatprep.mubr.bf16.mxu0 0
      %3940 = vmatmul.mubr.bf16.gmra.mrb[0].mxu0 %v3446
      %v3941 = vpop.f32.mrb[0].mxu0
      %v3942 = vadd.f32 0.0, %v3941
      %v3943 = vpop.f32.mrb[0].mxu0
      %v3944 = vpop.f32.mrb[0].mxu0
      %v3945 = vadd.f32 0.0, %v3944
      %v3946 = vpop.f32.mrb[0].mxu0
      %3947 = vmatprep.mubr.bf16.mxu0 0
      %3948 = vmatmul.mubr.bf16.gmra.mrb[0].mxu0 %v3449
      %v3949 = vpop.f32.mrb[0].mxu0
      %v3950 = vadd.f32 0.0, %v3949
      %v3951 = vpop.f32.mrb[0].mxu0
      %v3952 = vpop.f32.mrb[0].mxu0
      %v3953 = vadd.f32 0.0, %v3952
      %v3954 = vpop.f32.mrb[0].mxu0
      %3955 = vmatprep.mubr.bf16.mxu0 0
      %3956 = vmatmul.mubr.bf16.gmra.mrb[0].mxu0 %v3452
      %v3957 = vpop.f32.mrb[0].mxu0
      %v3958 = vadd.f32 0.0, %v3957
      %v3959 = vpop.f32.mrb[0].mxu0
      %v3960 = vpop.f32.mrb[0].mxu0
      %v3961 = vadd.f32 0.0, %v3960
      %v3962 = vpop.f32.mrb[0].mxu0
      %3963 = vmatprep.mubr.bf16.mxu0 0
      %3964 = vmatmul.mubr.bf16.gmra.mrb[0].mxu0 %v3455
      %v3965 = vpop.f32.mrb[0].mxu0
      %v3966 = vadd.f32 0.0, %v3965
      %v3967 = vpop.f32.mrb[0].mxu0
      %v3968 = vpop.f32.mrb[0].mxu0
      %v3969 = vadd.f32 0.0, %v3968
      %v3970 = vpop.f32.mrb[0].mxu0
      %3971 = vmatprep.mubr.bf16.mxu0 0
      %3972 = vmatmul.mubr.bf16.gmra.mrb[0].mxu0 %v3458
      %v3973 = vpop.f32.mrb[0].mxu0
      %v3974 = vadd.f32 0.0, %v3973
      %v3975 = vpop.f32.mrb[0].mxu0
      %v3976 = vpop.f32.mrb[0].mxu0
      %v3977 = vadd.f32 0.0, %v3976
      %v3978 = vpop.f32.mrb[0].mxu0
      %3979 = vmatprep.mubr.bf16.mxu0 0
      %3980 = vmatmul.mubr.bf16.gmra.mrb[0].mxu0 %v3461
      %v3981 = vpop.f32.mrb[0].mxu0
      %v3982 = vadd.f32 0.0, %v3981
      %v3983 = vpop.f32.mrb[0].mxu0
      %v3984 = vpop.f32.mrb[0].mxu0
      %v3985 = vadd.f32 0.0, %v3984
      %v3986 = vpop.f32.mrb[0].mxu0
      %3987 = vmatprep.mubr.bf16.mxu0 0
      %3988 = vmatmul.mubr.bf16.gmra.mrb[0].mxu0 %v3464
      %v3989 = vpop.f32.mrb[0].mxu0
      %v3990 = vadd.f32 0.0, %v3989
      %v3991 = vpop.f32.mrb[0].mxu0
      %v3992 = vpop.f32.mrb[0].mxu0
      %v3993 = vadd.f32 0.0, %v3992
      %v3994 = vpop.f32.mrb[0].mxu0
      %3995 = vmatprep.mubr.bf16.mxu0 0
      %3996 = vmatmul.mubr.bf16.gmra.mrb[0].mxu0 %v3467
      %v3997 = vpop.f32.mrb[0].mxu0
      %v3998 = vadd.f32 0.0, %v3997
      %v3999 = vpop.f32.mrb[0].mxu0
      %v4000 = vpop.f32.mrb[0].mxu0
      %v4001 = vadd.f32 0.0, %v4000
      %v4002 = vpop.f32.mrb[0].mxu0
      %4003 = vmatprep.mubr.bf16.mxu0 0
      %4004 = vmatmul.mubr.bf16.gmra.mrb[0].mxu0 %v3470
      %v4005 = vpop.f32.mrb[0].mxu0
      %v4006 = vadd.f32 0.0, %v4005
      %v4007 = vpop.f32.mrb[0].mxu0
      %v4008 = vpop.f32.mrb[0].mxu0
      %v4009 = vadd.f32 0.0, %v4008
      %v4010 = vpop.f32.mrb[0].mxu0
      %4011 = vmatprep.mubr.bf16.mxu0 0
      %4012 = vmatmul.mubr.bf16.gmra.mrb[0].mxu0 %v3473
      %v4013 = vpop.f32.mrb[0].mxu0
      %v4014 = vadd.f32 0.0, %v4013
      %v4015 = vpop.f32.mrb[0].mxu0
      %v4016 = vpop.f32.mrb[0].mxu0
      %v4017 = vadd.f32 0.0, %v4016
      %v4018 = vpop.f32.mrb[0].mxu0
      %4019 = vmatprep.mubr.bf16.mxu0 0
      %4020 = vmatmul.mubr.bf16.gmra.mrb[0].mxu0 %v3476
      %v4021 = vpop.f32.mrb[0].mxu0
      %v4022 = vadd.f32 0.0, %v4021
      %v4023 = vpop.f32.mrb[0].mxu0
      %v4024 = vpop.f32.mrb[0].mxu0
      %v4025 = vadd.f32 0.0, %v4024
      %v4026 = vpop.f32.mrb[0].mxu0
      %4027 = vmatprep.mubr.bf16.mxu0 0
      %4028 = vmatmul.mubr.bf16.gmra.mrb[0].mxu0 %v3677
      %v4029 = vpop.f32.mrb[0].mxu0
      %v4030 = vadd.f32 0.0, %v4029
      %v4031 = vpop.f32.mrb[0].mxu0
      %v4032 = vpop.f32.mrb[0].mxu0
      %v4033 = vadd.f32 0.0, %v4032
      %v4034 = vpop.f32.mrb[0].mxu0
      %4035 = vmatprep.mubr.bf16.mxu0 0
      %4036 = vmatmul.mubr.bf16.gmra.mrb[0].mxu0 %v3878
      %v4037 = vpop.f32.mrb[0].mxu0
      %v4038 = vadd.f32 0.0, %v4037
      %v4039 = vpop.f32.mrb[0].mxu0
      %v4040 = vpop.f32.mrb[0].mxu0
      %v4041 = vadd.f32 0.0, %v4040
      %v4042 = vpop.f32.mrb[0].mxu0
      %4043 = vdwg.mxu0
      %v4044 = vadd.f32 %v3843, %v3918
      %v4045 = vadd.f32 %v3844, %v3921
      %v4046 = vadd.f32 %v3845, %v3926
      %v4047 = vadd.f32 %v3846, %v3929
      %v4048 = vadd.f32 %v3847, %v3934
      %v4049 = vadd.f32 %v3848, %v3937
      %v4050 = vadd.f32 %v3849, %v3942
      %v4051 = vadd.f32 %v3850, %v3945
      %v4052 = vadd.f32 %v3851, %v3950
      %v4053 = vadd.f32 %v3852, %v3953
      %v4054 = vadd.f32 %v3853, %v3958
      %v4055 = vadd.f32 %v3854, %v3961
      %v4056 = vadd.f32 %v3855, %v3966
      %v4057 = vadd.f32 %v3856, %v3969
      %v4058 = vadd.f32 %v3857, %v3974
      %v4059 = vadd.f32 %v3858, %v3977
      %v4060 = vadd.f32 %v3859, %v3982
      %v4061 = vadd.f32 %v3860, %v3985
      %v4062 = vadd.f32 %v3861, %v3990
      %v4063 = vadd.f32 %v3862, %v3993
      %v4064 = vadd.f32 %v3863, %v3998
      %v4065 = vadd.f32 %v3864, %v4001
      %v4066 = vadd.f32 %v3865, %v4006
      %v4067 = vadd.f32 %v3866, %v4009
      %v4068 = vadd.f32 %v3867, %v4014
      %v4069 = vadd.f32 %v3868, %v4017
      %v4070 = vadd.f32 %v3869, %v4022
      %v4071 = vadd.f32 %v3870, %v4025
      %v4072 = vadd.f32 %v3871, %v4030
      %v4073 = vadd.f32 %v3872, %v4033
      %v4074 = vadd.f32 %v3873, %v4038
      %v4075 = vadd.f32 %v3874, %v4041
      %v4076 = vld [vmem:[#allocation2 + $0x2] sm:$0xff]
      %v4077 = vld [vmem:[#allocation2 + $0xa] sm:$0xff]
      %v4078 = vld [vmem:[#allocation2 + $0x1a] sm:$0xff]
      %v4079 = vld [vmem:[#allocation2 + $0x22] sm:$0xff]
      %v4080 = vld [vmem:[#allocation2 + $0x32] sm:$0xff]
      %v4081 = vld [vmem:[#allocation2 + $0x3a] sm:$0xff]
      %v4082 = vld [vmem:[#allocation2 + $0x4a] sm:$0xff]
      %v4083 = vld [vmem:[#allocation2 + $0x52] sm:$0xff]
      %v4084 = vld [vmem:[#allocation2 + $0x62] sm:$0xff]
      %v4085 = vld [vmem:[#allocation2 + $0x6a] sm:$0xff]
      %v4086 = vld [vmem:[#allocation2 + $0x7a] sm:$0xff]
      %v4087 = vld [vmem:[#allocation2 + $0x82] sm:$0xff]
      %v4088 = vld [vmem:[#allocation2 + $0x92] sm:$0xff]
      %v4089 = vld [vmem:[#allocation2 + $0x9a] sm:$0xff]
      %v4090 = vld [vmem:[#allocation2 + $0xaa] sm:$0xff]
      %v4091 = vld [vmem:[#allocation2 + $0xb2] sm:$0xff]
      %v4092 = vld [vmem:[#allocation2 + $0xc2] sm:$0xff]
      %v4093 = vld [vmem:[#allocation2 + $0xca] sm:$0xff]
      %v4094 = vld [vmem:[#allocation2 + $0xda] sm:$0xff]
      %v4095 = vld [vmem:[#allocation2 + $0xe2] sm:$0xff]
      %v4096 = vld [vmem:[#allocation2 + $0xf2] sm:$0xff]
      %v4097 = vld [vmem:[#allocation2 + $0xfa] sm:$0xff]
      %v4098 = vld [vmem:[#allocation2 + $0x10a] sm:$0xff]
      %v4099 = vld [vmem:[#allocation2 + $0x112] sm:$0xff]
      %v4100 = vld [vmem:[#allocation2 + $0x122] sm:$0xff]
      %v4101 = vld [vmem:[#allocation2 + $0x12a] sm:$0xff]
      %v4102 = vld [vmem:[#allocation2 + $0x13a] sm:$0xff]
      %v4103 = vld [vmem:[#allocation2 + $0x142] sm:$0xff]
      %v4104 = vld [vmem:[#allocation2 + $0x152] sm:$0xff]
      %v4105 = vld [vmem:[#allocation2 + $0x15a] sm:$0xff]
      %v4106 = vld [vmem:[#allocation2 + $0x16a] sm:$0xff]
      %v4107 = vld [vmem:[#allocation2 + $0x172] sm:$0xff]
      %v4108 = vld [vmem:[#allocation2 + $0x182] sm:$0xff]
      %v4109 = vld [vmem:[#allocation2 + $0x18a] sm:$0xff]
      %v4110 = vld [vmem:[#allocation2 + $0x19a] sm:$0xff]
      %v4111 = vld [vmem:[#allocation2 + $0x1a2] sm:$0xff]
      %v4112 = vpack.c.bf16 %v4077, %v4076
      %v4113 = vpack.c.bf16 %v4079, %v4078
      %v4114 = vpack.c.bf16 %v4081, %v4080
      %v4115 = vpack.c.bf16 %v4083, %v4082
      %v4116 = vpack.c.bf16 %v4085, %v4084
      %v4117 = vpack.c.bf16 %v4087, %v4086
      %v4118 = vpack.c.bf16 %v4089, %v4088
      %v4119 = vpack.c.bf16 %v4091, %v4090
      %v4120 = vpack.c.bf16 %v4093, %v4092
      %v4121 = vpack.c.bf16 %v4095, %v4094
      %v4122 = vpack.c.bf16 %v4097, %v4096
      %v4123 = vpack.c.bf16 %v4099, %v4098
      %v4124 = vpack.c.bf16 %v4101, %v4100
      %v4125 = vpack.c.bf16 %v4103, %v4102
      %v4126 = vpack.c.bf16 %v4105, %v4104
      %v4127 = vpack.c.bf16 %v4107, %v4106
      %v4128 = vpack.c.bf16 %v4109, %v4108
      %v4129 = vpack.c.bf16 %v4111, %v4110
      %s4130 = scalar_lea.vmem %s2, 4
      %v4131 = vld [vmem:[%s4130] sm:$0x3]
      %v4133 = vsel %vm205, %v4112, 0
      %v4136 = vsel %vm205, %v4113, 0
      %v4139 = vsel %vm205, %v4114, 0
      %v4142 = vsel %vm205, %v4115, 0
      %v4145 = vsel %vm205, %v4116, 0
      %v4148 = vsel %vm205, %v4117, 0
      %v4151 = vsel %vm205, %v4118, 0
      %v4154 = vsel %vm205, %v4119, 0
      %v4157 = vsel %vm205, %v4120, 0
      %v4160 = vsel %vm205, %v4121, 0
      %v4163 = vsel %vm205, %v4122, 0
      %v4166 = vsel %vm205, %v4123, 0
      %v4169 = vsel %vm205, %v4124, 0
      %v4172 = vsel %vm205, %v4125, 0
      %v4175 = vsel %vm205, %v4126, 0
      %v4178 = vsel %vm205, %v4127, 0
      %v4181 = vsel %vm421, %v4131, 0
      %4183 = vmatprep.subr.bf16.mxu0 0
      %4184 = vmatpush1.bf16.msra.mxu0 %v4181
      %4185 = vmatprep.subr.bf16.mxu0 0
      %4186 = vmatpush1.bf16.msra.mxu0 0
      %4187 = vmatprep.subr.bf16.mxu0 0
      %4188 = vmatpush1.bf16.msra.mxu0 0
      %4189 = vmatprep.subr.bf16.mxu0 0
      %4190 = vmatpush1.bf16.msra.mxu0 0
      %4191 = vmatprep.subr.bf16.mxu0 0
      %4192 = vmatpush1.bf16.msra.mxu0 0
      %4193 = vmatprep.subr.bf16.mxu0 0
      %4194 = vmatpush1.bf16.msra.mxu0 0
      %4195 = vmatprep.subr.bf16.mxu0 0
      %4196 = vmatpush1.bf16.msra.mxu0 0
      %4197 = vmatprep.subr.bf16.mxu0 0
      %4198 = vmatpush1.bf16.msra.mxu0 0
      %4199 = vmatprep.subr.bf16.mxu0 0
      %4200 = vmatpush1.bf16.msra.mxu0 0
      %4201 = vmatprep.subr.bf16.mxu0 0
      %4202 = vmatpush1.bf16.msra.mxu0 0
      %4203 = vmatprep.subr.bf16.mxu0 0
      %4204 = vmatpush1.bf16.msra.mxu0 0
      %4205 = vmatprep.subr.bf16.mxu0 0
      %4206 = vmatpush1.bf16.msra.mxu0 0
      %4207 = vmatprep.subr.bf16.mxu0 0
      %4208 = vmatpush1.bf16.msra.mxu0 0
      %4209 = vmatprep.subr.bf16.mxu0 0
      %4210 = vmatpush1.bf16.msra.mxu0 0
      %4211 = vmatprep.subr.bf16.mxu0 0
      %4212 = vmatpush1.bf16.msra.mxu0 0
      %4213 = vmatprep.subr.bf16.mxu0 0
      %4214 = vmatpush1.bf16.msra.mxu0 0
      %4215 = vmatprep.mubr.bf16.mxu0 0
      %4216 = vmatmul.mubr.bf16.gmra.mrb[0].mxu0 %v4133
      %v4217 = vpop.f32.mrb[0].mxu0
      %v4218 = vadd.f32 0.0, %v4217
      %v4219 = vpop.f32.mrb[0].mxu0
      %v4220 = vpop.f32.mrb[0].mxu0
      %v4221 = vadd.f32 0.0, %v4220
      %v4222 = vpop.f32.mrb[0].mxu0
      %4223 = vmatprep.mubr.bf16.mxu0 0
      %4224 = vmatmul.mubr.bf16.gmra.mrb[0].mxu0 %v4136
      %v4225 = vpop.f32.mrb[0].mxu0
      %v4226 = vadd.f32 0.0, %v4225
      %v4227 = vpop.f32.mrb[0].mxu0
      %v4228 = vpop.f32.mrb[0].mxu0
      %v4229 = vadd.f32 0.0, %v4228
      %v4230 = vpop.f32.mrb[0].mxu0
      %4231 = vmatprep.mubr.bf16.mxu0 0
      %4232 = vmatmul.mubr.bf16.gmra.mrb[0].mxu0 %v4139
      %v4233 = vpop.f32.mrb[0].mxu0
      %v4234 = vadd.f32 0.0, %v4233
      %v4235 = vpop.f32.mrb[0].mxu0
      %v4236 = vpop.f32.mrb[0].mxu0
      %v4237 = vadd.f32 0.0, %v4236
      %v4238 = vpop.f32.mrb[0].mxu0
      %4239 = vmatprep.mubr.bf16.mxu0 0
      %4240 = vmatmul.mubr.bf16.gmra.mrb[0].mxu0 %v4142
      %v4241 = vpop.f32.mrb[0].mxu0
      %v4242 = vadd.f32 0.0, %v4241
      %v4243 = vpop.f32.mrb[0].mxu0
      %v4244 = vpop.f32.mrb[0].mxu0
      %v4245 = vadd.f32 0.0, %v4244
      %v4246 = vpop.f32.mrb[0].mxu0
      %4247 = vmatprep.mubr.bf16.mxu0 0
      %4248 = vmatmul.mubr.bf16.gmra.mrb[0].mxu0 %v4145
      %v4249 = vpop.f32.mrb[0].mxu0
      %v4250 = vadd.f32 0.0, %v4249
      %v4251 = vpop.f32.mrb[0].mxu0
      %v4252 = vpop.f32.mrb[0].mxu0
      %v4253 = vadd.f32 0.0, %v4252
      %v4254 = vpop.f32.mrb[0].mxu0
      %4255 = vmatprep.mubr.bf16.mxu0 0
      %4256 = vmatmul.mubr.bf16.gmra.mrb[0].mxu0 %v4148
      %v4257 = vpop.f32.mrb[0].mxu0
      %v4258 = vadd.f32 0.0, %v4257
      %v4259 = vpop.f32.mrb[0].mxu0
      %v4260 = vpop.f32.mrb[0].mxu0
      %v4261 = vadd.f32 0.0, %v4260
      %v4262 = vpop.f32.mrb[0].mxu0
      %4263 = vmatprep.mubr.bf16.mxu0 0
      %4264 = vmatmul.mubr.bf16.gmra.mrb[0].mxu0 %v4151
      %v4265 = vpop.f32.mrb[0].mxu0
      %v4266 = vadd.f32 0.0, %v4265
      %v4267 = vpop.f32.mrb[0].mxu0
      %v4268 = vpop.f32.mrb[0].mxu0
      %v4269 = vadd.f32 0.0, %v4268
      %v4270 = vpop.f32.mrb[0].mxu0
      %4271 = vmatprep.mubr.bf16.mxu0 0
      %4272 = vmatmul.mubr.bf16.gmra.mrb[0].mxu0 %v4154
      %v4273 = vpop.f32.mrb[0].mxu0
      %v4274 = vadd.f32 0.0, %v4273
      %v4275 = vpop.f32.mrb[0].mxu0
      %v4276 = vpop.f32.mrb[0].mxu0
      %v4277 = vadd.f32 0.0, %v4276
      %v4278 = vpop.f32.mrb[0].mxu0
      %4279 = vmatprep.mubr.bf16.mxu0 0
      %4280 = vmatmul.mubr.bf16.gmra.mrb[0].mxu0 %v4157
      %v4281 = vpop.f32.mrb[0].mxu0
      %v4282 = vadd.f32 0.0, %v4281
      %v4283 = vpop.f32.mrb[0].mxu0
      %v4284 = vpop.f32.mrb[0].mxu0
      %v4285 = vadd.f32 0.0, %v4284
      %v4286 = vpop.f32.mrb[0].mxu0
      %4287 = vmatprep.mubr.bf16.mxu0 0
      %4288 = vmatmul.mubr.bf16.gmra.mrb[0].mxu0 %v4160
      %v4289 = vpop.f32.mrb[0].mxu0
      %v4290 = vadd.f32 0.0, %v4289
      %v4291 = vpop.f32.mrb[0].mxu0
      %v4292 = vpop.f32.mrb[0].mxu0
      %v4293 = vadd.f32 0.0, %v4292
      %v4294 = vpop.f32.mrb[0].mxu0
      %4295 = vmatprep.mubr.bf16.mxu0 0
      %4296 = vmatmul.mubr.bf16.gmra.mrb[0].mxu0 %v4163
      %v4297 = vpop.f32.mrb[0].mxu0
      %v4298 = vadd.f32 0.0, %v4297
      %v4299 = vpop.f32.mrb[0].mxu0
      %v4300 = vpop.f32.mrb[0].mxu0
      %v4301 = vadd.f32 0.0, %v4300
      %v4302 = vpop.f32.mrb[0].mxu0
      %4303 = vmatprep.mubr.bf16.mxu0 0
      %4304 = vmatmul.mubr.bf16.gmra.mrb[0].mxu0 %v4166
      %v4305 = vpop.f32.mrb[0].mxu0
      %v4306 = vadd.f32 0.0, %v4305
      %v4307 = vpop.f32.mrb[0].mxu0
      %v4308 = vpop.f32.mrb[0].mxu0
      %v4309 = vadd.f32 0.0, %v4308
      %v4310 = vpop.f32.mrb[0].mxu0
      %4311 = vmatprep.mubr.bf16.mxu0 0
      %4312 = vmatmul.mubr.bf16.gmra.mrb[0].mxu0 %v4169
      %v4313 = vpop.f32.mrb[0].mxu0
      %v4314 = vadd.f32 0.0, %v4313
      %v4315 = vpop.f32.mrb[0].mxu0
      %v4316 = vpop.f32.mrb[0].mxu0
      %v4317 = vadd.f32 0.0, %v4316
      %v4318 = vpop.f32.mrb[0].mxu0
      %4319 = vmatprep.mubr.bf16.mxu0 0
      %4320 = vmatmul.mubr.bf16.gmra.mrb[0].mxu0 %v4172
      %v4321 = vpop.f32.mrb[0].mxu0
      %v4322 = vadd.f32 0.0, %v4321
      %v4323 = vpop.f32.mrb[0].mxu0
      %v4324 = vpop.f32.mrb[0].mxu0
      %v4325 = vadd.f32 0.0, %v4324
      %v4326 = vpop.f32.mrb[0].mxu0
      %4327 = vmatprep.mubr.bf16.mxu0 0
      %4328 = vmatmul.mubr.bf16.gmra.mrb[0].mxu0 %v4175
      %v4329 = vpop.f32.mrb[0].mxu0
      %v4330 = vadd.f32 0.0, %v4329
      %v4331 = vpop.f32.mrb[0].mxu0
      %v4332 = vpop.f32.mrb[0].mxu0
      %v4333 = vadd.f32 0.0, %v4332
      %v4334 = vpop.f32.mrb[0].mxu0
      %4335 = vmatprep.mubr.bf16.mxu0 0
      %4336 = vmatmul.mubr.bf16.gmra.mrb[0].mxu0 %v4178
      %v4337 = vpop.f32.mrb[0].mxu0
      %v4338 = vadd.f32 0.0, %v4337
      %v4339 = vpop.f32.mrb[0].mxu0
      %v4340 = vpop.f32.mrb[0].mxu0
      %v4341 = vadd.f32 0.0, %v4340
      %v4342 = vpop.f32.mrb[0].mxu0
      %4343 = vdwg.mxu0
      %v4344 = vadd.f32 %v4044, %v4218
      %v4345 = vadd.f32 %v4045, %v4221
      %v4346 = vadd.f32 %v4046, %v4226
      %v4347 = vadd.f32 %v4047, %v4229
      %v4348 = vadd.f32 %v4048, %v4234
      %v4349 = vadd.f32 %v4049, %v4237
      %v4350 = vadd.f32 %v4050, %v4242
      %v4351 = vadd.f32 %v4051, %v4245
      %v4352 = vadd.f32 %v4052, %v4250
      %v4353 = vadd.f32 %v4053, %v4253
      %v4354 = vadd.f32 %v4054, %v4258
      %v4355 = vadd.f32 %v4055, %v4261
      %v4356 = vadd.f32 %v4056, %v4266
      %v4357 = vadd.f32 %v4057, %v4269
      %v4358 = vadd.f32 %v4058, %v4274
      %v4359 = vadd.f32 %v4059, %v4277
      %v4360 = vadd.f32 %v4060, %v4282
      %v4361 = vadd.f32 %v4061, %v4285
      %v4362 = vadd.f32 %v4062, %v4290
      %v4363 = vadd.f32 %v4063, %v4293
      %v4364 = vadd.f32 %v4064, %v4298
      %v4365 = vadd.f32 %v4065, %v4301
      %v4366 = vadd.f32 %v4066, %v4306
      %v4367 = vadd.f32 %v4067, %v4309
      %v4368 = vadd.f32 %v4068, %v4314
      %v4369 = vadd.f32 %v4069, %v4317
      %v4370 = vadd.f32 %v4070, %v4322
      %v4371 = vadd.f32 %v4071, %v4325
      %v4372 = vadd.f32 %v4072, %v4330
      %v4373 = vadd.f32 %v4073, %v4333
      %v4374 = vadd.f32 %v4074, %v4338
      %v4375 = vadd.f32 %v4075, %v4341
      %s4376 = scalar_lea.vmem %s2, 10
      %v4377 = vld [vmem:[%s4376] sm:$0x3]
      %v4379 = vsel %vm205, %v4128, 0
      %v4382 = vsel %vm421, %v4377, 0
      %4384 = vmatprep.subr.bf16.mxu0 0
      %4385 = vmatpush1.bf16.msra.mxu0 %v4382
      %4386 = vmatprep.subr.bf16.mxu0 0
      %4387 = vmatpush1.bf16.msra.mxu0 0
      %4388 = vmatprep.subr.bf16.mxu0 0
      %4389 = vmatpush1.bf16.msra.mxu0 0
      %4390 = vmatprep.subr.bf16.mxu0 0
      %4391 = vmatpush1.bf16.msra.mxu0 0
      %4392 = vmatprep.subr.bf16.mxu0 0
      %4393 = vmatpush1.bf16.msra.mxu0 0
      %4394 = vmatprep.subr.bf16.mxu0 0
      %4395 = vmatpush1.bf16.msra.mxu0 0
      %4396 = vmatprep.subr.bf16.mxu0 0
      %4397 = vmatpush1.bf16.msra.mxu0 0
      %4398 = vmatprep.subr.bf16.mxu0 0
      %4399 = vmatpush1.bf16.msra.mxu0 0
      %4400 = vmatprep.subr.bf16.mxu0 0
      %4401 = vmatpush1.bf16.msra.mxu0 0
      %4402 = vmatprep.subr.bf16.mxu0 0
      %4403 = vmatpush1.bf16.msra.mxu0 0
      %4404 = vmatprep.subr.bf16.mxu0 0
      %4405 = vmatpush1.bf16.msra.mxu0 0
      %4406 = vmatprep.subr.bf16.mxu0 0
      %4407 = vmatpush1.bf16.msra.mxu0 0
      %4408 = vmatprep.subr.bf16.mxu0 0
      %4409 = vmatpush1.bf16.msra.mxu0 0
      %4410 = vmatprep.subr.bf16.mxu0 0
      %4411 = vmatpush1.bf16.msra.mxu0 0
      %4412 = vmatprep.subr.bf16.mxu0 0
      %4413 = vmatpush1.bf16.msra.mxu0 0
      %4414 = vmatprep.subr.bf16.mxu0 0
      %4415 = vmatpush1.bf16.msra.mxu0 0
      %4416 = vmatprep.mubr.bf16.mxu0 0
      %4417 = vmatmul.mubr.bf16.gmra.mrb[0].mxu0 %v4136
      %v4418 = vpop.f32.mrb[0].mxu0
      %v4419 = vadd.f32 0.0, %v4418
      %v4420 = vpop.f32.mrb[0].mxu0
      %v4421 = vpop.f32.mrb[0].mxu0
      %v4422 = vadd.f32 0.0, %v4421
      %v4423 = vpop.f32.mrb[0].mxu0
      %4424 = vmatprep.mubr.bf16.mxu0 0
      %4425 = vmatmul.mubr.bf16.gmra.mrb[0].mxu0 %v4139
      %v4426 = vpop.f32.mrb[0].mxu0
      %v4427 = vadd.f32 0.0, %v4426
      %v4428 = vpop.f32.mrb[0].mxu0
      %v4429 = vpop.f32.mrb[0].mxu0
      %v4430 = vadd.f32 0.0, %v4429
      %v4431 = vpop.f32.mrb[0].mxu0
      %4432 = vmatprep.mubr.bf16.mxu0 0
      %4433 = vmatmul.mubr.bf16.gmra.mrb[0].mxu0 %v4142
      %v4434 = vpop.f32.mrb[0].mxu0
      %v4435 = vadd.f32 0.0, %v4434
      %v4436 = vpop.f32.mrb[0].mxu0
      %v4437 = vpop.f32.mrb[0].mxu0
      %v4438 = vadd.f32 0.0, %v4437
      %v4439 = vpop.f32.mrb[0].mxu0
      %4440 = vmatprep.mubr.bf16.mxu0 0
      %4441 = vmatmul.mubr.bf16.gmra.mrb[0].mxu0 %v4145
      %v4442 = vpop.f32.mrb[0].mxu0
      %v4443 = vadd.f32 0.0, %v4442
      %v4444 = vpop.f32.mrb[0].mxu0
      %v4445 = vpop.f32.mrb[0].mxu0
      %v4446 = vadd.f32 0.0, %v4445
      %v4447 = vpop.f32.mrb[0].mxu0
      %4448 = vmatprep.mubr.bf16.mxu0 0
      %4449 = vmatmul.mubr.bf16.gmra.mrb[0].mxu0 %v4148
      %v4450 = vpop.f32.mrb[0].mxu0
      %v4451 = vadd.f32 0.0, %v4450
      %v4452 = vpop.f32.mrb[0].mxu0
      %v4453 = vpop.f32.mrb[0].mxu0
      %v4454 = vadd.f32 0.0, %v4453
      %v4455 = vpop.f32.mrb[0].mxu0
      %4456 = vmatprep.mubr.bf16.mxu0 0
      %4457 = vmatmul.mubr.bf16.gmra.mrb[0].mxu0 %v4151
      %v4458 = vpop.f32.mrb[0].mxu0
      %v4459 = vadd.f32 0.0, %v4458
      %v4460 = vpop.f32.mrb[0].mxu0
      %v4461 = vpop.f32.mrb[0].mxu0
      %v4462 = vadd.f32 0.0, %v4461
      %v4463 = vpop.f32.mrb[0].mxu0
      %4464 = vmatprep.mubr.bf16.mxu0 0
      %4465 = vmatmul.mubr.bf16.gmra.mrb[0].mxu0 %v4154
      %v4466 = vpop.f32.mrb[0].mxu0
      %v4467 = vadd.f32 0.0, %v4466
      %v4468 = vpop.f32.mrb[0].mxu0
      %v4469 = vpop.f32.mrb[0].mxu0
      %v4470 = vadd.f32 0.0, %v4469
      %v4471 = vpop.f32.mrb[0].mxu0
      %4472 = vmatprep.mubr.bf16.mxu0 0
      %4473 = vmatmul.mubr.bf16.gmra.mrb[0].mxu0 %v4157
      %v4474 = vpop.f32.mrb[0].mxu0
      %v4475 = vadd.f32 0.0, %v4474
      %v4476 = vpop.f32.mrb[0].mxu0
      %v4477 = vpop.f32.mrb[0].mxu0
      %v4478 = vadd.f32 0.0, %v4477
      %v4479 = vpop.f32.mrb[0].mxu0
      %4480 = vmatprep.mubr.bf16.mxu0 0
      %4481 = vmatmul.mubr.bf16.gmra.mrb[0].mxu0 %v4160
      %v4482 = vpop.f32.mrb[0].mxu0
      %v4483 = vadd.f32 0.0, %v4482
      %v4484 = vpop.f32.mrb[0].mxu0
      %v4485 = vpop.f32.mrb[0].mxu0
      %v4486 = vadd.f32 0.0, %v4485
      %v4487 = vpop.f32.mrb[0].mxu0
      %4488 = vmatprep.mubr.bf16.mxu0 0
      %4489 = vmatmul.mubr.bf16.gmra.mrb[0].mxu0 %v4163
      %v4490 = vpop.f32.mrb[0].mxu0
      %v4491 = vadd.f32 0.0, %v4490
      %v4492 = vpop.f32.mrb[0].mxu0
      %v4493 = vpop.f32.mrb[0].mxu0
      %v4494 = vadd.f32 0.0, %v4493
      %v4495 = vpop.f32.mrb[0].mxu0
      %4496 = vmatprep.mubr.bf16.mxu0 0
      %4497 = vmatmul.mubr.bf16.gmra.mrb[0].mxu0 %v4166
      %v4498 = vpop.f32.mrb[0].mxu0
      %v4499 = vadd.f32 0.0, %v4498
      %v4500 = vpop.f32.mrb[0].mxu0
      %v4501 = vpop.f32.mrb[0].mxu0
      %v4502 = vadd.f32 0.0, %v4501
      %v4503 = vpop.f32.mrb[0].mxu0
      %4504 = vmatprep.mubr.bf16.mxu0 0
      %4505 = vmatmul.mubr.bf16.gmra.mrb[0].mxu0 %v4169
      %v4506 = vpop.f32.mrb[0].mxu0
      %v4507 = vadd.f32 0.0, %v4506
      %v4508 = vpop.f32.mrb[0].mxu0
      %v4509 = vpop.f32.mrb[0].mxu0
      %v4510 = vadd.f32 0.0, %v4509
      %v4511 = vpop.f32.mrb[0].mxu0
      %4512 = vmatprep.mubr.bf16.mxu0 0
      %4513 = vmatmul.mubr.bf16.gmra.mrb[0].mxu0 %v4172
      %v4514 = vpop.f32.mrb[0].mxu0
      %v4515 = vadd.f32 0.0, %v4514
      %v4516 = vpop.f32.mrb[0].mxu0
      %v4517 = vpop.f32.mrb[0].mxu0
      %v4518 = vadd.f32 0.0, %v4517
      %v4519 = vpop.f32.mrb[0].mxu0
      %4520 = vmatprep.mubr.bf16.mxu0 0
      %4521 = vmatmul.mubr.bf16.gmra.mrb[0].mxu0 %v4175
      %v4522 = vpop.f32.mrb[0].mxu0
      %v4523 = vadd.f32 0.0, %v4522
      %v4524 = vpop.f32.mrb[0].mxu0
      %v4525 = vpop.f32.mrb[0].mxu0
      %v4526 = vadd.f32 0.0, %v4525
      %v4527 = vpop.f32.mrb[0].mxu0
      %4528 = vmatprep.mubr.bf16.mxu0 0
      %4529 = vmatmul.mubr.bf16.gmra.mrb[0].mxu0 %v4178
      %v4530 = vpop.f32.mrb[0].mxu0
      %v4531 = vadd.f32 0.0, %v4530
      %v4532 = vpop.f32.mrb[0].mxu0
      %v4533 = vpop.f32.mrb[0].mxu0
      %v4534 = vadd.f32 0.0, %v4533
      %v4535 = vpop.f32.mrb[0].mxu0
      %4536 = vmatprep.mubr.bf16.mxu0 0
      %4537 = vmatmul.mubr.bf16.gmra.mrb[0].mxu0 %v4379
      %v4538 = vpop.f32.mrb[0].mxu0
      %v4539 = vadd.f32 0.0, %v4538
      %v4540 = vpop.f32.mrb[0].mxu0
      %v4541 = vpop.f32.mrb[0].mxu0
      %v4542 = vadd.f32 0.0, %v4541
      %v4543 = vpop.f32.mrb[0].mxu0
      %4544 = vdwg.mxu0
      %v4545 = vadd.f32 %v4344, %v4419
      %v4546 = vadd.f32 %v4345, %v4422
      %v4547 = vadd.f32 %v4346, %v4427
      %v4548 = vadd.f32 %v4347, %v4430
      %v4549 = vadd.f32 %v4348, %v4435
      %v4550 = vadd.f32 %v4349, %v4438
      %v4551 = vadd.f32 %v4350, %v4443
      %v4552 = vadd.f32 %v4351, %v4446
      %v4553 = vadd.f32 %v4352, %v4451
      %v4554 = vadd.f32 %v4353, %v4454
      %v4555 = vadd.f32 %v4354, %v4459
      %v4556 = vadd.f32 %v4355, %v4462
      %v4557 = vadd.f32 %v4356, %v4467
      %v4558 = vadd.f32 %v4357, %v4470
      %v4559 = vadd.f32 %v4358, %v4475
      %v4560 = vadd.f32 %v4359, %v4478
      %v4561 = vadd.f32 %v4360, %v4483
      %v4562 = vadd.f32 %v4361, %v4486
      %v4563 = vadd.f32 %v4362, %v4491
      %v4564 = vadd.f32 %v4363, %v4494
      %v4565 = vadd.f32 %v4364, %v4499
      %v4566 = vadd.f32 %v4365, %v4502
      %v4567 = vadd.f32 %v4366, %v4507
      %v4568 = vadd.f32 %v4367, %v4510
      %v4569 = vadd.f32 %v4368, %v4515
      %v4570 = vadd.f32 %v4369, %v4518
      %v4571 = vadd.f32 %v4370, %v4523
      %v4572 = vadd.f32 %v4371, %v4526
      %v4573 = vadd.f32 %v4372, %v4531
      %v4574 = vadd.f32 %v4373, %v4534
      %v4575 = vadd.f32 %v4374, %v4539
      %v4576 = vadd.f32 %v4375, %v4542
      %s4577 = scalar_lea.vmem %s2, 16
      %v4578 = vld [vmem:[%s4577] sm:$0x3]
      %v4580 = vsel %vm205, %v4129, 0
      %v4583 = vsel %vm421, %v4578, 0
      %4585 = vmatprep.subr.bf16.mxu0 0
      %4586 = vmatpush1.bf16.msra.mxu0 %v4583
      %4587 = vmatprep.subr.bf16.mxu0 0
      %4588 = vmatpush1.bf16.msra.mxu0 0
      %4589 = vmatprep.subr.bf16.mxu0 0
      %4590 = vmatpush1.bf16.msra.mxu0 0
      %4591 = vmatprep.subr.bf16.mxu0 0
      %4592 = vmatpush1.bf16.msra.mxu0 0
      %4593 = vmatprep.subr.bf16.mxu0 0
      %4594 = vmatpush1.bf16.msra.mxu0 0
      %4595 = vmatprep.subr.bf16.mxu0 0
      %4596 = vmatpush1.bf16.msra.mxu0 0
      %4597 = vmatprep.subr.bf16.mxu0 0
      %4598 = vmatpush1.bf16.msra.mxu0 0
      %4599 = vmatprep.subr.bf16.mxu0 0
      %4600 = vmatpush1.bf16.msra.mxu0 0
      %4601 = vmatprep.subr.bf16.mxu0 0
      %4602 = vmatpush1.bf16.msra.mxu0 0
      %4603 = vmatprep.subr.bf16.mxu0 0
      %4604 = vmatpush1.bf16.msra.mxu0 0
      %4605 = vmatprep.subr.bf16.mxu0 0
      %4606 = vmatpush1.bf16.msra.mxu0 0
      %4607 = vmatprep.subr.bf16.mxu0 0
      %4608 = vmatpush1.bf16.msra.mxu0 0
      %4609 = vmatprep.subr.bf16.mxu0 0
      %4610 = vmatpush1.bf16.msra.mxu0 0
      %4611 = vmatprep.subr.bf16.mxu0 0
      %4612 = vmatpush1.bf16.msra.mxu0 0
      %4613 = vmatprep.subr.bf16.mxu0 0
      %4614 = vmatpush1.bf16.msra.mxu0 0
      %4615 = vmatprep.subr.bf16.mxu0 0
      %4616 = vmatpush1.bf16.msra.mxu0 0
      %4617 = vmatprep.mubr.bf16.mxu0 0
      %4618 = vmatmul.mubr.bf16.gmra.mrb[0].mxu0 %v4139
      %v4619 = vpop.f32.mrb[0].mxu0
      %v4620 = vadd.f32 0.0, %v4619
      %v4621 = vpop.f32.mrb[0].mxu0
      %v4622 = vpop.f32.mrb[0].mxu0
      %v4623 = vadd.f32 0.0, %v4622
      %v4624 = vpop.f32.mrb[0].mxu0
      %4625 = vmatprep.mubr.bf16.mxu0 0
      %4626 = vmatmul.mubr.bf16.gmra.mrb[0].mxu0 %v4142
      %v4627 = vpop.f32.mrb[0].mxu0
      %v4628 = vadd.f32 0.0, %v4627
      %v4629 = vpop.f32.mrb[0].mxu0
      %v4630 = vpop.f32.mrb[0].mxu0
      %v4631 = vadd.f32 0.0, %v4630
      %v4632 = vpop.f32.mrb[0].mxu0
      %4633 = vmatprep.mubr.bf16.mxu0 0
      %4634 = vmatmul.mubr.bf16.gmra.mrb[0].mxu0 %v4145
      %v4635 = vpop.f32.mrb[0].mxu0
      %v4636 = vadd.f32 0.0, %v4635
      %v4637 = vpop.f32.mrb[0].mxu0
      %v4638 = vpop.f32.mrb[0].mxu0
      %v4639 = vadd.f32 0.0, %v4638
      %v4640 = vpop.f32.mrb[0].mxu0
      %4641 = vmatprep.mubr.bf16.mxu0 0
      %4642 = vmatmul.mubr.bf16.gmra.mrb[0].mxu0 %v4148
      %v4643 = vpop.f32.mrb[0].mxu0
      %v4644 = vadd.f32 0.0, %v4643
      %v4645 = vpop.f32.mrb[0].mxu0
      %v4646 = vpop.f32.mrb[0].mxu0
      %v4647 = vadd.f32 0.0, %v4646
      %v4648 = vpop.f32.mrb[0].mxu0
      %4649 = vmatprep.mubr.bf16.mxu0 0
      %4650 = vmatmul.mubr.bf16.gmra.mrb[0].mxu0 %v4151
      %v4651 = vpop.f32.mrb[0].mxu0
      %v4652 = vadd.f32 0.0, %v4651
      %v4653 = vpop.f32.mrb[0].mxu0
      %v4654 = vpop.f32.mrb[0].mxu0
      %v4655 = vadd.f32 0.0, %v4654
      %v4656 = vpop.f32.mrb[0].mxu0
      %4657 = vmatprep.mubr.bf16.mxu0 0
      %4658 = vmatmul.mubr.bf16.gmra.mrb[0].mxu0 %v4154
      %v4659 = vpop.f32.mrb[0].mxu0
      %v4660 = vadd.f32 0.0, %v4659
      %v4661 = vpop.f32.mrb[0].mxu0
      %v4662 = vpop.f32.mrb[0].mxu0
      %v4663 = vadd.f32 0.0, %v4662
      %v4664 = vpop.f32.mrb[0].mxu0
      %4665 = vmatprep.mubr.bf16.mxu0 0
      %4666 = vmatmul.mubr.bf16.gmra.mrb[0].mxu0 %v4157
      %v4667 = vpop.f32.mrb[0].mxu0
      %v4668 = vadd.f32 0.0, %v4667
      %v4669 = vpop.f32.mrb[0].mxu0
      %v4670 = vpop.f32.mrb[0].mxu0
      %v4671 = vadd.f32 0.0, %v4670
      %v4672 = vpop.f32.mrb[0].mxu0
      %4673 = vmatprep.mubr.bf16.mxu0 0
      %4674 = vmatmul.mubr.bf16.gmra.mrb[0].mxu0 %v4160
      %v4675 = vpop.f32.mrb[0].mxu0
      %v4676 = vadd.f32 0.0, %v4675
      %v4677 = vpop.f32.mrb[0].mxu0
      %v4678 = vpop.f32.mrb[0].mxu0
      %v4679 = vadd.f32 0.0, %v4678
      %v4680 = vpop.f32.mrb[0].mxu0
      %4681 = vmatprep.mubr.bf16.mxu0 0
      %4682 = vmatmul.mubr.bf16.gmra.mrb[0].mxu0 %v4163
      %v4683 = vpop.f32.mrb[0].mxu0
      %v4684 = vadd.f32 0.0, %v4683
      %v4685 = vpop.f32.mrb[0].mxu0
      %v4686 = vpop.f32.mrb[0].mxu0
      %v4687 = vadd.f32 0.0, %v4686
      %v4688 = vpop.f32.mrb[0].mxu0
      %4689 = vmatprep.mubr.bf16.mxu0 0
      %4690 = vmatmul.mubr.bf16.gmra.mrb[0].mxu0 %v4166
      %v4691 = vpop.f32.mrb[0].mxu0
      %v4692 = vadd.f32 0.0, %v4691
      %v4693 = vpop.f32.mrb[0].mxu0
      %v4694 = vpop.f32.mrb[0].mxu0
      %v4695 = vadd.f32 0.0, %v4694
      %v4696 = vpop.f32.mrb[0].mxu0
      %4697 = vmatprep.mubr.bf16.mxu0 0
      %4698 = vmatmul.mubr.bf16.gmra.mrb[0].mxu0 %v4169
      %v4699 = vpop.f32.mrb[0].mxu0
      %v4700 = vadd.f32 0.0, %v4699
      %v4701 = vpop.f32.mrb[0].mxu0
      %v4702 = vpop.f32.mrb[0].mxu0
      %v4703 = vadd.f32 0.0, %v4702
      %v4704 = vpop.f32.mrb[0].mxu0
      %4705 = vmatprep.mubr.bf16.mxu0 0
      %4706 = vmatmul.mubr.bf16.gmra.mrb[0].mxu0 %v4172
      %v4707 = vpop.f32.mrb[0].mxu0
      %v4708 = vadd.f32 0.0, %v4707
      %v4709 = vpop.f32.mrb[0].mxu0
      %v4710 = vpop.f32.mrb[0].mxu0
      %v4711 = vadd.f32 0.0, %v4710
      %v4712 = vpop.f32.mrb[0].mxu0
      %4713 = vmatprep.mubr.bf16.mxu0 0
      %4714 = vmatmul.mubr.bf16.gmra.mrb[0].mxu0 %v4175
      %v4715 = vpop.f32.mrb[0].mxu0
      %v4716 = vadd.f32 0.0, %v4715
      %v4717 = vpop.f32.mrb[0].mxu0
      %v4718 = vpop.f32.mrb[0].mxu0
      %v4719 = vadd.f32 0.0, %v4718
      %v4720 = vpop.f32.mrb[0].mxu0
      %4721 = vmatprep.mubr.bf16.mxu0 0
      %4722 = vmatmul.mubr.bf16.gmra.mrb[0].mxu0 %v4178
      %v4723 = vpop.f32.mrb[0].mxu0
      %v4724 = vadd.f32 0.0, %v4723
      %v4725 = vpop.f32.mrb[0].mxu0
      %v4726 = vpop.f32.mrb[0].mxu0
      %v4727 = vadd.f32 0.0, %v4726
      %v4728 = vpop.f32.mrb[0].mxu0
      %4729 = vmatprep.mubr.bf16.mxu0 0
      %4730 = vmatmul.mubr.bf16.gmra.mrb[0].mxu0 %v4379
      %v4731 = vpop.f32.mrb[0].mxu0
      %v4732 = vadd.f32 0.0, %v4731
      %v4733 = vpop.f32.mrb[0].mxu0
      %v4734 = vpop.f32.mrb[0].mxu0
      %v4735 = vadd.f32 0.0, %v4734
      %v4736 = vpop.f32.mrb[0].mxu0
      %4737 = vmatprep.mubr.bf16.mxu0 0
      %4738 = vmatmul.mubr.bf16.gmra.mrb[0].mxu0 %v4580
      %v4739 = vpop.f32.mrb[0].mxu0
      %v4740 = vadd.f32 0.0, %v4739
      %v4741 = vpop.f32.mrb[0].mxu0
      %v4742 = vpop.f32.mrb[0].mxu0
      %v4743 = vadd.f32 0.0, %v4742
      %v4744 = vpop.f32.mrb[0].mxu0
      %4745 = vdwg.mxu0
      %v4746 = vadd.f32 %v4545, %v4620
      %v4747 = vadd.f32 %v4546, %v4623
      %v4748 = vadd.f32 %v4547, %v4628
      %v4749 = vadd.f32 %v4548, %v4631
      %v4750 = vadd.f32 %v4549, %v4636
      %v4751 = vadd.f32 %v4550, %v4639
      %v4752 = vadd.f32 %v4551, %v4644
      %v4753 = vadd.f32 %v4552, %v4647
      %v4754 = vadd.f32 %v4553, %v4652
      %v4755 = vadd.f32 %v4554, %v4655
      %v4756 = vadd.f32 %v4555, %v4660
      %v4757 = vadd.f32 %v4556, %v4663
      %v4758 = vadd.f32 %v4557, %v4668
      %v4759 = vadd.f32 %v4558, %v4671
      %v4760 = vadd.f32 %v4559, %v4676
      %v4761 = vadd.f32 %v4560, %v4679
      %v4762 = vadd.f32 %v4561, %v4684
      %v4763 = vadd.f32 %v4562, %v4687
      %v4764 = vadd.f32 %v4563, %v4692
      %v4765 = vadd.f32 %v4564, %v4695
      %v4766 = vadd.f32 %v4565, %v4700
      %v4767 = vadd.f32 %v4566, %v4703
      %v4768 = vadd.f32 %v4567, %v4708
      %v4769 = vadd.f32 %v4568, %v4711
      %v4770 = vadd.f32 %v4569, %v4716
      %v4771 = vadd.f32 %v4570, %v4719
      %v4772 = vadd.f32 %v4571, %v4724
      %v4773 = vadd.f32 %v4572, %v4727
      %v4774 = vadd.f32 %v4573, %v4732
      %v4775 = vadd.f32 %v4574, %v4735
      %v4776 = vadd.f32 %v4575, %v4740
      %v4777 = vadd.f32 %v4576, %v4743
      %v4778 = vsel %vm205, %v4746, 0.0
      %v4779 = vsel %vm205, %v4747, 0.0
      %v4780 = vadd.f32 %v4778, %v4779
      %v4781 = vsel %vm205, %v4748, 0.0
      %v4782 = vadd.f32 %v4780, %v4781
      %v4783 = vsel %vm205, %v4749, 0.0
      %v4784 = vadd.f32 %v4782, %v4783
      %v4785 = vsel %vm205, %v4750, 0.0
      %v4786 = vadd.f32 %v4784, %v4785
      %v4787 = vsel %vm205, %v4751, 0.0
      %v4788 = vadd.f32 %v4786, %v4787
      %v4789 = vsel %vm205, %v4752, 0.0
      %v4790 = vadd.f32 %v4788, %v4789
      %v4791 = vsel %vm205, %v4753, 0.0
      %v4792 = vadd.f32 %v4790, %v4791
      %v4793 = vsel %vm205, %v4754, 0.0
      %v4794 = vadd.f32 %v4792, %v4793
      %v4795 = vsel %vm205, %v4755, 0.0
      %v4796 = vadd.f32 %v4794, %v4795
      %v4797 = vsel %vm205, %v4756, 0.0
      %v4798 = vadd.f32 %v4796, %v4797
      %v4799 = vsel %vm205, %v4757, 0.0
      %v4800 = vadd.f32 %v4798, %v4799
      %v4801 = vsel %vm205, %v4758, 0.0
      %v4802 = vadd.f32 %v4800, %v4801
      %v4803 = vsel %vm205, %v4759, 0.0
      %v4804 = vadd.f32 %v4802, %v4803
      %v4805 = vsel %vm205, %v4760, 0.0
      %v4806 = vadd.f32 %v4804, %v4805
      %v4807 = vsel %vm205, %v4761, 0.0
      %v4808 = vadd.f32 %v4806, %v4807
      %v4809 = vsel %vm205, %v4762, 0.0
      %v4810 = vadd.f32 %v4808, %v4809
      %v4811 = vsel %vm205, %v4763, 0.0
      %v4812 = vadd.f32 %v4810, %v4811
      %v4813 = vsel %vm205, %v4764, 0.0
      %v4814 = vadd.f32 %v4812, %v4813
      %v4815 = vsel %vm205, %v4765, 0.0
      %v4816 = vadd.f32 %v4814, %v4815
      %v4817 = vsel %vm205, %v4766, 0.0
      %v4818 = vadd.f32 %v4816, %v4817
      %v4819 = vsel %vm205, %v4767, 0.0
      %v4820 = vadd.f32 %v4818, %v4819
      %v4821 = vsel %vm205, %v4768, 0.0
      %v4822 = vadd.f32 %v4820, %v4821
      %v4823 = vsel %vm205, %v4769, 0.0
      %v4824 = vadd.f32 %v4822, %v4823
      %v4825 = vsel %vm205, %v4770, 0.0
      %v4826 = vadd.f32 %v4824, %v4825
      %v4827 = vsel %vm205, %v4771, 0.0
      %v4828 = vadd.f32 %v4826, %v4827
      %v4829 = vsel %vm205, %v4772, 0.0
      %v4830 = vadd.f32 %v4828, %v4829
      %v4831 = vsel %vm205, %v4773, 0.0
      %v4832 = vadd.f32 %v4830, %v4831
      %v4833 = vsel %vm205, %v4774, 0.0
      %v4834 = vadd.f32 %v4832, %v4833
      %v4835 = vsel %vm205, %v4775, 0.0
      %v4836 = vadd.f32 %v4834, %v4835
      %v4837 = vsel %vm205, %v4776, 0.0
      %v4838 = vadd.f32 %v4836, %v4837
      %v4839 = vsel %vm205, %v4777, 0.0
      %v4840 = vadd.f32 %v4838, %v4839
      %v4841 = vrot.slane %v4840, 4
      %v4842 = vadd.f32 %v4840, %v4841
      %v4843 = vrot.slane %v4842, 2
      %v4844 = vadd.f32 %v4842, %v4843
      %v4845 = vrot.slane %v4844, 1
      %v4846 = vadd.f32 %v4844, %v4845
      %v4847 = vmul.f32 %v4846, %v2427
      %v4848 = vsub.f32 %v4746, %v4847
      %v4849 = vsub.f32 %v4747, %v4847
      %v4850 = vsub.f32 %v4748, %v4847
      %v4851 = vsub.f32 %v4749, %v4847
      %v4852 = vsub.f32 %v4750, %v4847
      %v4853 = vsub.f32 %v4751, %v4847
      %v4854 = vsub.f32 %v4752, %v4847
      %v4855 = vsub.f32 %v4753, %v4847
      %v4856 = vsub.f32 %v4754, %v4847
      %v4857 = vsub.f32 %v4755, %v4847
      %v4858 = vsub.f32 %v4756, %v4847
      %v4859 = vsub.f32 %v4757, %v4847
      %v4860 = vsub.f32 %v4758, %v4847
      %v4861 = vsub.f32 %v4759, %v4847
      %v4862 = vsub.f32 %v4760, %v4847
      %v4863 = vsub.f32 %v4761, %v4847
      %v4864 = vsub.f32 %v4762, %v4847
      %v4865 = vsub.f32 %v4763, %v4847
      %v4866 = vsub.f32 %v4764, %v4847
      %v4867 = vsub.f32 %v4765, %v4847
      %v4868 = vsub.f32 %v4766, %v4847
      %v4869 = vsub.f32 %v4767, %v4847
      %v4870 = vsub.f32 %v4768, %v4847
      %v4871 = vsub.f32 %v4769, %v4847
      %v4872 = vsub.f32 %v4770, %v4847
      %v4873 = vsub.f32 %v4771, %v4847
      %v4874 = vsub.f32 %v4772, %v4847
      %v4875 = vsub.f32 %v4773, %v4847
      %v4876 = vsub.f32 %v4774, %v4847
      %v4877 = vsub.f32 %v4775, %v4847
      %v4878 = vsub.f32 %v4776, %v4847
      %v4879 = vsub.f32 %v4777, %v4847
      %v4880 = vmul.f32 %v4848, %v4848
      %v4881 = vmul.f32 %v4849, %v4849
      %v4882 = vmul.f32 %v4850, %v4850
      %v4883 = vmul.f32 %v4851, %v4851
      %v4884 = vmul.f32 %v4852, %v4852
      %v4885 = vmul.f32 %v4853, %v4853
      %v4886 = vmul.f32 %v4854, %v4854
      %v4887 = vmul.f32 %v4855, %v4855
      %v4888 = vmul.f32 %v4856, %v4856
      %v4889 = vmul.f32 %v4857, %v4857
      %v4890 = vmul.f32 %v4858, %v4858
      %v4891 = vmul.f32 %v4859, %v4859
      %v4892 = vmul.f32 %v4860, %v4860
      %v4893 = vmul.f32 %v4861, %v4861
      %v4894 = vmul.f32 %v4862, %v4862
      %v4895 = vmul.f32 %v4863, %v4863
      %v4896 = vmul.f32 %v4864, %v4864
      %v4897 = vmul.f32 %v4865, %v4865
      %v4898 = vmul.f32 %v4866, %v4866
      %v4899 = vmul.f32 %v4867, %v4867
      %v4900 = vmul.f32 %v4868, %v4868
      %v4901 = vmul.f32 %v4869, %v4869
      %v4902 = vmul.f32 %v4870, %v4870
      %v4903 = vmul.f32 %v4871, %v4871
      %v4904 = vmul.f32 %v4872, %v4872
      %v4905 = vmul.f32 %v4873, %v4873
      %v4906 = vmul.f32 %v4874, %v4874
      %v4907 = vmul.f32 %v4875, %v4875
      %v4908 = vmul.f32 %v4876, %v4876
      %v4909 = vmul.f32 %v4877, %v4877
      %v4910 = vmul.f32 %v4878, %v4878
      %v4911 = vmul.f32 %v4879, %v4879
      %v4912 = vsel %vm205, %v4880, 0.0
      %v4913 = vsel %vm205, %v4881, 0.0
      %v4914 = vadd.f32 %v4912, %v4913
      %v4915 = vsel %vm205, %v4882, 0.0
      %v4916 = vadd.f32 %v4914, %v4915
      %v4917 = vsel %vm205, %v4883, 0.0
      %v4918 = vadd.f32 %v4916, %v4917
      %v4919 = vsel %vm205, %v4884, 0.0
      %v4920 = vadd.f32 %v4918, %v4919
      %v4921 = vsel %vm205, %v4885, 0.0
      %v4922 = vadd.f32 %v4920, %v4921
      %v4923 = vsel %vm205, %v4886, 0.0
      %v4924 = vadd.f32 %v4922, %v4923
      %v4925 = vsel %vm205, %v4887, 0.0
      %v4926 = vadd.f32 %v4924, %v4925
      %v4927 = vsel %vm205, %v4888, 0.0
      %v4928 = vadd.f32 %v4926, %v4927
      %v4929 = vsel %vm205, %v4889, 0.0
      %v4930 = vadd.f32 %v4928, %v4929
      %v4931 = vsel %vm205, %v4890, 0.0
      %v4932 = vadd.f32 %v4930, %v4931
      %v4933 = vsel %vm205, %v4891, 0.0
      %v4934 = vadd.f32 %v4932, %v4933
      %v4935 = vsel %vm205, %v4892, 0.0
      %v4936 = vadd.f32 %v4934, %v4935
      %v4937 = vsel %vm205, %v4893, 0.0
      %v4938 = vadd.f32 %v4936, %v4937
      %v4939 = vsel %vm205, %v4894, 0.0
      %v4940 = vadd.f32 %v4938, %v4939
      %v4941 = vsel %vm205, %v4895, 0.0
      %v4942 = vadd.f32 %v4940, %v4941
      %v4943 = vsel %vm205, %v4896, 0.0
      %v4944 = vadd.f32 %v4942, %v4943
      %v4945 = vsel %vm205, %v4897, 0.0
      %v4946 = vadd.f32 %v4944, %v4945
      %v4947 = vsel %vm205, %v4898, 0.0
      %v4948 = vadd.f32 %v4946, %v4947
      %v4949 = vsel %vm205, %v4899, 0.0
      %v4950 = vadd.f32 %v4948, %v4949
      %v4951 = vsel %vm205, %v4900, 0.0
      %v4952 = vadd.f32 %v4950, %v4951
      %v4953 = vsel %vm205, %v4901, 0.0
      %v4954 = vadd.f32 %v4952, %v4953
      %v4955 = vsel %vm205, %v4902, 0.0
      %v4956 = vadd.f32 %v4954, %v4955
      %v4957 = vsel %vm205, %v4903, 0.0
      %v4958 = vadd.f32 %v4956, %v4957
      %v4959 = vsel %vm205, %v4904, 0.0
      %v4960 = vadd.f32 %v4958, %v4959
      %v4961 = vsel %vm205, %v4905, 0.0
      %v4962 = vadd.f32 %v4960, %v4961
      %v4963 = vsel %vm205, %v4906, 0.0
      %v4964 = vadd.f32 %v4962, %v4963
      %v4965 = vsel %vm205, %v4907, 0.0
      %v4966 = vadd.f32 %v4964, %v4965
      %v4967 = vsel %vm205, %v4908, 0.0
      %v4968 = vadd.f32 %v4966, %v4967
      %v4969 = vsel %vm205, %v4909, 0.0
      %v4970 = vadd.f32 %v4968, %v4969
      %v4971 = vsel %vm205, %v4910, 0.0
      %v4972 = vadd.f32 %v4970, %v4971
      %v4973 = vsel %vm205, %v4911, 0.0
      %v4974 = vadd.f32 %v4972, %v4973
      %v4975 = vrot.slane %v4974, 4
      %v4976 = vadd.f32 %v4974, %v4975
      %v4977 = vrot.slane %v4976, 2
      %v4978 = vadd.f32 %v4976, %v4977
      %v4979 = vrot.slane %v4978, 1
      %v4980 = vadd.f32 %v4978, %v4979
      %v4981 = vmul.f32 %v4980, %v2427
      %v4982 = vadd.f32 %v4981, 1e-05
      %v4983 = vrsqrt.pop %v4982
      %v4984 = vmul.f32 %v4848, %v4983
      %v4985 = vmul.f32 %v4849, %v4983
      %v4986 = vmul.f32 %v4850, %v4983
      %v4987 = vmul.f32 %v4851, %v4983
      %v4988 = vmul.f32 %v4852, %v4983
      %v4989 = vmul.f32 %v4853, %v4983
      %v4990 = vmul.f32 %v4854, %v4983
      %v4991 = vmul.f32 %v4855, %v4983
      %v4992 = vmul.f32 %v4856, %v4983
      %v4993 = vmul.f32 %v4857, %v4983
      %v4994 = vmul.f32 %v4858, %v4983
      %v4995 = vmul.f32 %v4859, %v4983
      %v4996 = vmul.f32 %v4860, %v4983
      %v4997 = vmul.f32 %v4861, %v4983
      %v4998 = vmul.f32 %v4862, %v4983
      %v4999 = vmul.f32 %v4863, %v4983
      %v5000 = vmul.f32 %v4864, %v4983
      %v5001 = vmul.f32 %v4865, %v4983
      %v5002 = vmul.f32 %v4866, %v4983
      %v5003 = vmul.f32 %v4867, %v4983
      %v5004 = vmul.f32 %v4868, %v4983
      %v5005 = vmul.f32 %v4869, %v4983
      %v5006 = vmul.f32 %v4870, %v4983
      %v5007 = vmul.f32 %v4871, %v4983
      %v5008 = vmul.f32 %v4872, %v4983
      %v5009 = vmul.f32 %v4873, %v4983
      %v5010 = vmul.f32 %v4874, %v4983
      %v5011 = vmul.f32 %v4875, %v4983
      %v5012 = vmul.f32 %v4876, %v4983
      %v5013 = vmul.f32 %v4877, %v4983
      %v5014 = vmul.f32 %v4878, %v4983
      %v5015 = vmul.f32 %v4879, %v4983
      %v5016 = vadd.f32 %v172, %v4984
      %v5017 = vadd.f32 %v173, %v4985
      %v5018 = vadd.f32 %v174, %v4986
      %v5019 = vadd.f32 %v175, %v4987
      %v5020 = vadd.f32 %v176, %v4988
      %v5021 = vadd.f32 %v177, %v4989
      %v5022 = vadd.f32 %v178, %v4990
      %v5023 = vadd.f32 %v179, %v4991
      %v5024 = vadd.f32 %v180, %v4992
      %v5025 = vadd.f32 %v181, %v4993
      %v5026 = vadd.f32 %v182, %v4994
      %v5027 = vadd.f32 %v183, %v4995
      %v5028 = vadd.f32 %v184, %v4996
      %v5029 = vadd.f32 %v185, %v4997
      %v5030 = vadd.f32 %v186, %v4998
      %v5031 = vadd.f32 %v187, %v4999
      %v5032 = vadd.f32 %v188, %v5000
      %v5033 = vadd.f32 %v189, %v5001
      %v5034 = vadd.f32 %v190, %v5002
      %v5035 = vadd.f32 %v191, %v5003
      %v5036 = vadd.f32 %v192, %v5004
      %v5037 = vadd.f32 %v193, %v5005
      %v5038 = vadd.f32 %v194, %v5006
      %v5039 = vadd.f32 %v195, %v5007
      %v5040 = vadd.f32 %v196, %v5008
      %v5041 = vadd.f32 %v197, %v5009
      %v5042 = vadd.f32 %v198, %v5010
      %v5043 = vadd.f32 %v199, %v5011
      %v5044 = vadd.f32 %v200, %v5012
      %v5045 = vadd.f32 %v201, %v5013
      %v5046 = vadd.f32 %v202, %v5014
      %v5047 = vadd.f32 %v203, %v5015
      %5048 = vst.msk [vmem:[%s170] sm:$0xff] %vm205, %v5016
      %5049 = vst.msk [vmem:[%s170 + $0x8] sm:$0xff] %vm205, %v5017
      %5050 = vst.msk [vmem:[%s170 + $0x10] sm:$0xff] %vm205, %v5018
      %5051 = vst.msk [vmem:[%s170 + $0x18] sm:$0xff] %vm205, %v5019
      %5052 = vst.msk [vmem:[%s170 + $0x20] sm:$0xff] %vm205, %v5020
      %5053 = vst.msk [vmem:[%s170 + $0x28] sm:$0xff] %vm205, %v5021
      %5054 = vst.msk [vmem:[%s170 + $0x30] sm:$0xff] %vm205, %v5022
      %5055 = vst.msk [vmem:[%s170 + $0x38] sm:$0xff] %vm205, %v5023
      %5056 = vst.msk [vmem:[%s170 + $0x40] sm:$0xff] %vm205, %v5024
      %5057 = vst.msk [vmem:[%s170 + $0x48] sm:$0xff] %vm205, %v5025
      %5058 = vst.msk [vmem:[%s170 + $0x50] sm:$0xff] %vm205, %v5026
      %5059 = vst.msk [vmem:[%s170 + $0x58] sm:$0xff] %vm205, %v5027
      %5060 = vst.msk [vmem:[%s170 + $0x60] sm:$0xff] %vm205, %v5028
      %5061 = vst.msk [vmem:[%s170 + $0x68] sm:$0xff] %vm205, %v5029
      %5062 = vst.msk [vmem:[%s170 + $0x70] sm:$0xff] %vm205, %v5030
      %5063 = vst.msk [vmem:[%s170 + $0x78] sm:$0xff] %vm205, %v5031
      %5064 = vst.msk [vmem:[%s170 + $0x80] sm:$0xff] %vm205, %v5032
      %5065 = vst.msk [vmem:[%s170 + $0x88] sm:$0xff] %vm205, %v5033
      %5066 = vst.msk [vmem:[%s170 + $0x90] sm:$0xff] %vm205, %v5034
      %5067 = vst.msk [vmem:[%s170 + $0x98] sm:$0xff] %vm205, %v5035
      %5068 = vst.msk [vmem:[%s170 + $0xa0] sm:$0xff] %vm205, %v5036
      %5069 = vst.msk [vmem:[%s170 + $0xa8] sm:$0xff] %vm205, %v5037
      %5070 = vst.msk [vmem:[%s170 + $0xb0] sm:$0xff] %vm205, %v5038
      %5071 = vst.msk [vmem:[%s170 + $0xb8] sm:$0xff] %vm205, %v5039
      %5072 = vst.msk [vmem:[%s170 + $0xc0] sm:$0xff] %vm205, %v5040
      %5073 = vst.msk [vmem:[%s170 + $0xc8] sm:$0xff] %vm205, %v5041
      %5074 = vst.msk [vmem:[%s170 + $0xd0] sm:$0xff] %vm205, %v5042
      %5075 = vst.msk [vmem:[%s170 + $0xd8] sm:$0xff] %vm205, %v5043
      %5076 = vst.msk [vmem:[%s170 + $0xe0] sm:$0xff] %vm205, %v5044
      %5077 = vst.msk [vmem:[%s170 + $0xe8] sm:$0xff] %vm205, %v5045
      %5078 = vst.msk [vmem:[%s170 + $0xf0] sm:$0xff] %vm205, %v5046
      %5079 = vst.msk [vmem:[%s170 + $0xf8] sm:$0xff] %vm205, %v5047
      %p5080 = scmp.lt.s32.totalorder %s14, 1
      %s5081 = scalar_select %p5080, %s14, 1
      %s5082 = smul.addr %s5081, 32
      %s5083 = smul.addr %s5082, 8
      %s5084 = scalar_lea.vmem %s3, %s5083
      // Predicated region
      $region33: #{tpu_custom_call.1} parent=31 // pred_check
        %p5085 = pneg %p100
      $region34: #{tpu_custom_call.1} parent=31 // pred_check_branch
        %5087 = sbr.rel (%p5085) target = $region36
      $region35: #{tpu_custom_call.1} parent=31 // pred_region
        _
      $region36: #{tpu_custom_call.1} parent=31 // pred_fallthru
        _
    $region32: #{tpu_custom_call.1} parent=5 // pred_fallthru
      _
    %p5088 = scmp.le.s32.totalorder 2, %s9
    // Predicated region
    $region37: #{tpu_custom_call.1} parent=5 // pred_check
      %p5089 = pneg %p5088
    $region38: #{tpu_custom_call.1} parent=5 // pred_check_branch
      %5091 = sbr.rel (%p5089) target = $region40
    $region39: #{tpu_custom_call.1} parent=5 // pred_region
      %s5092 = ssub.s32 %s9, 2
      // Predicated region
      $region41: #{tpu_custom_call.1} parent=39 // pred_check
        %p5093 = pneg %p106
      $region42: #{tpu_custom_call.1} parent=39 // pred_check_branch
        %5095 = sbr.rel (%p5093) target = $region44
      $region43: #{tpu_custom_call.1} parent=39 // pred_region
        %p5096 = scmp.lt.s32.totalorder %s15, 1
        %s5097 = scalar_select %p5096, %s15, 1
        %s5098 = smul.addr %s5097, 32
        %s5099 = smul.addr %s5098, 8
        %s5100 = scalar_lea.vmem %s3, %s5099
      $region44: #{tpu_custom_call.1} parent=39 // pred_fallthru
        _
    $region40: #{tpu_custom_call.1} parent=5 // pred_fallthru
      _
  $region6: #{tpu_custom_call.1} parent=0 // loop_footer
    %s13 = sadd.s32 1, %s9
  $region7: #{tpu_custom_call.1} parent=0 // loop_footer_branch
    %8 = sbr.rel target = $region3
  $region8: #{tpu_custom_call.1} parent=0 // loop_exit
    _

</llo_original>
